<compile_context>
chip_gen: v7x
topology: tpu7x:2x2x1
jax: 0.10.0
libtpu: 0.0.40
codegen_flags: <defaults>
</compile_context>

<pallas_src>
import jax
import jax.numpy as jnp
from jax.experimental import pallas as pl
from jax.experimental.pallas import tpu as pltpu

SOS_token = 1


def _pick_tblk(L, max_blk=16):
    """Largest divisor of L that is <= max_blk (time-block size)."""
    for t in range(min(L, max_blk), 0, -1):
        if L % t == 0:
            return t
    return 1


# ----------------------------------------------------------------------------
# Hoisted input projection: out[g] = x @ w[g] + b[g]  for g stacked weight sets
# (encoder: g = direction, decoder: g = 1).  One big MXU matmul per set.
# ----------------------------------------------------------------------------
def stacked_proj_kernel(x_ref, w_ref, b_ref, out_ref):
    out_ref[...] = (
        jnp.dot(x_ref[...].astype(w_ref.dtype), w_ref[...],
                preferred_element_type=jnp.float32)
        + b_ref[...])


def stacked_proj(x2d, w_stacked, b_stacked):
    G, Din, N = w_stacked.shape
    M = x2d.shape[0]
    return pl.pallas_call(
        stacked_proj_kernel,
        grid=(G,),
        in_specs=[
            pl.BlockSpec((M, Din), lambda g: (0, 0)),
            pl.BlockSpec((None, Din, N), lambda g: (g, 0, 0)),
            pl.BlockSpec((None, 1, N), lambda g: (g, 0, 0)),
        ],
        out_specs=pl.BlockSpec((None, M, N), lambda g: (g, 0, 0)),
        out_shape=jax.ShapeDtypeStruct((G, M, N), jnp.float32),
        compiler_params=pltpu.CompilerParams(
            dimension_semantics=("parallel",)),
    )(x2d, w_stacked, b_stacked)


# ----------------------------------------------------------------------------
# GRU time block: runs T_blk recurrent steps (PyTorch gate order r|z|n) on the
# precomputed gi tile.  `reverse` is a Python bool (direction chosen via
# pl.when outside), so only the recurrent gh matmul sits on the serial chain.
# ----------------------------------------------------------------------------
def _gru_time_block(gi_ref, whh_ref, bhh_ref, out_ref, h_scr, *, reverse):
    T = gi_ref.shape[0]
    Hh = h_scr.shape[1]
    whh = whh_ref[...]                       # resident across the block
    bhh = bhh_ref[...]

    def step(i, h):
        local = (T - 1 - i) if reverse else i
        gi = gi_ref[local]                   # (B, 3H)
        gh = jnp.dot(h, whh, preferred_element_type=jnp.float32) + bhh
        r = jax.nn.sigmoid(gi[:, :Hh] + gh[:, :Hh])
        z = jax.nn.sigmoid(gi[:, Hh:2 * Hh] + gh[:, Hh:2 * Hh])
        n = jnp.tanh(gi[:, 2 * Hh:] + r * gh[:, 2 * Hh:])
        h_new = (1.0 - z) * n + z * h
        out_ref[local] = h_new
        return h_new

    h_scr[...] = jax.lax.fori_loop(0, T, step, h_scr[...], unroll=True)


# ----------------------------------------------------------------------------
# Fused bidirectional encoder GRU.
#   grid = (2, nT): direction ('parallel', v7x megacore) x time ('arbitrary').
#   The backward direction reads time-block nT-1-t and iterates it in reverse.
# ----------------------------------------------------------------------------
def bigru_block_kernel(gi_ref, whh_ref, bhh_ref, out_ref, h_scr):
    d = pl.program_id(0)
    t = pl.program_id(1)

    @pl.when(t == 0)
    def _():
        h_scr[...] = jnp.zeros_like(h_scr)   # PyTorch h0=None => zeros

    @pl.when(d == 0)
    def _():
        _gru_time_block(gi_ref, whh_ref, bhh_ref, out_ref, h_scr, reverse=False)

    @pl.when(d == 1)
    def _():
        _gru_time_block(gi_ref, whh_ref, bhh_ref, out_ref, h_scr, reverse=True)


def bigru_seq(gi_stacked, whh_stacked, bhh_stacked, *, t_blk=16):
    """gi_stacked: (2, L, B, 3Hh).  Returns (2, L, B, Hh) hidden sequences."""
    _, L, B, G3 = gi_stacked.shape
    Hh = whh_stacked.shape[1]
    T = _pick_tblk(L, t_blk)
    nT = L // T

    def t_map(d, t):
        # d == 0 -> block t ; d == 1 -> block nT-1-t
        return (d, t + d * ((nT - 1) - 2 * t), 0, 0)

    return pl.pallas_call(
        bigru_block_kernel,
        grid=(2, nT),
        in_specs=[
            pl.BlockSpec((None, T, B, G3), t_map),
            pl.BlockSpec((None, Hh, G3), lambda d, t: (d, 0, 0)),
            pl.BlockSpec((None, 1, G3), lambda d, t: (d, 0, 0)),
        ],
        out_specs=pl.BlockSpec((None, T, B, Hh), t_map),
        out_shape=jax.ShapeDtypeStruct((2, L, B, Hh), jnp.float32),
        scratch_shapes=[pltpu.VMEM((B, Hh), jnp.float32)],
        compiler_params=pltpu.CompilerParams(
            dimension_semantics=("parallel", "arbitrary")),
    )(gi_stacked, whh_stacked, bhh_stacked)


# ----------------------------------------------------------------------------
# Unidirectional (decoder) GRU over precomputed gi, initial hidden h0.
# ----------------------------------------------------------------------------
def gru_block_kernel(gi_ref, h0_ref, whh_ref, bhh_ref, out_ref, h_scr):
    t = pl.program_id(0)

    @pl.when(t == 0)
    def _():
        h_scr[...] = h0_ref[...]

    _gru_time_block(gi_ref, whh_ref, bhh_ref, out_ref, h_scr, reverse=False)


def gru_seq(gi, h0, whh, bhh, *, t_blk=16):
    """gi: (L, B, 3H).  Returns (L, B, H) hidden sequence."""
    L, B, G3 = gi.shape
    H = whh.shape[0]
    T = _pick_tblk(L, t_blk)
    nT = L // T
    return pl.pallas_call(
        gru_block_kernel,
        grid=(nT,),
        in_specs=[
            pl.BlockSpec((T, B, G3), lambda t: (t, 0, 0)),
            pl.BlockSpec((B, H), lambda t: (0, 0)),
            pl.BlockSpec((H, G3), lambda t: (0, 0)),
            pl.BlockSpec((1, G3), lambda t: (0, 0)),
        ],
        out_specs=pl.BlockSpec((T, B, H), lambda t: (t, 0, 0)),
        out_shape=jax.ShapeDtypeStruct((L, B, H), jnp.float32),
        scratch_shapes=[pltpu.VMEM((B, H), jnp.float32)],
        compiler_params=pltpu.CompilerParams(
            dimension_semantics=("arbitrary",)),
    )(gi, h0, whh, bhh)


# ----------------------------------------------------------------------------
# Kernel A: 'dot' attention + softmax + context + tanh(joiner) for ALL decoder
# timesteps, operating directly on the natural (L, B, H) layouts (no HBM
# transposes).  attn is written straight in the final (L_out, B, L_in) layout.
# ----------------------------------------------------------------------------
def attn_joiner_kernel(dh_ref, enc_ref, wj_ref, bj_ref, attn_ref, vec_ref):
    B = dh_ref.shape[1]
    cdt = wj_ref.dtype                       # bf16 MXU operands
    dh_all = dh_ref[...]                     # (L_out, B, H) f32
    enc_all = enc_ref[...]                   # (L_in,  B, H) f32
    wj0 = wj_ref[0]                          # (H, H) context part
    wj1 = wj_ref[1]                          # (H, H) rnn part
    bj = bj_ref[0]                           # (1, H)

    for b in range(B):                       # static unroll, B is small
        dh_b = dh_all[:, b, :].astype(cdt)   # (L_out, H)
        enc_b = enc_all[:, b, :].astype(cdt)  # (L_in, H)
        # TODO(synk): feed enc pre-transposed (H, L_in) to avoid the implicit
        # XLU transpose from contracting the last dims of both operands.
        s = jax.lax.dot_general(
            dh_b, enc_b, (((1,), (1,)), ((), ())),
            preferred_element_type=jnp.float32)            # (L_out, L_in)
        m = jnp.max(s, axis=-1, keepdims=True)
        e = jnp.exp(s - m)
        w = e * pl.reciprocal(jnp.sum(e, axis=-1, keepdims=True), approx=True)
        attn_ref[:, b, :] = w
        ctx_b = jnp.dot(w.astype(cdt), enc_b,
                        preferred_element_type=jnp.float32)  # (L_out, H)
        vec_b = jnp.tanh(
            jnp.dot(ctx_b.astype(cdt), wj0, preferred_element_type=jnp.float32)
            + jnp.dot(dh_b, wj1, preferred_element_type=jnp.float32)
            + bj)
        vec_ref[:, b, :] = vec_b


def attention_joiner(rnn_out, enc_out, wj, bj):
    L_out, B, H = rnn_out.shape
    L_in = enc_out.shape[0]
    return pl.pallas_call(
        attn_joiner_kernel,
        grid=(1,),
        in_specs=[
            pl.BlockSpec((L_out, B, H), lambda i: (0, 0, 0)),
            pl.BlockSpec((L_in, B, H), lambda i: (0, 0, 0)),
            pl.BlockSpec((2, H, H), lambda i: (0, 0, 0)),
            pl.BlockSpec((1, 1, H), lambda i: (0, 0, 0)),
        ],
        out_specs=(
            pl.BlockSpec((L_out, B, L_in), lambda i: (0, 0, 0)),
            pl.BlockSpec((L_out, B, H), lambda i: (0, 0, 0)),
        ),
        out_shape=(
            jax.ShapeDtypeStruct((L_out, B, L_in), jnp.float32),
            jax.ShapeDtypeStruct((L_out, B, H), jnp.float32),
        ),
        compiler_params=pltpu.CompilerParams(
            dimension_semantics=("arbitrary",)),
    )(rnn_out, enc_out, wj, bj)


# ----------------------------------------------------------------------------
# Kernel B: vocab projection with M = B*L_out rows and a V-tiled weight
# stream.  vec stays VMEM-resident (constant index_map); the (H, TV) wp tiles
# are double-buffered by BlockSpec, so wp never has to fit VMEM whole.
# ----------------------------------------------------------------------------
def vocab_proj_kernel(vec_ref, wp_ref, bp_ref, out_ref):
    out_ref[...] = (
        jnp.dot(vec_ref[...].astype(wp_ref.dtype), wp_ref[...],
                preferred_element_type=jnp.float32)
        + bp_ref[...])


def vocab_project(vec_flat, wp, bp, *, tv=2048):
    M, H = vec_flat.shape
    V = wp.shape[1]
    TV = min(V, tv)
    nV = pl.cdiv(V, TV)
    Vp = nV * TV
    if Vp != V:                              # pad V to a multiple of the tile
        wp = jnp.pad(wp, ((0, 0), (0, Vp - V)))
        bp = jnp.pad(bp, ((0, 0), (0, Vp - V)))
    logits = pl.pallas_call(
        vocab_proj_kernel,
        grid=(nV,),
        in_specs=[
            pl.BlockSpec((M, H), lambda v: (0, 0)),
            pl.BlockSpec((H, TV), lambda v: (0, v)),
            pl.BlockSpec((1, TV), lambda v: (0, v)),
        ],
        out_specs=pl.BlockSpec((M, TV), lambda v: (0, v)),
        out_shape=jax.ShapeDtypeStruct((M, Vp), jnp.float32),
        compiler_params=pltpu.CompilerParams(
            dimension_semantics=("parallel",)),
    )(vec_flat, wp, bp)
    return logits[:, :V] if Vp != V else logits


# ----------------------------------------------------------------------------
# Encoder: embedding + bidirectional GRU stack (hidden per direction = H/2)
# ----------------------------------------------------------------------------
def run_encoder(params, input_tokens, input_lengths):
    L, B = input_tokens.shape
    # pack/pad semantics are only exercised with full-length sequences here
    assert all(int(l) == L for l in input_lengths), "all lengths must equal L_in"
    emb = params['enc_embedding'][input_tokens]              # (L, B, H)
    n_layers = len(params['enc_gru'])
    H = emb.shape[-1]
    Hh = H // 2

    layer_in = emb
    final_hidden = []
    for layer in range(n_layers):
        p = params['enc_gru'][layer]
        Din = layer_in.shape[-1]
        # hoisted input projection for both directions (one MXU matmul each)
        gi = stacked_proj(layer_in.reshape(L * B, Din), p['wih'], p['bih'])
        gi = gi.reshape(2, L, B, 3 * Hh)
        out = bigru_seq(gi, p['whh'], p['bhh'])               # (2, L, B, Hh)
        fwd, bwd = out[0], out[1]
        # TODO(synk): fold this concat into the next layer's split Wih halves.
        layer_in = jnp.concatenate([fwd, bwd], axis=-1)       # (L, B, H)
        # matches torch.cat([h[2i], h[2i+1]], 1) in EncoderRNN.forward
        final_hidden.append(jnp.concatenate([fwd[L - 1], bwd[0]], axis=-1))

    encoder_outputs = layer_in                                # (L, B, H)
    encoder_hidden = jnp.stack(final_hidden, axis=0)          # (n_layers, B, H)
    return encoder_outputs, encoder_hidden


# ----------------------------------------------------------------------------
# Full Luong forward (teacher-forcing path; epoch=0 => always teacher forcing)
# ----------------------------------------------------------------------------
def luong_full_forward(params, input_tokens, input_lengths, output_tokens, epoch):
    L_out, B = output_tokens.shape
    encoder_outputs, encoder_hidden = run_encoder(params, input_tokens, input_lengths)
    H = encoder_outputs.shape[-1]

    z_epoch = 7.0
    teacher_forcing_param = (z_epoch - epoch) / z_epoch
    assert teacher_forcing_param >= 1.0, \
        "only the deterministic teacher-forcing path is implemented"
    # TODO(synk): stochastic non-teacher-forcing branch (Categorical sampling of
    # decoder_input) is not implemented; with epoch=0 PyTorch always teacher-forces.

    # Teacher forcing => all decoder input tokens are known up front:
    #   step 0 uses SOS, step t>0 uses output_tokens[t-1].
    dec_tokens = jnp.concatenate(
        [jnp.full((1, B), SOS_token, jnp.int32), output_tokens[:-1]], axis=0)
    dec_emb = params['dec_embedding'][dec_tokens]             # (L_out, B, H)

    layer_in = dec_emb
    for layer, p in enumerate(params['dec_gru']):
        gi = stacked_proj(layer_in.reshape(L_out * B, layer_in.shape[-1]),
                          p['wih'], p['bih'])
        gi = gi.reshape(L_out, B, 3 * H)
        layer_in = gru_seq(gi, encoder_hidden[layer], p['whh'], p['bhh'])
    rnn_output = layer_in                                     # (L_out, B, H)

    # attention + joiner (kernel A), then V-tiled vocab projection (kernel B)
    all_attn, vec = attention_joiner(rnn_output, encoder_outputs,
                                     params['joiner_w'], params['joiner_b'])
    logits_flat = vocab_project(vec.reshape(L_out * B, H),
                                params['proj_w'], params['proj_b'])
    all_outputs = logits_flat.reshape(L_out, B, -1)           # (L_out, B, V)
    return all_outputs, all_attn


# ----------------------------------------------------------------------------
# Pure-JAX reference (f32 math on the same -- bf16-rounded -- weights).
# ----------------------------------------------------------------------------
def reference_forward(params, input_tokens, input_lengths, output_tokens, epoch):
    L_in, B = input_tokens.shape
    L_out = output_tokens.shape[0]
    n_layers = len(params['enc_gru'])
    H = params['enc_embedding'].shape[1]
    Hh = H // 2
    f32 = jnp.float32

    def cell(x, h, wih, whh, bih, bhh):
        Hc = h.shape[1]
        gi = x @ wih + bih
        gh = h @ whh + bhh
        r = jax.nn.sigmoid(gi[:, :Hc] + gh[:, :Hc])
        z = jax.nn.sigmoid(gi[:, Hc:2 * Hc] + gh[:, Hc:2 * Hc])
        n = jnp.tanh(gi[:, 2 * Hc:] + r * gh[:, 2 * Hc:])
        return (1.0 - z) * n + z * h

    emb = params['enc_embedding'][input_tokens]
    layer_in = emb
    final_hidden = []
    for layer in range(n_layers):
        p = params['enc_gru'][layer]
        h = jnp.zeros((B, Hh), f32)
        fwd = []
        for t in range(L_in):
            h = cell(layer_in[t], h, p['wih'][0].astype(f32), p['whh'][0],
                     p['bih'][0], p['bhh'][0])
            fwd.append(h)
        hf = h
        h = jnp.zeros((B, Hh), f32)
        bwd = [None] * L_in
        for t in range(L_in - 1, -1, -1):
            h = cell(layer_in[t], h, p['wih'][1].astype(f32), p['whh'][1],
                     p['bih'][1], p['bhh'][1])
            bwd[t] = h
        hb = h
        layer_in = jnp.stack(
            [jnp.concatenate([fwd[t], bwd[t]], 1) for t in range(L_in)], 0)
        final_hidden.append(jnp.concatenate([hf, hb], 1))
    enc_out = layer_in
    enc_hidden = jnp.stack(final_hidden, 0)

    dec_hidden = [enc_hidden[l] for l in range(n_layers)]
    dec_in = jnp.full((B,), SOS_token, jnp.int32)
    wj0 = params['joiner_w'][0].astype(f32)
    wj1 = params['joiner_w'][1].astype(f32)
    wp = params['proj_w'].astype(f32)
    outs, attns = [], []
    for t in range(L_out):
        x = params['dec_embedding'][dec_in]
        inp = x
        for l in range(n_layers):
            p = params['dec_gru'][l]
            dec_hidden[l] = cell(inp, dec_hidden[l], p['wih'][0].astype(f32),
                                 p['whh'], p['bih'][0], p['bhh'])
            inp = dec_hidden[l]
        dh = inp                                              # (B, H)
        scores = jnp.einsum('bh,lbh->bl', dh, enc_out)
        w = jax.nn.softmax(scores, axis=1)
        ctx = jnp.einsum('bl,lbh->bh', w, enc_out)
        vec = jnp.tanh(ctx @ wj0 + dh @ wj1 + params['joiner_b'][0])
        logits = vec @ wp + params['proj_b']
        outs.append(logits)
        attns.append(w)
        dec_in = output_tokens[t]
    return jnp.stack(outs, 0), jnp.stack(attns, 0)


# ----------------------------------------------------------------------------
# Deterministic parameter init (shapes follow the PyTorch module __init__).
# GRU gate weights are pre-fused to (Din, 3H)/(H, 3H), gate order r|z|n.
# MXU-streamed weights (Wih, joiner, projection) are stored in bf16.
# ----------------------------------------------------------------------------
def init_params(key, vocab, h_size, n_layers, vocab_out):
    keys = iter(jax.random.split(key, 256))

    def u(shape, scale, dtype=jnp.float32):
        return jax.random.uniform(next(keys), shape, jnp.float32,
                                  -scale, scale).astype(dtype)

    Hh = h_size // 2
    params = {
        'enc_embedding': jax.random.normal(next(keys), (vocab, h_size), jnp.float32),
        'dec_embedding': jax.random.normal(next(keys), (vocab_out, h_size), jnp.float32),
    }

    enc_gru = []
    for layer in range(n_layers):
        din = h_size  # layer 0: embedding (H); layer >0: 2*Hh = H
        s = 1.0 / (Hh ** 0.5)
        enc_gru.append({
            'wih': u((2, din, 3 * Hh), s, jnp.bfloat16),      # [fwd, bwd]
            'whh': u((2, Hh, 3 * Hh), s),                     # recurrent: f32
            'bih': u((2, 1, 3 * Hh), s),
            'bhh': u((2, 1, 3 * Hh), s),
        })
    params['enc_gru'] = enc_gru

    dec_gru = []
    for layer in range(n_layers):
        s = 1.0 / (h_size ** 0.5)
        dec_gru.append({
            'wih': u((1, h_size, 3 * h_size), s, jnp.bfloat16),
            'whh': u((h_size, 3 * h_size), s),
            'bih': u((1, 1, 3 * h_size), s),
            'bhh': u((1, 3 * h_size), s),
        })
    params['dec_gru'] = dec_gru

    sj = 1.0 / ((2 * h_size) ** 0.5)
    params['joiner_w'] = u((2, h_size, h_size), sj, jnp.bfloat16)  # [ctx, rnn]
    params['joiner_b'] = u((1, 1, h_size), sj)
    sp = 1.0 / (h_size ** 0.5)
    params['proj_w'] = u((h_size, vocab_out), sp, jnp.bfloat16)
    params['proj_b'] = u((1, vocab_out), sp)
    return params


if __name__ == "__main__":
    vocab, vocab_out = 30, 20
    h_size, n_layers = 32, 1
    L_in, L_out, B = 8, 6, 2
    epoch = 0.0            # epoch=0 => deterministic teacher forcing

    key = jax.random.PRNGKey(0)
    k_params, k_in, k_out = jax.random.split(key, 3)
    params = init_params(k_params, vocab, h_size, n_layers, vocab_out)

    input_tokens = jax.random.randint(k_in, (L_in, B), 3, vocab).astype(jnp.int32)
    output_tokens = jax.random.randint(k_out, (L_out, B), 3, vocab_out).astype(jnp.int32)
    input_lengths = [L_in] * B

    fwd = jax.jit(lambda p, it, ot: luong_full_forward(p, it, input_lengths, ot, epoch))
    all_decoder_outputs, all_attentions = fwd(params, input_tokens, output_tokens)
    jax.block_until_ready((all_decoder_outputs, all_attentions))

    assert all_decoder_outputs.shape == (L_out, B, vocab_out)
    assert all_attentions.shape == (L_out, B, L_in)
    assert bool(jnp.all(jnp.isfinite(all_decoder_outputs)))
    # attention rows must be a softmax over L_in (approx reciprocal => loose atol)
    assert bool(jnp.allclose(jnp.sum(all_attentions, axis=-1), 1.0, atol=1e-2))

    # numerical parity with a pure-JAX f32 reference (same bf16-rounded weights;
    # tolerance covers the bf16 activation casts in the kernels)
    ref_out, ref_attn = reference_forward(params, input_tokens, input_lengths,
                                          output_tokens, epoch)
    assert bool(jnp.allclose(all_decoder_outputs, ref_out, atol=5e-2, rtol=5e-2))
    assert bool(jnp.allclose(all_attentions, ref_attn, atol=5e-2, rtol=5e-2))
    print("KERNEL_OK")
</pallas_src>

<mosaic_0001>
module attributes {stable_mosaic.version = 11 : i64} {
  func.func @stacked_proj_kernel(%arg0: i32, %arg1: memref<12x32xf32, #tpu.memory_space<vmem>>, %arg2: memref<1x32x96xbf16, #tpu.memory_space<vmem>>, %arg3: memref<1x1x96xf32, #tpu.memory_space<vmem>>, %arg4: memref<1x12x96xf32, #tpu.memory_space<vmem>>) attributes {dimension_semantics = [#tpu.dimension_semantics<parallel>], iteration_bounds = array<i64: 1>, scalar_prefetch = 0 : i64, scratch_operands = 0 : i64, tpu.core_type = #tpu.core_type<tc>, window_params = [{pipeline_mode = #tpu.pipeline_mode<synchronous>, transform_indices = @transform_0, window_bounds = array<i64: 12, 32>}, {transform_indices = @transform_1, window_bounds = array<i64: 1, 32, 96>}, {transform_indices = @transform_2, window_bounds = array<i64: 1, 1, 96>}, {transform_indices = @transform_3, window_bounds = array<i64: 1, 12, 96>}]} {
    %c0 = arith.constant 0 : index
    %c0_0 = arith.constant 0 : index
    %0 = vector.load %arg1[%c0, %c0_0] : memref<12x32xf32, #tpu.memory_space<vmem>>, vector<12x32xf32>
    %1 = arith.truncf %0 : vector<12x32xf32> to vector<12x32xbf16>
    %c0_1 = arith.constant 0 : index
    %c0_2 = arith.constant 0 : index
    %c0_3 = arith.constant 0 : index
    %2 = vector.load %arg2[%c0_1, %c0_2, %c0_3] : memref<1x32x96xbf16, #tpu.memory_space<vmem>>, vector<1x32x96xbf16>
    %3 = vector.shape_cast %2 : vector<1x32x96xbf16> to vector<32x96xbf16>
    %cst = arith.constant dense<0.000000e+00> : vector<12x96xf32>
    %4 = tpu.matmul %1, %3, %cst {dimension_numbers = #tpu.dot_dimension_numbers<[1], [0], [0], [1], [0, 0, 1, 1], [], []>} : vector<12x32xbf16>, vector<32x96xbf16>, vector<12x96xf32> -> vector<12x96xf32>
    %c0_4 = arith.constant 0 : index
    %c0_5 = arith.constant 0 : index
    %c0_6 = arith.constant 0 : index
    %5 = vector.load %arg3[%c0_4, %c0_5, %c0_6] : memref<1x1x96xf32, #tpu.memory_space<vmem>>, vector<1x1x96xf32>
    %6 = vector.shape_cast %5 : vector<1x1x96xf32> to vector<1x96xf32>
    %7 = vector.broadcast %6 : vector<1x96xf32> to vector<12x96xf32>
    %8 = arith.addf %4, %7 : vector<12x96xf32>
    %c0_7 = arith.constant 0 : index
    %c0_8 = arith.constant 0 : index
    %c0_9 = arith.constant 0 : index
    %9 = vector.load %arg4[%c0_7, %c0_8, %c0_9] : memref<1x12x96xf32, #tpu.memory_space<vmem>>, vector<1x12x96xf32>
    %10 = vector.shape_cast %9 : vector<1x12x96xf32> to vector<12x96xf32>
    %11 = vector.shape_cast %8 : vector<12x96xf32> to vector<1x12x96xf32>
    tpu.vector_store %arg4[%c0_7, %c0_8, %c0_9], %11 {strides = array<i32>} : memref<1x12x96xf32, #tpu.memory_space<vmem>>, vector<1x12x96xf32>,
    return
  }
  func.func @transform_0(%arg0: i32) -> (i32, i32) {
    %c0_i32 = arith.constant 0 : i32
    %c0_i32_0 = arith.constant 0 : i32
    %c0_i32_1 = arith.constant 0 : i32
    return %c0_i32, %c0_i32_0 : i32, i32
  }
  func.func @transform_1(%arg0: i32) -> (i32, i32, i32) {
    %c0_i32 = arith.constant 0 : i32
    %c0_i32_0 = arith.constant 0 : i32
    %c0_i32_1 = arith.constant 0 : i32
    return %arg0, %c0_i32, %c0_i32_0 : i32, i32, i32
  }
  func.func @transform_2(%arg0: i32) -> (i32, i32, i32) {
    %c0_i32 = arith.constant 0 : i32
    %c0_i32_0 = arith.constant 0 : i32
    %c0_i32_1 = arith.constant 0 : i32
    return %arg0, %c0_i32, %c0_i32_0 : i32, i32, i32
  }
  func.func @transform_3(%arg0: i32) -> (i32, i32, i32) {
    %c0_i32 = arith.constant 0 : i32
    %c0_i32_0 = arith.constant 0 : i32
    %c0_i32_1 = arith.constant 0 : i32
    return %arg0, %c0_i32, %c0_i32_0 : i32, i32, i32
  }
}

module attributes {stable_mosaic.version = 11 : i64} {
  func.func @stacked_proj_kernel(%arg0: i32, %arg1: memref<16x32xf32, #tpu.memory_space<vmem>>, %arg2: memref<1x32x48xbf16, #tpu.memory_space<vmem>>, %arg3: memref<1x1x48xf32, #tpu.memory_space<vmem>>, %arg4: memref<1x16x48xf32, #tpu.memory_space<vmem>>) attributes {dimension_semantics = [#tpu.dimension_semantics<parallel>], iteration_bounds = array<i64: 2>, scalar_prefetch = 0 : i64, scratch_operands = 0 : i64, tpu.core_type = #tpu.core_type<tc>, window_params = [{pipeline_mode = #tpu.pipeline_mode<synchronous>, transform_indices = @transform_0, window_bounds = array<i64: 16, 32>}, {transform_indices = @transform_1, window_bounds = array<i64: 1, 32, 48>}, {transform_indices = @transform_2, window_bounds = array<i64: 1, 1, 48>}, {transform_indices = @transform_3, window_bounds = array<i64: 1, 16, 48>}]} {
    %c0 = arith.constant 0 : index
    %c0_0 = arith.constant 0 : index
    %0 = vector.load %arg1[%c0, %c0_0] : memref<16x32xf32, #tpu.memory_space<vmem>>, vector<16x32xf32>
    %1 = arith.truncf %0 : vector<16x32xf32> to vector<16x32xbf16>
    %c0_1 = arith.constant 0 : index
    %c0_2 = arith.constant 0 : index
    %c0_3 = arith.constant 0 : index
    %2 = vector.load %arg2[%c0_1, %c0_2, %c0_3] : memref<1x32x48xbf16, #tpu.memory_space<vmem>>, vector<1x32x48xbf16>
    %3 = vector.shape_cast %2 : vector<1x32x48xbf16> to vector<32x48xbf16>
    %cst = arith.constant dense<0.000000e+00> : vector<16x48xf32>
    %4 = tpu.matmul %1, %3, %cst {dimension_numbers = #tpu.dot_dimension_numbers<[1], [0], [0], [1], [0, 0, 1, 1], [], []>} : vector<16x32xbf16>, vector<32x48xbf16>, vector<16x48xf32> -> vector<16x48xf32>
    %c0_4 = arith.constant 0 : index
    %c0_5 = arith.constant 0 : index
    %c0_6 = arith.constant 0 : index
    %5 = vector.load %arg3[%c0_4, %c0_5, %c0_6] : memref<1x1x48xf32, #tpu.memory_space<vmem>>, vector<1x1x48xf32>
    %6 = vector.shape_cast %5 : vector<1x1x48xf32> to vector<1x48xf32>
    %7 = vector.broadcast %6 : vector<1x48xf32> to vector<16x48xf32>
    %8 = arith.addf %4, %7 : vector<16x48xf32>
    %c0_7 = arith.constant 0 : index
    %c0_8 = arith.constant 0 : index
    %c0_9 = arith.constant 0 : index
    %9 = vector.load %arg4[%c0_7, %c0_8, %c0_9] : memref<1x16x48xf32, #tpu.memory_space<vmem>>, vector<1x16x48xf32>
    %10 = vector.shape_cast %9 : vector<1x16x48xf32> to vector<16x48xf32>
    %11 = vector.shape_cast %8 : vector<16x48xf32> to vector<1x16x48xf32>
    tpu.vector_store %arg4[%c0_7, %c0_8, %c0_9], %11 {strides = array<i32>} : memref<1x16x48xf32, #tpu.memory_space<vmem>>, vector<1x16x48xf32>,
    return
  }
  func.func @transform_0(%arg0: i32) -> (i32, i32) {
    %c0_i32 = arith.constant 0 : i32
    %c0_i32_0 = arith.constant 0 : i32
    %c0_i32_1 = arith.constant 0 : i32
    return %c0_i32, %c0_i32_0 : i32, i32
  }
  func.func @transform_1(%arg0: i32) -> (i32, i32, i32) {
    %c0_i32 = arith.constant 0 : i32
    %c0_i32_0 = arith.constant 0 : i32
    %c0_i32_1 = arith.constant 0 : i32
    return %arg0, %c0_i32, %c0_i32_0 : i32, i32, i32
  }
  func.func @transform_2(%arg0: i32) -> (i32, i32, i32) {
    %c0_i32 = arith.constant 0 : i32
    %c0_i32_0 = arith.constant 0 : i32
    %c0_i32_1 = arith.constant 0 : i32
    return %arg0, %c0_i32, %c0_i32_0 : i32, i32, i32
  }
  func.func @transform_3(%arg0: i32) -> (i32, i32, i32) {
    %c0_i32 = arith.constant 0 : i32
    %c0_i32_0 = arith.constant 0 : i32
    %c0_i32_1 = arith.constant 0 : i32
    return %arg0, %c0_i32, %c0_i32_0 : i32, i32, i32
  }
}

module attributes {stable_mosaic.version = 11 : i64} {
  func.func @bigru_block_kernel(%arg0: i32, %arg1: i32, %arg2: memref<1x8x2x48xf32, #tpu.memory_space<vmem>>, %arg3: memref<1x16x48xf32, #tpu.memory_space<vmem>>, %arg4: memref<1x1x48xf32, #tpu.memory_space<vmem>>, %arg5: memref<1x8x2x16xf32, #tpu.memory_space<vmem>>, %arg6: memref<2x16xf32, #tpu.memory_space<vmem>>) attributes {dimension_semantics = [#tpu.dimension_semantics<parallel>, #tpu.dimension_semantics<arbitrary>], iteration_bounds = array<i64: 2, 1>, scalar_prefetch = 0 : i64, scratch_operands = 1 : i64, tpu.core_type = #tpu.core_type<tc>, window_params = [{transform_indices = @transform_0, window_bounds = array<i64: 1, 8, 2, 48>}, {transform_indices = @transform_1, window_bounds = array<i64: 1, 16, 48>}, {transform_indices = @transform_2, window_bounds = array<i64: 1, 1, 48>}, {transform_indices = @transform_3, window_bounds = array<i64: 1, 8, 2, 16>}]} {
    %c0_i32 = arith.constant 0 : i32
    %0 = arith.cmpi eq, %arg1, %c0_i32 : i32
    %1 = arith.extui %0 : i1 to i32
    %c0_i32_0 = arith.constant 0 : i32
    %2 = arith.cmpi ne, %1, %c0_i32_0 : i32
    scf.if %2 {
      %cst = arith.constant 0.000000e+00 : f32
      %9 = vector.broadcast %cst : f32 to vector<2x16xf32>
      %c0 = arith.constant 0 : index
      %c0_4 = arith.constant 0 : index
      %10 = vector.load %arg6[%c0, %c0_4] : memref<2x16xf32, #tpu.memory_space<vmem>>, vector<2x16xf32>
      tpu.vector_store %arg6[%c0, %c0_4], %9 {strides = array<i32>} : memref<2x16xf32, #tpu.memory_space<vmem>>, vector<2x16xf32>,
    } else {
    }
    %c0_i32_1 = arith.constant 0 : i32
    %3 = arith.cmpi eq, %arg0, %c0_i32_1 : i32
    %4 = arith.extui %3 : i1 to i32
    %c0_i32_2 = arith.constant 0 : i32
    %5 = arith.cmpi ne, %4, %c0_i32_2 : i32
    scf.if %5 {
      %c0 = arith.constant 0 : index
      %c0_4 = arith.constant 0 : index
      %c0_5 = arith.constant 0 : index
      %9 = vector.load %arg3[%c0, %c0_4, %c0_5] : memref<1x16x48xf32, #tpu.memory_space<vmem>>, vector<1x16x48xf32>
      %10 = vector.shape_cast %9 : vector<1x16x48xf32> to vector<16x48xf32>
      %c0_6 = arith.constant 0 : index
      %c0_7 = arith.constant 0 : index
      %c0_8 = arith.constant 0 : index
      %11 = vector.load %arg4[%c0_6, %c0_7, %c0_8] : memref<1x1x48xf32, #tpu.memory_space<vmem>>, vector<1x1x48xf32>
      %12 = vector.shape_cast %11 : vector<1x1x48xf32> to vector<1x48xf32>
      %c0_9 = arith.constant 0 : index
      %c0_10 = arith.constant 0 : index
      %13 = vector.load %arg6[%c0_9, %c0_10] : memref<2x16xf32, #tpu.memory_space<vmem>>, vector<2x16xf32>
      %c0_i32_11 = arith.constant 0 : i32
      %c0_12 = arith.constant 0 : index
      %14 = arith.index_cast %c0_i32_11 : i32 to index
      %c0_13 = arith.constant 0 : index
      %c0_14 = arith.constant 0 : index
      %15 = vector.load %arg2[%c0_12, %14, %c0_13, %c0_14] : memref<1x8x2x48xf32, #tpu.memory_space<vmem>>, vector<1x1x2x48xf32>
      %16 = vector.shape_cast %15 : vector<1x1x2x48xf32> to vector<2x48xf32>
      %cst = arith.constant dense<0.000000e+00> : vector<2x48xf32>
      %17 = tpu.matmul %13, %10, %cst {dimension_numbers = #tpu.dot_dimension_numbers<[1], [0], [0], [1], [0, 0, 1, 1], [], []>} : vector<2x16xf32>, vector<16x48xf32>, vector<2x48xf32> -> vector<2x48xf32>
      %18 = vector.broadcast %12 : vector<1x48xf32> to vector<2x48xf32>
      %19 = arith.addf %17, %18 : vector<2x48xf32>
      %20 = vector.extract_strided_slice %16 {offsets = [0, 0], sizes = [2, 16], strides = [1, 1]} : vector<2x48xf32> to vector<2x16xf32>
      %21 = vector.extract_strided_slice %19 {offsets = [0, 0], sizes = [2, 16], strides = [1, 1]} : vector<2x48xf32> to vector<2x16xf32>
      %22 = arith.addf %20, %21 : vector<2x16xf32>
      %23 = arith.negf %22 : vector<2x16xf32>
      %24 = math.exp %23 : vector<2x16xf32>
      %cst_15 = arith.constant 1.000000e+00 : f32
      %25 = vector.broadcast %cst_15 : f32 to vector<2x16xf32>
      %26 = arith.addf %25, %24 : vector<2x16xf32>
      %27 = arith.divf %25, %26 : vector<2x16xf32>
      %28 = vector.extract_strided_slice %16 {offsets = [0, 16], sizes = [2, 16], strides = [1, 1]} : vector<2x48xf32> to vector<2x16xf32>
      %29 = vector.extract_strided_slice %19 {offsets = [0, 16], sizes = [2, 16], strides = [1, 1]} : vector<2x48xf32> to vector<2x16xf32>
      %30 = arith.addf %28, %29 : vector<2x16xf32>
      %31 = arith.negf %30 : vector<2x16xf32>
      %32 = math.exp %31 : vector<2x16xf32>
      %cst_16 = arith.constant 1.000000e+00 : f32
      %33 = vector.broadcast %cst_16 : f32 to vector<2x16xf32>
      %34 = arith.addf %33, %32 : vector<2x16xf32>
      %35 = arith.divf %33, %34 : vector<2x16xf32>
      %36 = vector.extract_strided_slice %16 {offsets = [0, 32], sizes = [2, 16], strides = [1, 1]} : vector<2x48xf32> to vector<2x16xf32>
      %37 = vector.extract_strided_slice %19 {offsets = [0, 32], sizes = [2, 16], strides = [1, 1]} : vector<2x48xf32> to vector<2x16xf32>
      %38 = arith.mulf %27, %37 : vector<2x16xf32>
      %39 = arith.addf %36, %38 : vector<2x16xf32>
      %40 = math.tanh %39 : vector<2x16xf32>
      %cst_17 = arith.constant 1.000000e+00 : f32
      %41 = vector.broadcast %cst_17 : f32 to vector<2x16xf32>
      %42 = arith.subf %41, %35 : vector<2x16xf32>
      %43 = arith.mulf %42, %40 : vector<2x16xf32>
      %44 = arith.mulf %35, %13 : vector<2x16xf32>
      %45 = arith.addf %43, %44 : vector<2x16xf32>
      %c0_18 = arith.constant 0 : index
      %46 = arith.index_cast %c0_i32_11 : i32 to index
      %c0_19 = arith.constant 0 : index
      %c0_20 = arith.constant 0 : index
      %47 = vector.load %arg5[%c0_18, %46, %c0_19, %c0_20] : memref<1x8x2x16xf32, #tpu.memory_space<vmem>>, vector<1x1x2x16xf32>
      %48 = vector.shape_cast %47 : vector<1x1x2x16xf32> to vector<2x16xf32>
      %49 = vector.shape_cast %45 : vector<2x16xf32> to vector<1x1x2x16xf32>
      tpu.vector_store %arg5[%c0_18, %46, %c0_19, %c0_20], %49 {strides = array<i32>} : memref<1x8x2x16xf32, #tpu.memory_space<vmem>>, vector<1x1x2x16xf32>,
      %c1_i32_21 = arith.constant 1 : i32
      %c0_22 = arith.constant 0 : index
      %50 = arith.index_cast %c1_i32_21 : i32 to index
      %c0_23 = arith.constant 0 : index
      %c0_24 = arith.constant 0 : index
      %51 = vector.load %arg2[%c0_22, %50, %c0_23, %c0_24] : memref<1x8x2x48xf32, #tpu.memory_space<vmem>>, vector<1x1x2x48xf32>
      %52 = vector.shape_cast %51 : vector<1x1x2x48xf32> to vector<2x48xf32>
      %cst_25 = arith.constant dense<0.000000e+00> : vector<2x48xf32>
      %53 = tpu.matmul %45, %10, %cst_25 {dimension_numbers = #tpu.dot_dimension_numbers<[1], [0], [0], [1], [0, 0, 1, 1], [], []>} : vector<2x16xf32>, vector<16x48xf32>, vector<2x48xf32> -> vector<2x48xf32>
      %54 = vector.broadcast %12 : vector<1x48xf32> to vector<2x48xf32>
      %55 = arith.addf %53, %54 : vector<2x48xf32>
      %56 = vector.extract_strided_slice %52 {offsets = [0, 0], sizes = [2, 16], strides = [1, 1]} : vector<2x48xf32> to vector<2x16xf32>
      %57 = vector.extract_strided_slice %55 {offsets = [0, 0], sizes = [2, 16], strides = [1, 1]} : vector<2x48xf32> to vector<2x16xf32>
      %58 = arith.addf %56, %57 : vector<2x16xf32>
      %59 = arith.negf %58 : vector<2x16xf32>
      %60 = math.exp %59 : vector<2x16xf32>
      %cst_26 = arith.constant 1.000000e+00 : f32
      %61 = vector.broadcast %cst_26 : f32 to vector<2x16xf32>
      %62 = arith.addf %61, %60 : vector<2x16xf32>
      %63 = arith.divf %61, %62 : vector<2x16xf32>
      %64 = vector.extract_strided_slice %52 {offsets = [0, 16], sizes = [2, 16], strides = [1, 1]} : vector<2x48xf32> to vector<2x16xf32>
      %65 = vector.extract_strided_slice %55 {offsets = [0, 16], sizes = [2, 16], strides = [1, 1]} : vector<2x48xf32> to vector<2x16xf32>
      %66 = arith.addf %64, %65 : vector<2x16xf32>
      %67 = arith.negf %66 : vector<2x16xf32>
      %68 = math.exp %67 : vector<2x16xf32>
      %cst_27 = arith.constant 1.000000e+00 : f32
      %69 = vector.broadcast %cst_27 : f32 to vector<2x16xf32>
      %70 = arith.addf %69, %68 : vector<2x16xf32>
      %71 = arith.divf %69, %70 : vector<2x16xf32>
      %72 = vector.extract_strided_slice %52 {offsets = [0, 32], sizes = [2, 16], strides = [1, 1]} : vector<2x48xf32> to vector<2x16xf32>
      %73 = vector.extract_strided_slice %55 {offsets = [0, 32], sizes = [2, 16], strides = [1, 1]} : vector<2x48xf32> to vector<2x16xf32>
      %74 = arith.mulf %63, %73 : vector<2x16xf32>
      %75 = arith.addf %72, %74 : vector<2x16xf32>
      %76 = math.tanh %75 : vector<2x16xf32>
      %cst_28 = arith.constant 1.000000e+00 : f32
      %77 = vector.broadcast %cst_28 : f32 to vector<2x16xf32>
      %78 = arith.subf %77, %71 : vector<2x16xf32>
      %79 = arith.mulf %78, %76 : vector<2x16xf32>
      %80 = arith.mulf %71, %45 : vector<2x16xf32>
      %81 = arith.addf %79, %80 : vector<2x16xf32>
      %c0_29 = arith.constant 0 : index
      %82 = arith.index_cast %c1_i32_21 : i32 to index
      %c0_30 = arith.constant 0 : index
      %c0_31 = arith.constant 0 : index
      %83 = vector.load %arg5[%c0_29, %82, %c0_30, %c0_31] : memref<1x8x2x16xf32, #tpu.memory_space<vmem>>, vector<1x1x2x16xf32>
      %84 = vector.shape_cast %83 : vector<1x1x2x16xf32> to vector<2x16xf32>
      %85 = vector.shape_cast %81 : vector<2x16xf32> to vector<1x1x2x16xf32>
      tpu.vector_store %arg5[%c0_29, %82, %c0_30, %c0_31], %85 {strides = array<i32>} : memref<1x8x2x16xf32, #tpu.memory_space<vmem>>, vector<1x1x2x16xf32>,
      %c2_i32 = arith.constant 2 : i32
      %c0_32 = arith.constant 0 : index
      %86 = arith.index_cast %c2_i32 : i32 to index
      %c0_33 = arith.constant 0 : index
      %c0_34 = arith.constant 0 : index
      %87 = vector.load %arg2[%c0_32, %86, %c0_33, %c0_34] : memref<1x8x2x48xf32, #tpu.memory_space<vmem>>, vector<1x1x2x48xf32>
      %88 = vector.shape_cast %87 : vector<1x1x2x48xf32> to vector<2x48xf32>
      %cst_35 = arith.constant dense<0.000000e+00> : vector<2x48xf32>
      %89 = tpu.matmul %81, %10, %cst_35 {dimension_numbers = #tpu.dot_dimension_numbers<[1], [0], [0], [1], [0, 0, 1, 1], [], []>} : vector<2x16xf32>, vector<16x48xf32>, vector<2x48xf32> -> vector<2x48xf32>
      %90 = vector.broadcast %12 : vector<1x48xf32> to vector<2x48xf32>
      %91 = arith.addf %89, %90 : vector<2x48xf32>
      %92 = vector.extract_strided_slice %88 {offsets = [0, 0], sizes = [2, 16], strides = [1, 1]} : vector<2x48xf32> to vector<2x16xf32>
      %93 = vector.extract_strided_slice %91 {offsets = [0, 0], sizes = [2, 16], strides = [1, 1]} : vector<2x48xf32> to vector<2x16xf32>
      %94 = arith.addf %92, %93 : vector<2x16xf32>
      %95 = arith.negf %94 : vector<2x16xf32>
      %96 = math.exp %95 : vector<2x16xf32>
      %cst_36 = arith.constant 1.000000e+00 : f32
      %97 = vector.broadcast %cst_36 : f32 to vector<2x16xf32>
      %98 = arith.addf %97, %96 : vector<2x16xf32>
      %99 = arith.divf %97, %98 : vector<2x16xf32>
      %100 = vector.extract_strided_slice %88 {offsets = [0, 16], sizes = [2, 16], strides = [1, 1]} : vector<2x48xf32> to vector<2x16xf32>
      %101 = vector.extract_strided_slice %91 {offsets = [0, 16], sizes = [2, 16], strides = [1, 1]} : vector<2x48xf32> to vector<2x16xf32>
      %102 = arith.addf %100, %101 : vector<2x16xf32>
      %103 = arith.negf %102 : vector<2x16xf32>
      %104 = math.exp %103 : vector<2x16xf32>
      %cst_37 = arith.constant 1.000000e+00 : f32
      %105 = vector.broadcast %cst_37 : f32 to vector<2x16xf32>
      %106 = arith.addf %105, %104 : vector<2x16xf32>
      %107 = arith.divf %105, %106 : vector<2x16xf32>
      %108 = vector.extract_strided_slice %88 {offsets = [0, 32], sizes = [2, 16], strides = [1, 1]} : vector<2x48xf32> to vector<2x16xf32>
      %109 = vector.extract_strided_slice %91 {offsets = [0, 32], sizes = [2, 16], strides = [1, 1]} : vector<2x48xf32> to vector<2x16xf32>
      %110 = arith.mulf %99, %109 : vector<2x16xf32>
      %111 = arith.addf %108, %110 : vector<2x16xf32>
      %112 = math.tanh %111 : vector<2x16xf32>
      %cst_38 = arith.constant 1.000000e+00 : f32
      %113 = vector.broadcast %cst_38 : f32 to vector<2x16xf32>
      %114 = arith.subf %113, %107 : vector<2x16xf32>
      %115 = arith.mulf %114, %112 : vector<2x16xf32>
      %116 = arith.mulf %107, %81 : vector<2x16xf32>
      %117 = arith.addf %115, %116 : vector<2x16xf32>
      %c0_39 = arith.constant 0 : index
      %118 = arith.index_cast %c2_i32 : i32 to index
      %c0_40 = arith.constant 0 : index
      %c0_41 = arith.constant 0 : index
      %119 = vector.load %arg5[%c0_39, %118, %c0_40, %c0_41] : memref<1x8x2x16xf32, #tpu.memory_space<vmem>>, vector<1x1x2x16xf32>
      %120 = vector.shape_cast %119 : vector<1x1x2x16xf32> to vector<2x16xf32>
      %121 = vector.shape_cast %117 : vector<2x16xf32> to vector<1x1x2x16xf32>
      tpu.vector_store %arg5[%c0_39, %118, %c0_40, %c0_41], %121 {strides = array<i32>} : memref<1x8x2x16xf32, #tpu.memory_space<vmem>>, vector<1x1x2x16xf32>,
      %c3_i32 = arith.constant 3 : i32
      %c0_42 = arith.constant 0 : index
      %122 = arith.index_cast %c3_i32 : i32 to index
      %c0_43 = arith.constant 0 : index
      %c0_44 = arith.constant 0 : index
      %123 = vector.load %arg2[%c0_42, %122, %c0_43, %c0_44] : memref<1x8x2x48xf32, #tpu.memory_space<vmem>>, vector<1x1x2x48xf32>
      %124 = vector.shape_cast %123 : vector<1x1x2x48xf32> to vector<2x48xf32>
      %cst_45 = arith.constant dense<0.000000e+00> : vector<2x48xf32>
      %125 = tpu.matmul %117, %10, %cst_45 {dimension_numbers = #tpu.dot_dimension_numbers<[1], [0], [0], [1], [0, 0, 1, 1], [], []>} : vector<2x16xf32>, vector<16x48xf32>, vector<2x48xf32> -> vector<2x48xf32>
      %126 = vector.broadcast %12 : vector<1x48xf32> to vector<2x48xf32>
      %127 = arith.addf %125, %126 : vector<2x48xf32>
      %128 = vector.extract_strided_slice %124 {offsets = [0, 0], sizes = [2, 16], strides = [1, 1]} : vector<2x48xf32> to vector<2x16xf32>
      %129 = vector.extract_strided_slice %127 {offsets = [0, 0], sizes = [2, 16], strides = [1, 1]} : vector<2x48xf32> to vector<2x16xf32>
      %130 = arith.addf %128, %129 : vector<2x16xf32>
      %131 = arith.negf %130 : vector<2x16xf32>
      %132 = math.exp %131 : vector<2x16xf32>
      %cst_46 = arith.constant 1.000000e+00 : f32
      %133 = vector.broadcast %cst_46 : f32 to vector<2x16xf32>
      %134 = arith.addf %133, %132 : vector<2x16xf32>
      %135 = arith.divf %133, %134 : vector<2x16xf32>
      %136 = vector.extract_strided_slice %124 {offsets = [0, 16], sizes = [2, 16], strides = [1, 1]} : vector<2x48xf32> to vector<2x16xf32>
      %137 = vector.extract_strided_slice %127 {offsets = [0, 16], sizes = [2, 16], strides = [1, 1]} : vector<2x48xf32> to vector<2x16xf32>
      %138 = arith.addf %136, %137 : vector<2x16xf32>
      %139 = arith.negf %138 : vector<2x16xf32>
      %140 = math.exp %139 : vector<2x16xf32>
      %cst_47 = arith.constant 1.000000e+00 : f32
      %141 = vector.broadcast %cst_47 : f32 to vector<2x16xf32>
      %142 = arith.addf %141, %140 : vector<2x16xf32>
      %143 = arith.divf %141, %142 : vector<2x16xf32>
      %144 = vector.extract_strided_slice %124 {offsets = [0, 32], sizes = [2, 16], strides = [1, 1]} : vector<2x48xf32> to vector<2x16xf32>
      %145 = vector.extract_strided_slice %127 {offsets = [0, 32], sizes = [2, 16], strides = [1, 1]} : vector<2x48xf32> to vector<2x16xf32>
      %146 = arith.mulf %135, %145 : vector<2x16xf32>
      %147 = arith.addf %144, %146 : vector<2x16xf32>
      %148 = math.tanh %147 : vector<2x16xf32>
      %cst_48 = arith.constant 1.000000e+00 : f32
      %149 = vector.broadcast %cst_48 : f32 to vector<2x16xf32>
      %150 = arith.subf %149, %143 : vector<2x16xf32>
      %151 = arith.mulf %150, %148 : vector<2x16xf32>
      %152 = arith.mulf %143, %117 : vector<2x16xf32>
      %153 = arith.addf %151, %152 : vector<2x16xf32>
      %c0_49 = arith.constant 0 : index
      %154 = arith.index_cast %c3_i32 : i32 to index
      %c0_50 = arith.constant 0 : index
      %c0_51 = arith.constant 0 : index
      %155 = vector.load %arg5[%c0_49, %154, %c0_50, %c0_51] : memref<1x8x2x16xf32, #tpu.memory_space<vmem>>, vector<1x1x2x16xf32>
      %156 = vector.shape_cast %155 : vector<1x1x2x16xf32> to vector<2x16xf32>
      %157 = vector.shape_cast %153 : vector<2x16xf32> to vector<1x1x2x16xf32>
      tpu.vector_store %arg5[%c0_49, %154, %c0_50, %c0_51], %157 {strides = array<i32>} : memref<1x8x2x16xf32, #tpu.memory_space<vmem>>, vector<1x1x2x16xf32>,
      %c4_i32 = arith.constant 4 : i32
      %c0_52 = arith.constant 0 : index
      %158 = arith.index_cast %c4_i32 : i32 to index
      %c0_53 = arith.constant 0 : index
      %c0_54 = arith.constant 0 : index
      %159 = vector.load %arg2[%c0_52, %158, %c0_53, %c0_54] : memref<1x8x2x48xf32, #tpu.memory_space<vmem>>, vector<1x1x2x48xf32>
      %160 = vector.shape_cast %159 : vector<1x1x2x48xf32> to vector<2x48xf32>
      %cst_55 = arith.constant dense<0.000000e+00> : vector<2x48xf32>
      %161 = tpu.matmul %153, %10, %cst_55 {dimension_numbers = #tpu.dot_dimension_numbers<[1], [0], [0], [1], [0, 0, 1, 1], [], []>} : vector<2x16xf32>, vector<16x48xf32>, vector<2x48xf32> -> vector<2x48xf32>
      %162 = vector.broadcast %12 : vector<1x48xf32> to vector<2x48xf32>
      %163 = arith.addf %161, %162 : vector<2x48xf32>
      %164 = vector.extract_strided_slice %160 {offsets = [0, 0], sizes = [2, 16], strides = [1, 1]} : vector<2x48xf32> to vector<2x16xf32>
      %165 = vector.extract_strided_slice %163 {offsets = [0, 0], sizes = [2, 16], strides = [1, 1]} : vector<2x48xf32> to vector<2x16xf32>
      %166 = arith.addf %164, %165 : vector<2x16xf32>
      %167 = arith.negf %166 : vector<2x16xf32>
      %168 = math.exp %167 : vector<2x16xf32>
      %cst_56 = arith.constant 1.000000e+00 : f32
      %169 = vector.broadcast %cst_56 : f32 to vector<2x16xf32>
      %170 = arith.addf %169, %168 : vector<2x16xf32>
      %171 = arith.divf %169, %170 : vector<2x16xf32>
      %172 = vector.extract_strided_slice %160 {offsets = [0, 16], sizes = [2, 16], strides = [1, 1]} : vector<2x48xf32> to vector<2x16xf32>
      %173 = vector.extract_strided_slice %163 {offsets = [0, 16], sizes = [2, 16], strides = [1, 1]} : vector<2x48xf32> to vector<2x16xf32>
      %174 = arith.addf %172, %173 : vector<2x16xf32>
      %175 = arith.negf %174 : vector<2x16xf32>
      %176 = math.exp %175 : vector<2x16xf32>
      %cst_57 = arith.constant 1.000000e+00 : f32
      %177 = vector.broadcast %cst_57 : f32 to vector<2x16xf32>
      %178 = arith.addf %177, %176 : vector<2x16xf32>
      %179 = arith.divf %177, %178 : vector<2x16xf32>
      %180 = vector.extract_strided_slice %160 {offsets = [0, 32], sizes = [2, 16], strides = [1, 1]} : vector<2x48xf32> to vector<2x16xf32>
      %181 = vector.extract_strided_slice %163 {offsets = [0, 32], sizes = [2, 16], strides = [1, 1]} : vector<2x48xf32> to vector<2x16xf32>
      %182 = arith.mulf %171, %181 : vector<2x16xf32>
      %183 = arith.addf %180, %182 : vector<2x16xf32>
      %184 = math.tanh %183 : vector<2x16xf32>
      %cst_58 = arith.constant 1.000000e+00 : f32
      %185 = vector.broadcast %cst_58 : f32 to vector<2x16xf32>
      %186 = arith.subf %185, %179 : vector<2x16xf32>
      %187 = arith.mulf %186, %184 : vector<2x16xf32>
      %188 = arith.mulf %179, %153 : vector<2x16xf32>
      %189 = arith.addf %187, %188 : vector<2x16xf32>
      %c0_59 = arith.constant 0 : index
      %190 = arith.index_cast %c4_i32 : i32 to index
      %c0_60 = arith.constant 0 : index
      %c0_61 = arith.constant 0 : index
      %191 = vector.load %arg5[%c0_59, %190, %c0_60, %c0_61] : memref<1x8x2x16xf32, #tpu.memory_space<vmem>>, vector<1x1x2x16xf32>
      %192 = vector.shape_cast %191 : vector<1x1x2x16xf32> to vector<2x16xf32>
      %193 = vector.shape_cast %189 : vector<2x16xf32> to vector<1x1x2x16xf32>
      tpu.vector_store %arg5[%c0_59, %190, %c0_60, %c0_61], %193 {strides = array<i32>} : memref<1x8x2x16xf32, #tpu.memory_space<vmem>>, vector<1x1x2x16xf32>,
      %c5_i32 = arith.constant 5 : i32
      %c0_62 = arith.constant 0 : index
      %194 = arith.index_cast %c5_i32 : i32 to index
      %c0_63 = arith.constant 0 : index
      %c0_64 = arith.constant 0 : index
      %195 = vector.load %arg2[%c0_62, %194, %c0_63, %c0_64] : memref<1x8x2x48xf32, #tpu.memory_space<vmem>>, vector<1x1x2x48xf32>
      %196 = vector.shape_cast %195 : vector<1x1x2x48xf32> to vector<2x48xf32>
      %cst_65 = arith.constant dense<0.000000e+00> : vector<2x48xf32>
      %197 = tpu.matmul %189, %10, %cst_65 {dimension_numbers = #tpu.dot_dimension_numbers<[1], [0], [0], [1], [0, 0, 1, 1], [], []>} : vector<2x16xf32>, vector<16x48xf32>, vector<2x48xf32> -> vector<2x48xf32>
      %198 = vector.broadcast %12 : vector<1x48xf32> to vector<2x48xf32>
      %199 = arith.addf %197, %198 : vector<2x48xf32>
      %200 = vector.extract_strided_slice %196 {offsets = [0, 0], sizes = [2, 16], strides = [1, 1]} : vector<2x48xf32> to vector<2x16xf32>
      %201 = vector.extract_strided_slice %199 {offsets = [0, 0], sizes = [2, 16], strides = [1, 1]} : vector<2x48xf32> to vector<2x16xf32>
      %202 = arith.addf %200, %201 : vector<2x16xf32>
      %203 = arith.negf %202 : vector<2x16xf32>
      %204 = math.exp %203 : vector<2x16xf32>
      %cst_66 = arith.constant 1.000000e+00 : f32
      %205 = vector.broadcast %cst_66 : f32 to vector<2x16xf32>
      %206 = arith.addf %205, %204 : vector<2x16xf32>
      %207 = arith.divf %205, %206 : vector<2x16xf32>
      %208 = vector.extract_strided_slice %196 {offsets = [0, 16], sizes = [2, 16], strides = [1, 1]} : vector<2x48xf32> to vector<2x16xf32>
      %209 = vector.extract_strided_slice %199 {offsets = [0, 16], sizes = [2, 16], strides = [1, 1]} : vector<2x48xf32> to vector<2x16xf32>
      %210 = arith.addf %208, %209 : vector<2x16xf32>
      %211 = arith.negf %210 : vector<2x16xf32>
      %212 = math.exp %211 : vector<2x16xf32>
      %cst_67 = arith.constant 1.000000e+00 : f32
      %213 = vector.broadcast %cst_67 : f32 to vector<2x16xf32>
      %214 = arith.addf %213, %212 : vector<2x16xf32>
      %215 = arith.divf %213, %214 : vector<2x16xf32>
      %216 = vector.extract_strided_slice %196 {offsets = [0, 32], sizes = [2, 16], strides = [1, 1]} : vector<2x48xf32> to vector<2x16xf32>
      %217 = vector.extract_strided_slice %199 {offsets = [0, 32], sizes = [2, 16], strides = [1, 1]} : vector<2x48xf32> to vector<2x16xf32>
      %218 = arith.mulf %207, %217 : vector<2x16xf32>
      %219 = arith.addf %216, %218 : vector<2x16xf32>
      %220 = math.tanh %219 : vector<2x16xf32>
      %cst_68 = arith.constant 1.000000e+00 : f32
      %221 = vector.broadcast %cst_68 : f32 to vector<2x16xf32>
      %222 = arith.subf %221, %215 : vector<2x16xf32>
      %223 = arith.mulf %222, %220 : vector<2x16xf32>
      %224 = arith.mulf %215, %189 : vector<2x16xf32>
      %225 = arith.addf %223, %224 : vector<2x16xf32>
      %c0_69 = arith.constant 0 : index
      %226 = arith.index_cast %c5_i32 : i32 to index
      %c0_70 = arith.constant 0 : index
      %c0_71 = arith.constant 0 : index
      %227 = vector.load %arg5[%c0_69, %226, %c0_70, %c0_71] : memref<1x8x2x16xf32, #tpu.memory_space<vmem>>, vector<1x1x2x16xf32>
      %228 = vector.shape_cast %227 : vector<1x1x2x16xf32> to vector<2x16xf32>
      %229 = vector.shape_cast %225 : vector<2x16xf32> to vector<1x1x2x16xf32>
      tpu.vector_store %arg5[%c0_69, %226, %c0_70, %c0_71], %229 {strides = array<i32>} : memref<1x8x2x16xf32, #tpu.memory_space<vmem>>, vector<1x1x2x16xf32>,
      %c6_i32 = arith.constant 6 : i32
      %c0_72 = arith.constant 0 : index
      %230 = arith.index_cast %c6_i32 : i32 to index
      %c0_73 = arith.constant 0 : index
      %c0_74 = arith.constant 0 : index
      %231 = vector.load %arg2[%c0_72, %230, %c0_73, %c0_74] : memref<1x8x2x48xf32, #tpu.memory_space<vmem>>, vector<1x1x2x48xf32>
      %232 = vector.shape_cast %231 : vector<1x1x2x48xf32> to vector<2x48xf32>
      %cst_75 = arith.constant dense<0.000000e+00> : vector<2x48xf32>
      %233 = tpu.matmul %225, %10, %cst_75 {dimension_numbers = #tpu.dot_dimension_numbers<[1], [0], [0], [1], [0, 0, 1, 1], [], []>} : vector<2x16xf32>, vector<16x48xf32>, vector<2x48xf32> -> vector<2x48xf32>
      %234 = vector.broadcast %12 : vector<1x48xf32> to vector<2x48xf32>
      %235 = arith.addf %233, %234 : vector<2x48xf32>
      %236 = vector.extract_strided_slice %232 {offsets = [0, 0], sizes = [2, 16], strides = [1, 1]} : vector<2x48xf32> to vector<2x16xf32>
      %237 = vector.extract_strided_slice %235 {offsets = [0, 0], sizes = [2, 16], strides = [1, 1]} : vector<2x48xf32> to vector<2x16xf32>
      %238 = arith.addf %236, %237 : vector<2x16xf32>
      %239 = arith.negf %238 : vector<2x16xf32>
      %240 = math.exp %239 : vector<2x16xf32>
      %cst_76 = arith.constant 1.000000e+00 : f32
      %241 = vector.broadcast %cst_76 : f32 to vector<2x16xf32>
      %242 = arith.addf %241, %240 : vector<2x16xf32>
      %243 = arith.divf %241, %242 : vector<2x16xf32>
      %244 = vector.extract_strided_slice %232 {offsets = [0, 16], sizes = [2, 16], strides = [1, 1]} : vector<2x48xf32> to vector<2x16xf32>
      %245 = vector.extract_strided_slice %235 {offsets = [0, 16], sizes = [2, 16], strides = [1, 1]} : vector<2x48xf32> to vector<2x16xf32>
      %246 = arith.addf %244, %245 : vector<2x16xf32>
      %247 = arith.negf %246 : vector<2x16xf32>
      %248 = math.exp %247 : vector<2x16xf32>
      %cst_77 = arith.constant 1.000000e+00 : f32
      %249 = vector.broadcast %cst_77 : f32 to vector<2x16xf32>
      %250 = arith.addf %249, %248 : vector<2x16xf32>
      %251 = arith.divf %249, %250 : vector<2x16xf32>
      %252 = vector.extract_strided_slice %232 {offsets = [0, 32], sizes = [2, 16], strides = [1, 1]} : vector<2x48xf32> to vector<2x16xf32>
      %253 = vector.extract_strided_slice %235 {offsets = [0, 32], sizes = [2, 16], strides = [1, 1]} : vector<2x48xf32> to vector<2x16xf32>
      %254 = arith.mulf %243, %253 : vector<2x16xf32>
      %255 = arith.addf %252, %254 : vector<2x16xf32>
      %256 = math.tanh %255 : vector<2x16xf32>
      %cst_78 = arith.constant 1.000000e+00 : f32
      %257 = vector.broadcast %cst_78 : f32 to vector<2x16xf32>
      %258 = arith.subf %257, %251 : vector<2x16xf32>
      %259 = arith.mulf %258, %256 : vector<2x16xf32>
      %260 = arith.mulf %251, %225 : vector<2x16xf32>
      %261 = arith.addf %259, %260 : vector<2x16xf32>
      %c0_79 = arith.constant 0 : index
      %262 = arith.index_cast %c6_i32 : i32 to index
      %c0_80 = arith.constant 0 : index
      %c0_81 = arith.constant 0 : index
      %263 = vector.load %arg5[%c0_79, %262, %c0_80, %c0_81] : memref<1x8x2x16xf32, #tpu.memory_space<vmem>>, vector<1x1x2x16xf32>
      %264 = vector.shape_cast %263 : vector<1x1x2x16xf32> to vector<2x16xf32>
      %265 = vector.shape_cast %261 : vector<2x16xf32> to vector<1x1x2x16xf32>
      tpu.vector_store %arg5[%c0_79, %262, %c0_80, %c0_81], %265 {strides = array<i32>} : memref<1x8x2x16xf32, #tpu.memory_space<vmem>>, vector<1x1x2x16xf32>,
      %c7_i32 = arith.constant 7 : i32
      %c0_82 = arith.constant 0 : index
      %266 = arith.index_cast %c7_i32 : i32 to index
      %c0_83 = arith.constant 0 : index
      %c0_84 = arith.constant 0 : index
      %267 = vector.load %arg2[%c0_82, %266, %c0_83, %c0_84] : memref<1x8x2x48xf32, #tpu.memory_space<vmem>>, vector<1x1x2x48xf32>
      %268 = vector.shape_cast %267 : vector<1x1x2x48xf32> to vector<2x48xf32>
      %cst_85 = arith.constant dense<0.000000e+00> : vector<2x48xf32>
      %269 = tpu.matmul %261, %10, %cst_85 {dimension_numbers = #tpu.dot_dimension_numbers<[1], [0], [0], [1], [0, 0, 1, 1], [], []>} : vector<2x16xf32>, vector<16x48xf32>, vector<2x48xf32> -> vector<2x48xf32>
      %270 = vector.broadcast %12 : vector<1x48xf32> to vector<2x48xf32>
      %271 = arith.addf %269, %270 : vector<2x48xf32>
      %272 = vector.extract_strided_slice %268 {offsets = [0, 0], sizes = [2, 16], strides = [1, 1]} : vector<2x48xf32> to vector<2x16xf32>
      %273 = vector.extract_strided_slice %271 {offsets = [0, 0], sizes = [2, 16], strides = [1, 1]} : vector<2x48xf32> to vector<2x16xf32>
      %274 = arith.addf %272, %273 : vector<2x16xf32>
      %275 = arith.negf %274 : vector<2x16xf32>
      %276 = math.exp %275 : vector<2x16xf32>
      %cst_86 = arith.constant 1.000000e+00 : f32
      %277 = vector.broadcast %cst_86 : f32 to vector<2x16xf32>
      %278 = arith.addf %277, %276 : vector<2x16xf32>
      %279 = arith.divf %277, %278 : vector<2x16xf32>
      %280 = vector.extract_strided_slice %268 {offsets = [0, 16], sizes = [2, 16], strides = [1, 1]} : vector<2x48xf32> to vector<2x16xf32>
      %281 = vector.extract_strided_slice %271 {offsets = [0, 16], sizes = [2, 16], strides = [1, 1]} : vector<2x48xf32> to vector<2x16xf32>
      %282 = arith.addf %280, %281 : vector<2x16xf32>
      %283 = arith.negf %282 : vector<2x16xf32>
      %284 = math.exp %283 : vector<2x16xf32>
      %cst_87 = arith.constant 1.000000e+00 : f32
      %285 = vector.broadcast %cst_87 : f32 to vector<2x16xf32>
      %286 = arith.addf %285, %284 : vector<2x16xf32>
      %287 = arith.divf %285, %286 : vector<2x16xf32>
      %288 = vector.extract_strided_slice %268 {offsets = [0, 32], sizes = [2, 16], strides = [1, 1]} : vector<2x48xf32> to vector<2x16xf32>
      %289 = vector.extract_strided_slice %271 {offsets = [0, 32], sizes = [2, 16], strides = [1, 1]} : vector<2x48xf32> to vector<2x16xf32>
      %290 = arith.mulf %279, %289 : vector<2x16xf32>
      %291 = arith.addf %288, %290 : vector<2x16xf32>
      %292 = math.tanh %291 : vector<2x16xf32>
      %cst_88 = arith.constant 1.000000e+00 : f32
      %293 = vector.broadcast %cst_88 : f32 to vector<2x16xf32>
      %294 = arith.subf %293, %287 : vector<2x16xf32>
      %295 = arith.mulf %294, %292 : vector<2x16xf32>
      %296 = arith.mulf %287, %261 : vector<2x16xf32>
      %297 = arith.addf %295, %296 : vector<2x16xf32>
      %c0_89 = arith.constant 0 : index
      %298 = arith.index_cast %c7_i32 : i32 to index
      %c0_90 = arith.constant 0 : index
      %c0_91 = arith.constant 0 : index
      %299 = vector.load %arg5[%c0_89, %298, %c0_90, %c0_91] : memref<1x8x2x16xf32, #tpu.memory_space<vmem>>, vector<1x1x2x16xf32>
      %300 = vector.shape_cast %299 : vector<1x1x2x16xf32> to vector<2x16xf32>
      %301 = vector.shape_cast %297 : vector<2x16xf32> to vector<1x1x2x16xf32>
      tpu.vector_store %arg5[%c0_89, %298, %c0_90, %c0_91], %301 {strides = array<i32>} : memref<1x8x2x16xf32, #tpu.memory_space<vmem>>, vector<1x1x2x16xf32>,
      %c8_i32 = arith.constant 8 : i32
      %c0_92 = arith.constant 0 : index
      %c0_93 = arith.constant 0 : index
      %302 = vector.load %arg6[%c0_92, %c0_93] : memref<2x16xf32, #tpu.memory_space<vmem>>, vector<2x16xf32>
      tpu.vector_store %arg6[%c0_92, %c0_93], %297 {strides = array<i32>} : memref<2x16xf32, #tpu.memory_space<vmem>>, vector<2x16xf32>,
    } else {
    }
    %c1_i32 = arith.constant 1 : i32
    %6 = arith.cmpi eq, %arg0, %c1_i32 : i32
    %7 = arith.extui %6 : i1 to i32
    %c0_i32_3 = arith.constant 0 : i32
    %8 = arith.cmpi ne, %7, %c0_i32_3 : i32
    scf.if %8 {
      %c0 = arith.constant 0 : index
      %c0_4 = arith.constant 0 : index
      %c0_5 = arith.constant 0 : index
      %9 = vector.load %arg3[%c0, %c0_4, %c0_5] : memref<1x16x48xf32, #tpu.memory_space<vmem>>, vector<1x16x48xf32>
      %10 = vector.shape_cast %9 : vector<1x16x48xf32> to vector<16x48xf32>
      %c0_6 = arith.constant 0 : index
      %c0_7 = arith.constant 0 : index
      %c0_8 = arith.constant 0 : index
      %11 = vector.load %arg4[%c0_6, %c0_7, %c0_8] : memref<1x1x48xf32, #tpu.memory_space<vmem>>, vector<1x1x48xf32>
      %12 = vector.shape_cast %11 : vector<1x1x48xf32> to vector<1x48xf32>
      %c0_9 = arith.constant 0 : index
      %c0_10 = arith.constant 0 : index
      %13 = vector.load %arg6[%c0_9, %c0_10] : memref<2x16xf32, #tpu.memory_space<vmem>>, vector<2x16xf32>
      %c0_i32_11 = arith.constant 0 : i32
      %c7_i32 = arith.constant 7 : i32
      %14 = arith.subi %c7_i32, %c0_i32_11 : i32
      %c0_12 = arith.constant 0 : index
      %15 = arith.index_cast %14 : i32 to index
      %c0_13 = arith.constant 0 : index
      %c0_14 = arith.constant 0 : index
      %16 = vector.load %arg2[%c0_12, %15, %c0_13, %c0_14] : memref<1x8x2x48xf32, #tpu.memory_space<vmem>>, vector<1x1x2x48xf32>
      %17 = vector.shape_cast %16 : vector<1x1x2x48xf32> to vector<2x48xf32>
      %cst = arith.constant dense<0.000000e+00> : vector<2x48xf32>
      %18 = tpu.matmul %13, %10, %cst {dimension_numbers = #tpu.dot_dimension_numbers<[1], [0], [0], [1], [0, 0, 1, 1], [], []>} : vector<2x16xf32>, vector<16x48xf32>, vector<2x48xf32> -> vector<2x48xf32>
      %19 = vector.broadcast %12 : vector<1x48xf32> to vector<2x48xf32>
      %20 = arith.addf %18, %19 : vector<2x48xf32>
      %21 = vector.extract_strided_slice %17 {offsets = [0, 0], sizes = [2, 16], strides = [1, 1]} : vector<2x48xf32> to vector<2x16xf32>
      %22 = vector.extract_strided_slice %20 {offsets = [0, 0], sizes = [2, 16], strides = [1, 1]} : vector<2x48xf32> to vector<2x16xf32>
      %23 = arith.addf %21, %22 : vector<2x16xf32>
      %24 = arith.negf %23 : vector<2x16xf32>
      %25 = math.exp %24 : vector<2x16xf32>
      %cst_15 = arith.constant 1.000000e+00 : f32
      %26 = vector.broadcast %cst_15 : f32 to vector<2x16xf32>
      %27 = arith.addf %26, %25 : vector<2x16xf32>
      %28 = arith.divf %26, %27 : vector<2x16xf32>
      %29 = vector.extract_strided_slice %17 {offsets = [0, 16], sizes = [2, 16], strides = [1, 1]} : vector<2x48xf32> to vector<2x16xf32>
      %30 = vector.extract_strided_slice %20 {offsets = [0, 16], sizes = [2, 16], strides = [1, 1]} : vector<2x48xf32> to vector<2x16xf32>
      %31 = arith.addf %29, %30 : vector<2x16xf32>
      %32 = arith.negf %31 : vector<2x16xf32>
      %33 = math.exp %32 : vector<2x16xf32>
      %cst_16 = arith.constant 1.000000e+00 : f32
      %34 = vector.broadcast %cst_16 : f32 to vector<2x16xf32>
      %35 = arith.addf %34, %33 : vector<2x16xf32>
      %36 = arith.divf %34, %35 : vector<2x16xf32>
      %37 = vector.extract_strided_slice %17 {offsets = [0, 32], sizes = [2, 16], strides = [1, 1]} : vector<2x48xf32> to vector<2x16xf32>
      %38 = vector.extract_strided_slice %20 {offsets = [0, 32], sizes = [2, 16], strides = [1, 1]} : vector<2x48xf32> to vector<2x16xf32>
      %39 = arith.mulf %28, %38 : vector<2x16xf32>
      %40 = arith.addf %37, %39 : vector<2x16xf32>
      %41 = math.tanh %40 : vector<2x16xf32>
      %cst_17 = arith.constant 1.000000e+00 : f32
      %42 = vector.broadcast %cst_17 : f32 to vector<2x16xf32>
      %43 = arith.subf %42, %36 : vector<2x16xf32>
      %44 = arith.mulf %43, %41 : vector<2x16xf32>
      %45 = arith.mulf %36, %13 : vector<2x16xf32>
      %46 = arith.addf %44, %45 : vector<2x16xf32>
      %c0_18 = arith.constant 0 : index
      %47 = arith.index_cast %14 : i32 to index
      %c0_19 = arith.constant 0 : index
      %c0_20 = arith.constant 0 : index
      %48 = vector.load %arg5[%c0_18, %47, %c0_19, %c0_20] : memref<1x8x2x16xf32, #tpu.memory_space<vmem>>, vector<1x1x2x16xf32>
      %49 = vector.shape_cast %48 : vector<1x1x2x16xf32> to vector<2x16xf32>
      %50 = vector.shape_cast %46 : vector<2x16xf32> to vector<1x1x2x16xf32>
      tpu.vector_store %arg5[%c0_18, %47, %c0_19, %c0_20], %50 {strides = array<i32>} : memref<1x8x2x16xf32, #tpu.memory_space<vmem>>, vector<1x1x2x16xf32>,
      %c1_i32_21 = arith.constant 1 : i32
      %c7_i32_22 = arith.constant 7 : i32
      %51 = arith.subi %c7_i32_22, %c1_i32_21 : i32
      %c0_23 = arith.constant 0 : index
      %52 = arith.index_cast %51 : i32 to index
      %c0_24 = arith.constant 0 : index
      %c0_25 = arith.constant 0 : index
      %53 = vector.load %arg2[%c0_23, %52, %c0_24, %c0_25] : memref<1x8x2x48xf32, #tpu.memory_space<vmem>>, vector<1x1x2x48xf32>
      %54 = vector.shape_cast %53 : vector<1x1x2x48xf32> to vector<2x48xf32>
      %cst_26 = arith.constant dense<0.000000e+00> : vector<2x48xf32>
      %55 = tpu.matmul %46, %10, %cst_26 {dimension_numbers = #tpu.dot_dimension_numbers<[1], [0], [0], [1], [0, 0, 1, 1], [], []>} : vector<2x16xf32>, vector<16x48xf32>, vector<2x48xf32> -> vector<2x48xf32>
      %56 = vector.broadcast %12 : vector<1x48xf32> to vector<2x48xf32>
      %57 = arith.addf %55, %56 : vector<2x48xf32>
      %58 = vector.extract_strided_slice %54 {offsets = [0, 0], sizes = [2, 16], strides = [1, 1]} : vector<2x48xf32> to vector<2x16xf32>
      %59 = vector.extract_strided_slice %57 {offsets = [0, 0], sizes = [2, 16], strides = [1, 1]} : vector<2x48xf32> to vector<2x16xf32>
      %60 = arith.addf %58, %59 : vector<2x16xf32>
      %61 = arith.negf %60 : vector<2x16xf32>
      %62 = math.exp %61 : vector<2x16xf32>
      %cst_27 = arith.constant 1.000000e+00 : f32
      %63 = vector.broadcast %cst_27 : f32 to vector<2x16xf32>
      %64 = arith.addf %63, %62 : vector<2x16xf32>
      %65 = arith.divf %63, %64 : vector<2x16xf32>
      %66 = vector.extract_strided_slice %54 {offsets = [0, 16], sizes = [2, 16], strides = [1, 1]} : vector<2x48xf32> to vector<2x16xf32>
      %67 = vector.extract_strided_slice %57 {offsets = [0, 16], sizes = [2, 16], strides = [1, 1]} : vector<2x48xf32> to vector<2x16xf32>
      %68 = arith.addf %66, %67 : vector<2x16xf32>
      %69 = arith.negf %68 : vector<2x16xf32>
      %70 = math.exp %69 : vector<2x16xf32>
      %cst_28 = arith.constant 1.000000e+00 : f32
      %71 = vector.broadcast %cst_28 : f32 to vector<2x16xf32>
      %72 = arith.addf %71, %70 : vector<2x16xf32>
      %73 = arith.divf %71, %72 : vector<2x16xf32>
      %74 = vector.extract_strided_slice %54 {offsets = [0, 32], sizes = [2, 16], strides = [1, 1]} : vector<2x48xf32> to vector<2x16xf32>
      %75 = vector.extract_strided_slice %57 {offsets = [0, 32], sizes = [2, 16], strides = [1, 1]} : vector<2x48xf32> to vector<2x16xf32>
      %76 = arith.mulf %65, %75 : vector<2x16xf32>
      %77 = arith.addf %74, %76 : vector<2x16xf32>
      %78 = math.tanh %77 : vector<2x16xf32>
      %cst_29 = arith.constant 1.000000e+00 : f32
      %79 = vector.broadcast %cst_29 : f32 to vector<2x16xf32>
      %80 = arith.subf %79, %73 : vector<2x16xf32>
      %81 = arith.mulf %80, %78 : vector<2x16xf32>
      %82 = arith.mulf %73, %46 : vector<2x16xf32>
      %83 = arith.addf %81, %82 : vector<2x16xf32>
      %c0_30 = arith.constant 0 : index
      %84 = arith.index_cast %51 : i32 to index
      %c0_31 = arith.constant 0 : index
      %c0_32 = arith.constant 0 : index
      %85 = vector.load %arg5[%c0_30, %84, %c0_31, %c0_32] : memref<1x8x2x16xf32, #tpu.memory_space<vmem>>, vector<1x1x2x16xf32>
      %86 = vector.shape_cast %85 : vector<1x1x2x16xf32> to vector<2x16xf32>
      %87 = vector.shape_cast %83 : vector<2x16xf32> to vector<1x1x2x16xf32>
      tpu.vector_store %arg5[%c0_30, %84, %c0_31, %c0_32], %87 {strides = array<i32>} : memref<1x8x2x16xf32, #tpu.memory_space<vmem>>, vector<1x1x2x16xf32>,
      %c2_i32 = arith.constant 2 : i32
      %c7_i32_33 = arith.constant 7 : i32
      %88 = arith.subi %c7_i32_33, %c2_i32 : i32
      %c0_34 = arith.constant 0 : index
      %89 = arith.index_cast %88 : i32 to index
      %c0_35 = arith.constant 0 : index
      %c0_36 = arith.constant 0 : index
      %90 = vector.load %arg2[%c0_34, %89, %c0_35, %c0_36] : memref<1x8x2x48xf32, #tpu.memory_space<vmem>>, vector<1x1x2x48xf32>
      %91 = vector.shape_cast %90 : vector<1x1x2x48xf32> to vector<2x48xf32>
      %cst_37 = arith.constant dense<0.000000e+00> : vector<2x48xf32>
      %92 = tpu.matmul %83, %10, %cst_37 {dimension_numbers = #tpu.dot_dimension_numbers<[1], [0], [0], [1], [0, 0, 1, 1], [], []>} : vector<2x16xf32>, vector<16x48xf32>, vector<2x48xf32> -> vector<2x48xf32>
      %93 = vector.broadcast %12 : vector<1x48xf32> to vector<2x48xf32>
      %94 = arith.addf %92, %93 : vector<2x48xf32>
      %95 = vector.extract_strided_slice %91 {offsets = [0, 0], sizes = [2, 16], strides = [1, 1]} : vector<2x48xf32> to vector<2x16xf32>
      %96 = vector.extract_strided_slice %94 {offsets = [0, 0], sizes = [2, 16], strides = [1, 1]} : vector<2x48xf32> to vector<2x16xf32>
      %97 = arith.addf %95, %96 : vector<2x16xf32>
      %98 = arith.negf %97 : vector<2x16xf32>
      %99 = math.exp %98 : vector<2x16xf32>
      %cst_38 = arith.constant 1.000000e+00 : f32
      %100 = vector.broadcast %cst_38 : f32 to vector<2x16xf32>
      %101 = arith.addf %100, %99 : vector<2x16xf32>
      %102 = arith.divf %100, %101 : vector<2x16xf32>
      %103 = vector.extract_strided_slice %91 {offsets = [0, 16], sizes = [2, 16], strides = [1, 1]} : vector<2x48xf32> to vector<2x16xf32>
      %104 = vector.extract_strided_slice %94 {offsets = [0, 16], sizes = [2, 16], strides = [1, 1]} : vector<2x48xf32> to vector<2x16xf32>
      %105 = arith.addf %103, %104 : vector<2x16xf32>
      %106 = arith.negf %105 : vector<2x16xf32>
      %107 = math.exp %106 : vector<2x16xf32>
      %cst_39 = arith.constant 1.000000e+00 : f32
      %108 = vector.broadcast %cst_39 : f32 to vector<2x16xf32>
      %109 = arith.addf %108, %107 : vector<2x16xf32>
      %110 = arith.divf %108, %109 : vector<2x16xf32>
      %111 = vector.extract_strided_slice %91 {offsets = [0, 32], sizes = [2, 16], strides = [1, 1]} : vector<2x48xf32> to vector<2x16xf32>
      %112 = vector.extract_strided_slice %94 {offsets = [0, 32], sizes = [2, 16], strides = [1, 1]} : vector<2x48xf32> to vector<2x16xf32>
      %113 = arith.mulf %102, %112 : vector<2x16xf32>
      %114 = arith.addf %111, %113 : vector<2x16xf32>
      %115 = math.tanh %114 : vector<2x16xf32>
      %cst_40 = arith.constant 1.000000e+00 : f32
      %116 = vector.broadcast %cst_40 : f32 to vector<2x16xf32>
      %117 = arith.subf %116, %110 : vector<2x16xf32>
      %118 = arith.mulf %117, %115 : vector<2x16xf32>
      %119 = arith.mulf %110, %83 : vector<2x16xf32>
      %120 = arith.addf %118, %119 : vector<2x16xf32>
      %c0_41 = arith.constant 0 : index
      %121 = arith.index_cast %88 : i32 to index
      %c0_42 = arith.constant 0 : index
      %c0_43 = arith.constant 0 : index
      %122 = vector.load %arg5[%c0_41, %121, %c0_42, %c0_43] : memref<1x8x2x16xf32, #tpu.memory_space<vmem>>, vector<1x1x2x16xf32>
      %123 = vector.shape_cast %122 : vector<1x1x2x16xf32> to vector<2x16xf32>
      %124 = vector.shape_cast %120 : vector<2x16xf32> to vector<1x1x2x16xf32>
      tpu.vector_store %arg5[%c0_41, %121, %c0_42, %c0_43], %124 {strides = array<i32>} : memref<1x8x2x16xf32, #tpu.memory_space<vmem>>, vector<1x1x2x16xf32>,
      %c3_i32 = arith.constant 3 : i32
      %c7_i32_44 = arith.constant 7 : i32
      %125 = arith.subi %c7_i32_44, %c3_i32 : i32
      %c0_45 = arith.constant 0 : index
      %126 = arith.index_cast %125 : i32 to index
      %c0_46 = arith.constant 0 : index
      %c0_47 = arith.constant 0 : index
      %127 = vector.load %arg2[%c0_45, %126, %c0_46, %c0_47] : memref<1x8x2x48xf32, #tpu.memory_space<vmem>>, vector<1x1x2x48xf32>
      %128 = vector.shape_cast %127 : vector<1x1x2x48xf32> to vector<2x48xf32>
      %cst_48 = arith.constant dense<0.000000e+00> : vector<2x48xf32>
      %129 = tpu.matmul %120, %10, %cst_48 {dimension_numbers = #tpu.dot_dimension_numbers<[1], [0], [0], [1], [0, 0, 1, 1], [], []>} : vector<2x16xf32>, vector<16x48xf32>, vector<2x48xf32> -> vector<2x48xf32>
      %130 = vector.broadcast %12 : vector<1x48xf32> to vector<2x48xf32>
      %131 = arith.addf %129, %130 : vector<2x48xf32>
      %132 = vector.extract_strided_slice %128 {offsets = [0, 0], sizes = [2, 16], strides = [1, 1]} : vector<2x48xf32> to vector<2x16xf32>
      %133 = vector.extract_strided_slice %131 {offsets = [0, 0], sizes = [2, 16], strides = [1, 1]} : vector<2x48xf32> to vector<2x16xf32>
      %134 = arith.addf %132, %133 : vector<2x16xf32>
      %135 = arith.negf %134 : vector<2x16xf32>
      %136 = math.exp %135 : vector<2x16xf32>
      %cst_49 = arith.constant 1.000000e+00 : f32
      %137 = vector.broadcast %cst_49 : f32 to vector<2x16xf32>
      %138 = arith.addf %137, %136 : vector<2x16xf32>
      %139 = arith.divf %137, %138 : vector<2x16xf32>
      %140 = vector.extract_strided_slice %128 {offsets = [0, 16], sizes = [2, 16], strides = [1, 1]} : vector<2x48xf32> to vector<2x16xf32>
      %141 = vector.extract_strided_slice %131 {offsets = [0, 16], sizes = [2, 16], strides = [1, 1]} : vector<2x48xf32> to vector<2x16xf32>
      %142 = arith.addf %140, %141 : vector<2x16xf32>
      %143 = arith.negf %142 : vector<2x16xf32>
      %144 = math.exp %143 : vector<2x16xf32>
      %cst_50 = arith.constant 1.000000e+00 : f32
      %145 = vector.broadcast %cst_50 : f32 to vector<2x16xf32>
      %146 = arith.addf %145, %144 : vector<2x16xf32>
      %147 = arith.divf %145, %146 : vector<2x16xf32>
      %148 = vector.extract_strided_slice %128 {offsets = [0, 32], sizes = [2, 16], strides = [1, 1]} : vector<2x48xf32> to vector<2x16xf32>
      %149 = vector.extract_strided_slice %131 {offsets = [0, 32], sizes = [2, 16], strides = [1, 1]} : vector<2x48xf32> to vector<2x16xf32>
      %150 = arith.mulf %139, %149 : vector<2x16xf32>
      %151 = arith.addf %148, %150 : vector<2x16xf32>
      %152 = math.tanh %151 : vector<2x16xf32>
      %cst_51 = arith.constant 1.000000e+00 : f32
      %153 = vector.broadcast %cst_51 : f32 to vector<2x16xf32>
      %154 = arith.subf %153, %147 : vector<2x16xf32>
      %155 = arith.mulf %154, %152 : vector<2x16xf32>
      %156 = arith.mulf %147, %120 : vector<2x16xf32>
      %157 = arith.addf %155, %156 : vector<2x16xf32>
      %c0_52 = arith.constant 0 : index
      %158 = arith.index_cast %125 : i32 to index
      %c0_53 = arith.constant 0 : index
      %c0_54 = arith.constant 0 : index
      %159 = vector.load %arg5[%c0_52, %158, %c0_53, %c0_54] : memref<1x8x2x16xf32, #tpu.memory_space<vmem>>, vector<1x1x2x16xf32>
      %160 = vector.shape_cast %159 : vector<1x1x2x16xf32> to vector<2x16xf32>
      %161 = vector.shape_cast %157 : vector<2x16xf32> to vector<1x1x2x16xf32>
      tpu.vector_store %arg5[%c0_52, %158, %c0_53, %c0_54], %161 {strides = array<i32>} : memref<1x8x2x16xf32, #tpu.memory_space<vmem>>, vector<1x1x2x16xf32>,
      %c4_i32 = arith.constant 4 : i32
      %c7_i32_55 = arith.constant 7 : i32
      %162 = arith.subi %c7_i32_55, %c4_i32 : i32
      %c0_56 = arith.constant 0 : index
      %163 = arith.index_cast %162 : i32 to index
      %c0_57 = arith.constant 0 : index
      %c0_58 = arith.constant 0 : index
      %164 = vector.load %arg2[%c0_56, %163, %c0_57, %c0_58] : memref<1x8x2x48xf32, #tpu.memory_space<vmem>>, vector<1x1x2x48xf32>
      %165 = vector.shape_cast %164 : vector<1x1x2x48xf32> to vector<2x48xf32>
      %cst_59 = arith.constant dense<0.000000e+00> : vector<2x48xf32>
      %166 = tpu.matmul %157, %10, %cst_59 {dimension_numbers = #tpu.dot_dimension_numbers<[1], [0], [0], [1], [0, 0, 1, 1], [], []>} : vector<2x16xf32>, vector<16x48xf32>, vector<2x48xf32> -> vector<2x48xf32>
      %167 = vector.broadcast %12 : vector<1x48xf32> to vector<2x48xf32>
      %168 = arith.addf %166, %167 : vector<2x48xf32>
      %169 = vector.extract_strided_slice %165 {offsets = [0, 0], sizes = [2, 16], strides = [1, 1]} : vector<2x48xf32> to vector<2x16xf32>
      %170 = vector.extract_strided_slice %168 {offsets = [0, 0], sizes = [2, 16], strides = [1, 1]} : vector<2x48xf32> to vector<2x16xf32>
      %171 = arith.addf %169, %170 : vector<2x16xf32>
      %172 = arith.negf %171 : vector<2x16xf32>
      %173 = math.exp %172 : vector<2x16xf32>
      %cst_60 = arith.constant 1.000000e+00 : f32
      %174 = vector.broadcast %cst_60 : f32 to vector<2x16xf32>
      %175 = arith.addf %174, %173 : vector<2x16xf32>
      %176 = arith.divf %174, %175 : vector<2x16xf32>
      %177 = vector.extract_strided_slice %165 {offsets = [0, 16], sizes = [2, 16], strides = [1, 1]} : vector<2x48xf32> to vector<2x16xf32>
      %178 = vector.extract_strided_slice %168 {offsets = [0, 16], sizes = [2, 16], strides = [1, 1]} : vector<2x48xf32> to vector<2x16xf32>
      %179 = arith.addf %177, %178 : vector<2x16xf32>
      %180 = arith.negf %179 : vector<2x16xf32>
      %181 = math.exp %180 : vector<2x16xf32>
      %cst_61 = arith.constant 1.000000e+00 : f32
      %182 = vector.broadcast %cst_61 : f32 to vector<2x16xf32>
      %183 = arith.addf %182, %181 : vector<2x16xf32>
      %184 = arith.divf %182, %183 : vector<2x16xf32>
      %185 = vector.extract_strided_slice %165 {offsets = [0, 32], sizes = [2, 16], strides = [1, 1]} : vector<2x48xf32> to vector<2x16xf32>
      %186 = vector.extract_strided_slice %168 {offsets = [0, 32], sizes = [2, 16], strides = [1, 1]} : vector<2x48xf32> to vector<2x16xf32>
      %187 = arith.mulf %176, %186 : vector<2x16xf32>
      %188 = arith.addf %185, %187 : vector<2x16xf32>
      %189 = math.tanh %188 : vector<2x16xf32>
      %cst_62 = arith.constant 1.000000e+00 : f32
      %190 = vector.broadcast %cst_62 : f32 to vector<2x16xf32>
      %191 = arith.subf %190, %184 : vector<2x16xf32>
      %192 = arith.mulf %191, %189 : vector<2x16xf32>
      %193 = arith.mulf %184, %157 : vector<2x16xf32>
      %194 = arith.addf %192, %193 : vector<2x16xf32>
      %c0_63 = arith.constant 0 : index
      %195 = arith.index_cast %162 : i32 to index
      %c0_64 = arith.constant 0 : index
      %c0_65 = arith.constant 0 : index
      %196 = vector.load %arg5[%c0_63, %195, %c0_64, %c0_65] : memref<1x8x2x16xf32, #tpu.memory_space<vmem>>, vector<1x1x2x16xf32>
      %197 = vector.shape_cast %196 : vector<1x1x2x16xf32> to vector<2x16xf32>
      %198 = vector.shape_cast %194 : vector<2x16xf32> to vector<1x1x2x16xf32>
      tpu.vector_store %arg5[%c0_63, %195, %c0_64, %c0_65], %198 {strides = array<i32>} : memref<1x8x2x16xf32, #tpu.memory_space<vmem>>, vector<1x1x2x16xf32>,
      %c5_i32 = arith.constant 5 : i32
      %c7_i32_66 = arith.constant 7 : i32
      %199 = arith.subi %c7_i32_66, %c5_i32 : i32
      %c0_67 = arith.constant 0 : index
      %200 = arith.index_cast %199 : i32 to index
      %c0_68 = arith.constant 0 : index
      %c0_69 = arith.constant 0 : index
      %201 = vector.load %arg2[%c0_67, %200, %c0_68, %c0_69] : memref<1x8x2x48xf32, #tpu.memory_space<vmem>>, vector<1x1x2x48xf32>
      %202 = vector.shape_cast %201 : vector<1x1x2x48xf32> to vector<2x48xf32>
      %cst_70 = arith.constant dense<0.000000e+00> : vector<2x48xf32>
      %203 = tpu.matmul %194, %10, %cst_70 {dimension_numbers = #tpu.dot_dimension_numbers<[1], [0], [0], [1], [0, 0, 1, 1], [], []>} : vector<2x16xf32>, vector<16x48xf32>, vector<2x48xf32> -> vector<2x48xf32>
      %204 = vector.broadcast %12 : vector<1x48xf32> to vector<2x48xf32>
      %205 = arith.addf %203, %204 : vector<2x48xf32>
      %206 = vector.extract_strided_slice %202 {offsets = [0, 0], sizes = [2, 16], strides = [1, 1]} : vector<2x48xf32> to vector<2x16xf32>
      %207 = vector.extract_strided_slice %205 {offsets = [0, 0], sizes = [2, 16], strides = [1, 1]} : vector<2x48xf32> to vector<2x16xf32>
      %208 = arith.addf %206, %207 : vector<2x16xf32>
      %209 = arith.negf %208 : vector<2x16xf32>
      %210 = math.exp %209 : vector<2x16xf32>
      %cst_71 = arith.constant 1.000000e+00 : f32
      %211 = vector.broadcast %cst_71 : f32 to vector<2x16xf32>
      %212 = arith.addf %211, %210 : vector<2x16xf32>
      %213 = arith.divf %211, %212 : vector<2x16xf32>
      %214 = vector.extract_strided_slice %202 {offsets = [0, 16], sizes = [2, 16], strides = [1, 1]} : vector<2x48xf32> to vector<2x16xf32>
      %215 = vector.extract_strided_slice %205 {offsets = [0, 16], sizes = [2, 16], strides = [1, 1]} : vector<2x48xf32> to vector<2x16xf32>
      %216 = arith.addf %214, %215 : vector<2x16xf32>
      %217 = arith.negf %216 : vector<2x16xf32>
      %218 = math.exp %217 : vector<2x16xf32>
      %cst_72 = arith.constant 1.000000e+00 : f32
      %219 = vector.broadcast %cst_72 : f32 to vector<2x16xf32>
      %220 = arith.addf %219, %218 : vector<2x16xf32>
      %221 = arith.divf %219, %220 : vector<2x16xf32>
      %222 = vector.extract_strided_slice %202 {offsets = [0, 32], sizes = [2, 16], strides = [1, 1]} : vector<2x48xf32> to vector<2x16xf32>
      %223 = vector.extract_strided_slice %205 {offsets = [0, 32], sizes = [2, 16], strides = [1, 1]} : vector<2x48xf32> to vector<2x16xf32>
      %224 = arith.mulf %213, %223 : vector<2x16xf32>
      %225 = arith.addf %222, %224 : vector<2x16xf32>
      %226 = math.tanh %225 : vector<2x16xf32>
      %cst_73 = arith.constant 1.000000e+00 : f32
      %227 = vector.broadcast %cst_73 : f32 to vector<2x16xf32>
      %228 = arith.subf %227, %221 : vector<2x16xf32>
      %229 = arith.mulf %228, %226 : vector<2x16xf32>
      %230 = arith.mulf %221, %194 : vector<2x16xf32>
      %231 = arith.addf %229, %230 : vector<2x16xf32>
      %c0_74 = arith.constant 0 : index
      %232 = arith.index_cast %199 : i32 to index
      %c0_75 = arith.constant 0 : index
      %c0_76 = arith.constant 0 : index
      %233 = vector.load %arg5[%c0_74, %232, %c0_75, %c0_76] : memref<1x8x2x16xf32, #tpu.memory_space<vmem>>, vector<1x1x2x16xf32>
      %234 = vector.shape_cast %233 : vector<1x1x2x16xf32> to vector<2x16xf32>
      %235 = vector.shape_cast %231 : vector<2x16xf32> to vector<1x1x2x16xf32>
      tpu.vector_store %arg5[%c0_74, %232, %c0_75, %c0_76], %235 {strides = array<i32>} : memref<1x8x2x16xf32, #tpu.memory_space<vmem>>, vector<1x1x2x16xf32>,
      %c6_i32 = arith.constant 6 : i32
      %c7_i32_77 = arith.constant 7 : i32
      %236 = arith.subi %c7_i32_77, %c6_i32 : i32
      %c0_78 = arith.constant 0 : index
      %237 = arith.index_cast %236 : i32 to index
      %c0_79 = arith.constant 0 : index
      %c0_80 = arith.constant 0 : index
      %238 = vector.load %arg2[%c0_78, %237, %c0_79, %c0_80] : memref<1x8x2x48xf32, #tpu.memory_space<vmem>>, vector<1x1x2x48xf32>
      %239 = vector.shape_cast %238 : vector<1x1x2x48xf32> to vector<2x48xf32>
      %cst_81 = arith.constant dense<0.000000e+00> : vector<2x48xf32>
      %240 = tpu.matmul %231, %10, %cst_81 {dimension_numbers = #tpu.dot_dimension_numbers<[1], [0], [0], [1], [0, 0, 1, 1], [], []>} : vector<2x16xf32>, vector<16x48xf32>, vector<2x48xf32> -> vector<2x48xf32>
      %241 = vector.broadcast %12 : vector<1x48xf32> to vector<2x48xf32>
      %242 = arith.addf %240, %241 : vector<2x48xf32>
      %243 = vector.extract_strided_slice %239 {offsets = [0, 0], sizes = [2, 16], strides = [1, 1]} : vector<2x48xf32> to vector<2x16xf32>
      %244 = vector.extract_strided_slice %242 {offsets = [0, 0], sizes = [2, 16], strides = [1, 1]} : vector<2x48xf32> to vector<2x16xf32>
      %245 = arith.addf %243, %244 : vector<2x16xf32>
      %246 = arith.negf %245 : vector<2x16xf32>
      %247 = math.exp %246 : vector<2x16xf32>
      %cst_82 = arith.constant 1.000000e+00 : f32
      %248 = vector.broadcast %cst_82 : f32 to vector<2x16xf32>
      %249 = arith.addf %248, %247 : vector<2x16xf32>
      %250 = arith.divf %248, %249 : vector<2x16xf32>
      %251 = vector.extract_strided_slice %239 {offsets = [0, 16], sizes = [2, 16], strides = [1, 1]} : vector<2x48xf32> to vector<2x16xf32>
      %252 = vector.extract_strided_slice %242 {offsets = [0, 16], sizes = [2, 16], strides = [1, 1]} : vector<2x48xf32> to vector<2x16xf32>
      %253 = arith.addf %251, %252 : vector<2x16xf32>
      %254 = arith.negf %253 : vector<2x16xf32>
      %255 = math.exp %254 : vector<2x16xf32>
      %cst_83 = arith.constant 1.000000e+00 : f32
      %256 = vector.broadcast %cst_83 : f32 to vector<2x16xf32>
      %257 = arith.addf %256, %255 : vector<2x16xf32>
      %258 = arith.divf %256, %257 : vector<2x16xf32>
      %259 = vector.extract_strided_slice %239 {offsets = [0, 32], sizes = [2, 16], strides = [1, 1]} : vector<2x48xf32> to vector<2x16xf32>
      %260 = vector.extract_strided_slice %242 {offsets = [0, 32], sizes = [2, 16], strides = [1, 1]} : vector<2x48xf32> to vector<2x16xf32>
      %261 = arith.mulf %250, %260 : vector<2x16xf32>
      %262 = arith.addf %259, %261 : vector<2x16xf32>
      %263 = math.tanh %262 : vector<2x16xf32>
      %cst_84 = arith.constant 1.000000e+00 : f32
      %264 = vector.broadcast %cst_84 : f32 to vector<2x16xf32>
      %265 = arith.subf %264, %258 : vector<2x16xf32>
      %266 = arith.mulf %265, %263 : vector<2x16xf32>
      %267 = arith.mulf %258, %231 : vector<2x16xf32>
      %268 = arith.addf %266, %267 : vector<2x16xf32>
      %c0_85 = arith.constant 0 : index
      %269 = arith.index_cast %236 : i32 to index
      %c0_86 = arith.constant 0 : index
      %c0_87 = arith.constant 0 : index
      %270 = vector.load %arg5[%c0_85, %269, %c0_86, %c0_87] : memref<1x8x2x16xf32, #tpu.memory_space<vmem>>, vector<1x1x2x16xf32>
      %271 = vector.shape_cast %270 : vector<1x1x2x16xf32> to vector<2x16xf32>
      %272 = vector.shape_cast %268 : vector<2x16xf32> to vector<1x1x2x16xf32>
      tpu.vector_store %arg5[%c0_85, %269, %c0_86, %c0_87], %272 {strides = array<i32>} : memref<1x8x2x16xf32, #tpu.memory_space<vmem>>, vector<1x1x2x16xf32>,
      %c7_i32_88 = arith.constant 7 : i32
      %c7_i32_89 = arith.constant 7 : i32
      %273 = arith.subi %c7_i32_89, %c7_i32_88 : i32
      %c0_90 = arith.constant 0 : index
      %274 = arith.index_cast %273 : i32 to index
      %c0_91 = arith.constant 0 : index
      %c0_92 = arith.constant 0 : index
      %275 = vector.load %arg2[%c0_90, %274, %c0_91, %c0_92] : memref<1x8x2x48xf32, #tpu.memory_space<vmem>>, vector<1x1x2x48xf32>
      %276 = vector.shape_cast %275 : vector<1x1x2x48xf32> to vector<2x48xf32>
      %cst_93 = arith.constant dense<0.000000e+00> : vector<2x48xf32>
      %277 = tpu.matmul %268, %10, %cst_93 {dimension_numbers = #tpu.dot_dimension_numbers<[1], [0], [0], [1], [0, 0, 1, 1], [], []>} : vector<2x16xf32>, vector<16x48xf32>, vector<2x48xf32> -> vector<2x48xf32>
      %278 = vector.broadcast %12 : vector<1x48xf32> to vector<2x48xf32>
      %279 = arith.addf %277, %278 : vector<2x48xf32>
      %280 = vector.extract_strided_slice %276 {offsets = [0, 0], sizes = [2, 16], strides = [1, 1]} : vector<2x48xf32> to vector<2x16xf32>
      %281 = vector.extract_strided_slice %279 {offsets = [0, 0], sizes = [2, 16], strides = [1, 1]} : vector<2x48xf32> to vector<2x16xf32>
      %282 = arith.addf %280, %281 : vector<2x16xf32>
      %283 = arith.negf %282 : vector<2x16xf32>
      %284 = math.exp %283 : vector<2x16xf32>
      %cst_94 = arith.constant 1.000000e+00 : f32
      %285 = vector.broadcast %cst_94 : f32 to vector<2x16xf32>
      %286 = arith.addf %285, %284 : vector<2x16xf32>
      %287 = arith.divf %285, %286 : vector<2x16xf32>
      %288 = vector.extract_strided_slice %276 {offsets = [0, 16], sizes = [2, 16], strides = [1, 1]} : vector<2x48xf32> to vector<2x16xf32>
      %289 = vector.extract_strided_slice %279 {offsets = [0, 16], sizes = [2, 16], strides = [1, 1]} : vector<2x48xf32> to vector<2x16xf32>
      %290 = arith.addf %288, %289 : vector<2x16xf32>
      %291 = arith.negf %290 : vector<2x16xf32>
      %292 = math.exp %291 : vector<2x16xf32>
      %cst_95 = arith.constant 1.000000e+00 : f32
      %293 = vector.broadcast %cst_95 : f32 to vector<2x16xf32>
      %294 = arith.addf %293, %292 : vector<2x16xf32>
      %295 = arith.divf %293, %294 : vector<2x16xf32>
      %296 = vector.extract_strided_slice %276 {offsets = [0, 32], sizes = [2, 16], strides = [1, 1]} : vector<2x48xf32> to vector<2x16xf32>
      %297 = vector.extract_strided_slice %279 {offsets = [0, 32], sizes = [2, 16], strides = [1, 1]} : vector<2x48xf32> to vector<2x16xf32>
      %298 = arith.mulf %287, %297 : vector<2x16xf32>
      %299 = arith.addf %296, %298 : vector<2x16xf32>
      %300 = math.tanh %299 : vector<2x16xf32>
      %cst_96 = arith.constant 1.000000e+00 : f32
      %301 = vector.broadcast %cst_96 : f32 to vector<2x16xf32>
      %302 = arith.subf %301, %295 : vector<2x16xf32>
      %303 = arith.mulf %302, %300 : vector<2x16xf32>
      %304 = arith.mulf %295, %268 : vector<2x16xf32>
      %305 = arith.addf %303, %304 : vector<2x16xf32>
      %c0_97 = arith.constant 0 : index
      %306 = arith.index_cast %273 : i32 to index
      %c0_98 = arith.constant 0 : index
      %c0_99 = arith.constant 0 : index
      %307 = vector.load %arg5[%c0_97, %306, %c0_98, %c0_99] : memref<1x8x2x16xf32, #tpu.memory_space<vmem>>, vector<1x1x2x16xf32>
      %308 = vector.shape_cast %307 : vector<1x1x2x16xf32> to vector<2x16xf32>
      %309 = vector.shape_cast %305 : vector<2x16xf32> to vector<1x1x2x16xf32>
      tpu.vector_store %arg5[%c0_97, %306, %c0_98, %c0_99], %309 {strides = array<i32>} : memref<1x8x2x16xf32, #tpu.memory_space<vmem>>, vector<1x1x2x16xf32>,
      %c8_i32 = arith.constant 8 : i32
      %c0_100 = arith.constant 0 : index
      %c0_101 = arith.constant 0 : index
      %310 = vector.load %arg6[%c0_100, %c0_101] : memref<2x16xf32, #tpu.memory_space<vmem>>, vector<2x16xf32>
      tpu.vector_store %arg6[%c0_100, %c0_101], %305 {strides = array<i32>} : memref<2x16xf32, #tpu.memory_space<vmem>>, vector<2x16xf32>,
    } else {
    }
    return
  }
  func.func @transform_0(%arg0: i32, %arg1: i32) -> (i32, i32, i32, i32) {
    %c2_i32 = arith.constant 2 : i32
    %0 = arith.muli %c2_i32, %arg1 : i32
    %c0_i32 = arith.constant 0 : i32
    %1 = arith.subi %c0_i32, %0 : i32
    %2 = arith.muli %arg0, %1 : i32
    %3 = arith.addi %arg1, %2 : i32
    %c0_i32_0 = arith.constant 0 : i32
    %c0_i32_1 = arith.constant 0 : i32
    %c0_i32_2 = arith.constant 0 : i32
    return %arg0, %3, %c0_i32_0, %c0_i32_1 : i32, i32, i32, i32
  }
  func.func @transform_1(%arg0: i32, %arg1: i32) -> (i32, i32, i32) {
    %c0_i32 = arith.constant 0 : i32
    %c0_i32_0 = arith.constant 0 : i32
    %c0_i32_1 = arith.constant 0 : i32
    return %arg0, %c0_i32, %c0_i32_0 : i32, i32, i32
  }
  func.func @transform_2(%arg0: i32, %arg1: i32) -> (i32, i32, i32) {
    %c0_i32 = arith.constant 0 : i32
    %c0_i32_0 = arith.constant 0 : i32
    %c0_i32_1 = arith.constant 0 : i32
    return %arg0, %c0_i32, %c0_i32_0 : i32, i32, i32
  }
  func.func @transform_3(%arg0: i32, %arg1: i32) -> (i32, i32, i32, i32) {
    %c2_i32 = arith.constant 2 : i32
    %0 = arith.muli %c2_i32, %arg1 : i32
    %c0_i32 = arith.constant 0 : i32
    %1 = arith.subi %c0_i32, %0 : i32
    %2 = arith.muli %arg0, %1 : i32
    %3 = arith.addi %arg1, %2 : i32
    %c0_i32_0 = arith.constant 0 : i32
    %c0_i32_1 = arith.constant 0 : i32
    %c0_i32_2 = arith.constant 0 : i32
    return %arg0, %3, %c0_i32_0, %c0_i32_1 : i32, i32, i32, i32
  }
}

module attributes {stable_mosaic.version = 11 : i64} {
  func.func @gru_block_kernel(%arg0: i32, %arg1: memref<6x2x96xf32, #tpu.memory_space<vmem>>, %arg2: memref<2x32xf32, #tpu.memory_space<vmem>>, %arg3: memref<32x96xf32, #tpu.memory_space<vmem>>, %arg4: memref<1x96xf32, #tpu.memory_space<vmem>>, %arg5: memref<6x2x32xf32, #tpu.memory_space<vmem>>, %arg6: memref<2x32xf32, #tpu.memory_space<vmem>>) attributes {dimension_semantics = [#tpu.dimension_semantics<arbitrary>], iteration_bounds = array<i64: 1>, scalar_prefetch = 0 : i64, scratch_operands = 1 : i64, tpu.core_type = #tpu.core_type<tc>, window_params = [{transform_indices = @transform_0, window_bounds = array<i64: 6, 2, 96>}, {pipeline_mode = #tpu.pipeline_mode<synchronous>, transform_indices = @transform_1, window_bounds = array<i64: 2, 32>}, {pipeline_mode = #tpu.pipeline_mode<synchronous>, transform_indices = @transform_2, window_bounds = array<i64: 32, 96>}, {pipeline_mode = #tpu.pipeline_mode<synchronous>, transform_indices = @transform_3, window_bounds = array<i64: 1, 96>}, {transform_indices = @transform_4, window_bounds = array<i64: 6, 2, 32>}]} {
    %c0_i32 = arith.constant 0 : i32
    %0 = arith.cmpi eq, %arg0, %c0_i32 : i32
    %1 = arith.extui %0 : i1 to i32
    %c0_i32_0 = arith.constant 0 : i32
    %2 = arith.cmpi ne, %1, %c0_i32_0 : i32
    scf.if %2 {
      %c0_56 = arith.constant 0 : index
      %c0_57 = arith.constant 0 : index
      %223 = vector.load %arg2[%c0_56, %c0_57] : memref<2x32xf32, #tpu.memory_space<vmem>>, vector<2x32xf32>
      %c0_58 = arith.constant 0 : index
      %c0_59 = arith.constant 0 : index
      %224 = vector.load %arg6[%c0_58, %c0_59] : memref<2x32xf32, #tpu.memory_space<vmem>>, vector<2x32xf32>
      tpu.vector_store %arg6[%c0_58, %c0_59], %223 {strides = array<i32>} : memref<2x32xf32, #tpu.memory_space<vmem>>, vector<2x32xf32>,
    } else {
    }
    %c0 = arith.constant 0 : index
    %c0_1 = arith.constant 0 : index
    %3 = vector.load %arg3[%c0, %c0_1] : memref<32x96xf32, #tpu.memory_space<vmem>>, vector<32x96xf32>
    %c0_2 = arith.constant 0 : index
    %c0_3 = arith.constant 0 : index
    %4 = vector.load %arg4[%c0_2, %c0_3] : memref<1x96xf32, #tpu.memory_space<vmem>>, vector<1x96xf32>
    %c0_4 = arith.constant 0 : index
    %c0_5 = arith.constant 0 : index
    %5 = vector.load %arg6[%c0_4, %c0_5] : memref<2x32xf32, #tpu.memory_space<vmem>>, vector<2x32xf32>
    %c0_i32_6 = arith.constant 0 : i32
    %6 = arith.index_cast %c0_i32_6 : i32 to index
    %c0_7 = arith.constant 0 : index
    %c0_8 = arith.constant 0 : index
    %7 = vector.load %arg1[%6, %c0_7, %c0_8] : memref<6x2x96xf32, #tpu.memory_space<vmem>>, vector<1x2x96xf32>
    %8 = vector.shape_cast %7 : vector<1x2x96xf32> to vector<2x96xf32>
    %cst = arith.constant dense<0.000000e+00> : vector<2x96xf32>
    %9 = tpu.matmul %5, %3, %cst {dimension_numbers = #tpu.dot_dimension_numbers<[1], [0], [0], [1], [0, 0, 1, 1], [], []>} : vector<2x32xf32>, vector<32x96xf32>, vector<2x96xf32> -> vector<2x96xf32>
    %10 = vector.broadcast %4 : vector<1x96xf32> to vector<2x96xf32>
    %11 = arith.addf %9, %10 : vector<2x96xf32>
    %12 = vector.extract_strided_slice %8 {offsets = [0, 0], sizes = [2, 32], strides = [1, 1]} : vector<2x96xf32> to vector<2x32xf32>
    %13 = vector.extract_strided_slice %11 {offsets = [0, 0], sizes = [2, 32], strides = [1, 1]} : vector<2x96xf32> to vector<2x32xf32>
    %14 = arith.addf %12, %13 : vector<2x32xf32>
    %15 = arith.negf %14 : vector<2x32xf32>
    %16 = math.exp %15 : vector<2x32xf32>
    %cst_9 = arith.constant 1.000000e+00 : f32
    %17 = vector.broadcast %cst_9 : f32 to vector<2x32xf32>
    %18 = arith.addf %17, %16 : vector<2x32xf32>
    %19 = arith.divf %17, %18 : vector<2x32xf32>
    %20 = vector.extract_strided_slice %8 {offsets = [0, 32], sizes = [2, 32], strides = [1, 1]} : vector<2x96xf32> to vector<2x32xf32>
    %21 = vector.extract_strided_slice %11 {offsets = [0, 32], sizes = [2, 32], strides = [1, 1]} : vector<2x96xf32> to vector<2x32xf32>
    %22 = arith.addf %20, %21 : vector<2x32xf32>
    %23 = arith.negf %22 : vector<2x32xf32>
    %24 = math.exp %23 : vector<2x32xf32>
    %cst_10 = arith.constant 1.000000e+00 : f32
    %25 = vector.broadcast %cst_10 : f32 to vector<2x32xf32>
    %26 = arith.addf %25, %24 : vector<2x32xf32>
    %27 = arith.divf %25, %26 : vector<2x32xf32>
    %28 = vector.extract_strided_slice %8 {offsets = [0, 64], sizes = [2, 32], strides = [1, 1]} : vector<2x96xf32> to vector<2x32xf32>
    %29 = vector.extract_strided_slice %11 {offsets = [0, 64], sizes = [2, 32], strides = [1, 1]} : vector<2x96xf32> to vector<2x32xf32>
    %30 = arith.mulf %19, %29 : vector<2x32xf32>
    %31 = arith.addf %28, %30 : vector<2x32xf32>
    %32 = math.tanh %31 : vector<2x32xf32>
    %cst_11 = arith.constant 1.000000e+00 : f32
    %33 = vector.broadcast %cst_11 : f32 to vector<2x32xf32>
    %34 = arith.subf %33, %27 : vector<2x32xf32>
    %35 = arith.mulf %34, %32 : vector<2x32xf32>
    %36 = arith.mulf %27, %5 : vector<2x32xf32>
    %37 = arith.addf %35, %36 : vector<2x32xf32>
    %38 = arith.index_cast %c0_i32_6 : i32 to index
    %c0_12 = arith.constant 0 : index
    %c0_13 = arith.constant 0 : index
    %39 = vector.load %arg5[%38, %c0_12, %c0_13] : memref<6x2x32xf32, #tpu.memory_space<vmem>>, vector<1x2x32xf32>
    %40 = vector.shape_cast %39 : vector<1x2x32xf32> to vector<2x32xf32>
    %41 = vector.shape_cast %37 : vector<2x32xf32> to vector<1x2x32xf32>
    tpu.vector_store %arg5[%38, %c0_12, %c0_13], %41 {strides = array<i32>} : memref<6x2x32xf32, #tpu.memory_space<vmem>>, vector<1x2x32xf32>,
    %c1_i32 = arith.constant 1 : i32
    %42 = arith.index_cast %c1_i32 : i32 to index
    %c0_14 = arith.constant 0 : index
    %c0_15 = arith.constant 0 : index
    %43 = vector.load %arg1[%42, %c0_14, %c0_15] : memref<6x2x96xf32, #tpu.memory_space<vmem>>, vector<1x2x96xf32>
    %44 = vector.shape_cast %43 : vector<1x2x96xf32> to vector<2x96xf32>
    %cst_16 = arith.constant dense<0.000000e+00> : vector<2x96xf32>
    %45 = tpu.matmul %37, %3, %cst_16 {dimension_numbers = #tpu.dot_dimension_numbers<[1], [0], [0], [1], [0, 0, 1, 1], [], []>} : vector<2x32xf32>, vector<32x96xf32>, vector<2x96xf32> -> vector<2x96xf32>
    %46 = vector.broadcast %4 : vector<1x96xf32> to vector<2x96xf32>
    %47 = arith.addf %45, %46 : vector<2x96xf32>
    %48 = vector.extract_strided_slice %44 {offsets = [0, 0], sizes = [2, 32], strides = [1, 1]} : vector<2x96xf32> to vector<2x32xf32>
    %49 = vector.extract_strided_slice %47 {offsets = [0, 0], sizes = [2, 32], strides = [1, 1]} : vector<2x96xf32> to vector<2x32xf32>
    %50 = arith.addf %48, %49 : vector<2x32xf32>
    %51 = arith.negf %50 : vector<2x32xf32>
    %52 = math.exp %51 : vector<2x32xf32>
    %cst_17 = arith.constant 1.000000e+00 : f32
    %53 = vector.broadcast %cst_17 : f32 to vector<2x32xf32>
    %54 = arith.addf %53, %52 : vector<2x32xf32>
    %55 = arith.divf %53, %54 : vector<2x32xf32>
    %56 = vector.extract_strided_slice %44 {offsets = [0, 32], sizes = [2, 32], strides = [1, 1]} : vector<2x96xf32> to vector<2x32xf32>
    %57 = vector.extract_strided_slice %47 {offsets = [0, 32], sizes = [2, 32], strides = [1, 1]} : vector<2x96xf32> to vector<2x32xf32>
    %58 = arith.addf %56, %57 : vector<2x32xf32>
    %59 = arith.negf %58 : vector<2x32xf32>
    %60 = math.exp %59 : vector<2x32xf32>
    %cst_18 = arith.constant 1.000000e+00 : f32
    %61 = vector.broadcast %cst_18 : f32 to vector<2x32xf32>
    %62 = arith.addf %61, %60 : vector<2x32xf32>
    %63 = arith.divf %61, %62 : vector<2x32xf32>
    %64 = vector.extract_strided_slice %44 {offsets = [0, 64], sizes = [2, 32], strides = [1, 1]} : vector<2x96xf32> to vector<2x32xf32>
    %65 = vector.extract_strided_slice %47 {offsets = [0, 64], sizes = [2, 32], strides = [1, 1]} : vector<2x96xf32> to vector<2x32xf32>
    %66 = arith.mulf %55, %65 : vector<2x32xf32>
    %67 = arith.addf %64, %66 : vector<2x32xf32>
    %68 = math.tanh %67 : vector<2x32xf32>
    %cst_19 = arith.constant 1.000000e+00 : f32
    %69 = vector.broadcast %cst_19 : f32 to vector<2x32xf32>
    %70 = arith.subf %69, %63 : vector<2x32xf32>
    %71 = arith.mulf %70, %68 : vector<2x32xf32>
    %72 = arith.mulf %63, %37 : vector<2x32xf32>
    %73 = arith.addf %71, %72 : vector<2x32xf32>
    %74 = arith.index_cast %c1_i32 : i32 to index
    %c0_20 = arith.constant 0 : index
    %c0_21 = arith.constant 0 : index
    %75 = vector.load %arg5[%74, %c0_20, %c0_21] : memref<6x2x32xf32, #tpu.memory_space<vmem>>, vector<1x2x32xf32>
    %76 = vector.shape_cast %75 : vector<1x2x32xf32> to vector<2x32xf32>
    %77 = vector.shape_cast %73 : vector<2x32xf32> to vector<1x2x32xf32>
    tpu.vector_store %arg5[%74, %c0_20, %c0_21], %77 {strides = array<i32>} : memref<6x2x32xf32, #tpu.memory_space<vmem>>, vector<1x2x32xf32>,
    %c2_i32 = arith.constant 2 : i32
    %78 = arith.index_cast %c2_i32 : i32 to index
    %c0_22 = arith.constant 0 : index
    %c0_23 = arith.constant 0 : index
    %79 = vector.load %arg1[%78, %c0_22, %c0_23] : memref<6x2x96xf32, #tpu.memory_space<vmem>>, vector<1x2x96xf32>
    %80 = vector.shape_cast %79 : vector<1x2x96xf32> to vector<2x96xf32>
    %cst_24 = arith.constant dense<0.000000e+00> : vector<2x96xf32>
    %81 = tpu.matmul %73, %3, %cst_24 {dimension_numbers = #tpu.dot_dimension_numbers<[1], [0], [0], [1], [0, 0, 1, 1], [], []>} : vector<2x32xf32>, vector<32x96xf32>, vector<2x96xf32> -> vector<2x96xf32>
    %82 = vector.broadcast %4 : vector<1x96xf32> to vector<2x96xf32>
    %83 = arith.addf %81, %82 : vector<2x96xf32>
    %84 = vector.extract_strided_slice %80 {offsets = [0, 0], sizes = [2, 32], strides = [1, 1]} : vector<2x96xf32> to vector<2x32xf32>
    %85 = vector.extract_strided_slice %83 {offsets = [0, 0], sizes = [2, 32], strides = [1, 1]} : vector<2x96xf32> to vector<2x32xf32>
    %86 = arith.addf %84, %85 : vector<2x32xf32>
    %87 = arith.negf %86 : vector<2x32xf32>
    %88 = math.exp %87 : vector<2x32xf32>
    %cst_25 = arith.constant 1.000000e+00 : f32
    %89 = vector.broadcast %cst_25 : f32 to vector<2x32xf32>
    %90 = arith.addf %89, %88 : vector<2x32xf32>
    %91 = arith.divf %89, %90 : vector<2x32xf32>
    %92 = vector.extract_strided_slice %80 {offsets = [0, 32], sizes = [2, 32], strides = [1, 1]} : vector<2x96xf32> to vector<2x32xf32>
    %93 = vector.extract_strided_slice %83 {offsets = [0, 32], sizes = [2, 32], strides = [1, 1]} : vector<2x96xf32> to vector<2x32xf32>
    %94 = arith.addf %92, %93 : vector<2x32xf32>
    %95 = arith.negf %94 : vector<2x32xf32>
    %96 = math.exp %95 : vector<2x32xf32>
    %cst_26 = arith.constant 1.000000e+00 : f32
    %97 = vector.broadcast %cst_26 : f32 to vector<2x32xf32>
    %98 = arith.addf %97, %96 : vector<2x32xf32>
    %99 = arith.divf %97, %98 : vector<2x32xf32>
    %100 = vector.extract_strided_slice %80 {offsets = [0, 64], sizes = [2, 32], strides = [1, 1]} : vector<2x96xf32> to vector<2x32xf32>
    %101 = vector.extract_strided_slice %83 {offsets = [0, 64], sizes = [2, 32], strides = [1, 1]} : vector<2x96xf32> to vector<2x32xf32>
    %102 = arith.mulf %91, %101 : vector<2x32xf32>
    %103 = arith.addf %100, %102 : vector<2x32xf32>
    %104 = math.tanh %103 : vector<2x32xf32>
    %cst_27 = arith.constant 1.000000e+00 : f32
    %105 = vector.broadcast %cst_27 : f32 to vector<2x32xf32>
    %106 = arith.subf %105, %99 : vector<2x32xf32>
    %107 = arith.mulf %106, %104 : vector<2x32xf32>
    %108 = arith.mulf %99, %73 : vector<2x32xf32>
    %109 = arith.addf %107, %108 : vector<2x32xf32>
    %110 = arith.index_cast %c2_i32 : i32 to index
    %c0_28 = arith.constant 0 : index
    %c0_29 = arith.constant 0 : index
    %111 = vector.load %arg5[%110, %c0_28, %c0_29] : memref<6x2x32xf32, #tpu.memory_space<vmem>>, vector<1x2x32xf32>
    %112 = vector.shape_cast %111 : vector<1x2x32xf32> to vector<2x32xf32>
    %113 = vector.shape_cast %109 : vector<2x32xf32> to vector<1x2x32xf32>
    tpu.vector_store %arg5[%110, %c0_28, %c0_29], %113 {strides = array<i32>} : memref<6x2x32xf32, #tpu.memory_space<vmem>>, vector<1x2x32xf32>,
    %c3_i32 = arith.constant 3 : i32
    %114 = arith.index_cast %c3_i32 : i32 to index
    %c0_30 = arith.constant 0 : index
    %c0_31 = arith.constant 0 : index
    %115 = vector.load %arg1[%114, %c0_30, %c0_31] : memref<6x2x96xf32, #tpu.memory_space<vmem>>, vector<1x2x96xf32>
    %116 = vector.shape_cast %115 : vector<1x2x96xf32> to vector<2x96xf32>
    %cst_32 = arith.constant dense<0.000000e+00> : vector<2x96xf32>
    %117 = tpu.matmul %109, %3, %cst_32 {dimension_numbers = #tpu.dot_dimension_numbers<[1], [0], [0], [1], [0, 0, 1, 1], [], []>} : vector<2x32xf32>, vector<32x96xf32>, vector<2x96xf32> -> vector<2x96xf32>
    %118 = vector.broadcast %4 : vector<1x96xf32> to vector<2x96xf32>
    %119 = arith.addf %117, %118 : vector<2x96xf32>
    %120 = vector.extract_strided_slice %116 {offsets = [0, 0], sizes = [2, 32], strides = [1, 1]} : vector<2x96xf32> to vector<2x32xf32>
    %121 = vector.extract_strided_slice %119 {offsets = [0, 0], sizes = [2, 32], strides = [1, 1]} : vector<2x96xf32> to vector<2x32xf32>
    %122 = arith.addf %120, %121 : vector<2x32xf32>
    %123 = arith.negf %122 : vector<2x32xf32>
    %124 = math.exp %123 : vector<2x32xf32>
    %cst_33 = arith.constant 1.000000e+00 : f32
    %125 = vector.broadcast %cst_33 : f32 to vector<2x32xf32>
    %126 = arith.addf %125, %124 : vector<2x32xf32>
    %127 = arith.divf %125, %126 : vector<2x32xf32>
    %128 = vector.extract_strided_slice %116 {offsets = [0, 32], sizes = [2, 32], strides = [1, 1]} : vector<2x96xf32> to vector<2x32xf32>
    %129 = vector.extract_strided_slice %119 {offsets = [0, 32], sizes = [2, 32], strides = [1, 1]} : vector<2x96xf32> to vector<2x32xf32>
    %130 = arith.addf %128, %129 : vector<2x32xf32>
    %131 = arith.negf %130 : vector<2x32xf32>
    %132 = math.exp %131 : vector<2x32xf32>
    %cst_34 = arith.constant 1.000000e+00 : f32
    %133 = vector.broadcast %cst_34 : f32 to vector<2x32xf32>
    %134 = arith.addf %133, %132 : vector<2x32xf32>
    %135 = arith.divf %133, %134 : vector<2x32xf32>
    %136 = vector.extract_strided_slice %116 {offsets = [0, 64], sizes = [2, 32], strides = [1, 1]} : vector<2x96xf32> to vector<2x32xf32>
    %137 = vector.extract_strided_slice %119 {offsets = [0, 64], sizes = [2, 32], strides = [1, 1]} : vector<2x96xf32> to vector<2x32xf32>
    %138 = arith.mulf %127, %137 : vector<2x32xf32>
    %139 = arith.addf %136, %138 : vector<2x32xf32>
    %140 = math.tanh %139 : vector<2x32xf32>
    %cst_35 = arith.constant 1.000000e+00 : f32
    %141 = vector.broadcast %cst_35 : f32 to vector<2x32xf32>
    %142 = arith.subf %141, %135 : vector<2x32xf32>
    %143 = arith.mulf %142, %140 : vector<2x32xf32>
    %144 = arith.mulf %135, %109 : vector<2x32xf32>
    %145 = arith.addf %143, %144 : vector<2x32xf32>
    %146 = arith.index_cast %c3_i32 : i32 to index
    %c0_36 = arith.constant 0 : index
    %c0_37 = arith.constant 0 : index
    %147 = vector.load %arg5[%146, %c0_36, %c0_37] : memref<6x2x32xf32, #tpu.memory_space<vmem>>, vector<1x2x32xf32>
    %148 = vector.shape_cast %147 : vector<1x2x32xf32> to vector<2x32xf32>
    %149 = vector.shape_cast %145 : vector<2x32xf32> to vector<1x2x32xf32>
    tpu.vector_store %arg5[%146, %c0_36, %c0_37], %149 {strides = array<i32>} : memref<6x2x32xf32, #tpu.memory_space<vmem>>, vector<1x2x32xf32>,
    %c4_i32 = arith.constant 4 : i32
    %150 = arith.index_cast %c4_i32 : i32 to index
    %c0_38 = arith.constant 0 : index
    %c0_39 = arith.constant 0 : index
    %151 = vector.load %arg1[%150, %c0_38, %c0_39] : memref<6x2x96xf32, #tpu.memory_space<vmem>>, vector<1x2x96xf32>
    %152 = vector.shape_cast %151 : vector<1x2x96xf32> to vector<2x96xf32>
    %cst_40 = arith.constant dense<0.000000e+00> : vector<2x96xf32>
    %153 = tpu.matmul %145, %3, %cst_40 {dimension_numbers = #tpu.dot_dimension_numbers<[1], [0], [0], [1], [0, 0, 1, 1], [], []>} : vector<2x32xf32>, vector<32x96xf32>, vector<2x96xf32> -> vector<2x96xf32>
    %154 = vector.broadcast %4 : vector<1x96xf32> to vector<2x96xf32>
    %155 = arith.addf %153, %154 : vector<2x96xf32>
    %156 = vector.extract_strided_slice %152 {offsets = [0, 0], sizes = [2, 32], strides = [1, 1]} : vector<2x96xf32> to vector<2x32xf32>
    %157 = vector.extract_strided_slice %155 {offsets = [0, 0], sizes = [2, 32], strides = [1, 1]} : vector<2x96xf32> to vector<2x32xf32>
    %158 = arith.addf %156, %157 : vector<2x32xf32>
    %159 = arith.negf %158 : vector<2x32xf32>
    %160 = math.exp %159 : vector<2x32xf32>
    %cst_41 = arith.constant 1.000000e+00 : f32
    %161 = vector.broadcast %cst_41 : f32 to vector<2x32xf32>
    %162 = arith.addf %161, %160 : vector<2x32xf32>
    %163 = arith.divf %161, %162 : vector<2x32xf32>
    %164 = vector.extract_strided_slice %152 {offsets = [0, 32], sizes = [2, 32], strides = [1, 1]} : vector<2x96xf32> to vector<2x32xf32>
    %165 = vector.extract_strided_slice %155 {offsets = [0, 32], sizes = [2, 32], strides = [1, 1]} : vector<2x96xf32> to vector<2x32xf32>
    %166 = arith.addf %164, %165 : vector<2x32xf32>
    %167 = arith.negf %166 : vector<2x32xf32>
    %168 = math.exp %167 : vector<2x32xf32>
    %cst_42 = arith.constant 1.000000e+00 : f32
    %169 = vector.broadcast %cst_42 : f32 to vector<2x32xf32>
    %170 = arith.addf %169, %168 : vector<2x32xf32>
    %171 = arith.divf %169, %170 : vector<2x32xf32>
    %172 = vector.extract_strided_slice %152 {offsets = [0, 64], sizes = [2, 32], strides = [1, 1]} : vector<2x96xf32> to vector<2x32xf32>
    %173 = vector.extract_strided_slice %155 {offsets = [0, 64], sizes = [2, 32], strides = [1, 1]} : vector<2x96xf32> to vector<2x32xf32>
    %174 = arith.mulf %163, %173 : vector<2x32xf32>
    %175 = arith.addf %172, %174 : vector<2x32xf32>
    %176 = math.tanh %175 : vector<2x32xf32>
    %cst_43 = arith.constant 1.000000e+00 : f32
    %177 = vector.broadcast %cst_43 : f32 to vector<2x32xf32>
    %178 = arith.subf %177, %171 : vector<2x32xf32>
    %179 = arith.mulf %178, %176 : vector<2x32xf32>
    %180 = arith.mulf %171, %145 : vector<2x32xf32>
    %181 = arith.addf %179, %180 : vector<2x32xf32>
    %182 = arith.index_cast %c4_i32 : i32 to index
    %c0_44 = arith.constant 0 : index
    %c0_45 = arith.constant 0 : index
    %183 = vector.load %arg5[%182, %c0_44, %c0_45] : memref<6x2x32xf32, #tpu.memory_space<vmem>>, vector<1x2x32xf32>
    %184 = vector.shape_cast %183 : vector<1x2x32xf32> to vector<2x32xf32>
    %185 = vector.shape_cast %181 : vector<2x32xf32> to vector<1x2x32xf32>
    tpu.vector_store %arg5[%182, %c0_44, %c0_45], %185 {strides = array<i32>} : memref<6x2x32xf32, #tpu.memory_space<vmem>>, vector<1x2x32xf32>,
    %c5_i32 = arith.constant 5 : i32
    %186 = arith.index_cast %c5_i32 : i32 to index
    %c0_46 = arith.constant 0 : index
    %c0_47 = arith.constant 0 : index
    %187 = vector.load %arg1[%186, %c0_46, %c0_47] : memref<6x2x96xf32, #tpu.memory_space<vmem>>, vector<1x2x96xf32>
    %188 = vector.shape_cast %187 : vector<1x2x96xf32> to vector<2x96xf32>
    %cst_48 = arith.constant dense<0.000000e+00> : vector<2x96xf32>
    %189 = tpu.matmul %181, %3, %cst_48 {dimension_numbers = #tpu.dot_dimension_numbers<[1], [0], [0], [1], [0, 0, 1, 1], [], []>} : vector<2x32xf32>, vector<32x96xf32>, vector<2x96xf32> -> vector<2x96xf32>
    %190 = vector.broadcast %4 : vector<1x96xf32> to vector<2x96xf32>
    %191 = arith.addf %189, %190 : vector<2x96xf32>
    %192 = vector.extract_strided_slice %188 {offsets = [0, 0], sizes = [2, 32], strides = [1, 1]} : vector<2x96xf32> to vector<2x32xf32>
    %193 = vector.extract_strided_slice %191 {offsets = [0, 0], sizes = [2, 32], strides = [1, 1]} : vector<2x96xf32> to vector<2x32xf32>
    %194 = arith.addf %192, %193 : vector<2x32xf32>
    %195 = arith.negf %194 : vector<2x32xf32>
    %196 = math.exp %195 : vector<2x32xf32>
    %cst_49 = arith.constant 1.000000e+00 : f32
    %197 = vector.broadcast %cst_49 : f32 to vector<2x32xf32>
    %198 = arith.addf %197, %196 : vector<2x32xf32>
    %199 = arith.divf %197, %198 : vector<2x32xf32>
    %200 = vector.extract_strided_slice %188 {offsets = [0, 32], sizes = [2, 32], strides = [1, 1]} : vector<2x96xf32> to vector<2x32xf32>
    %201 = vector.extract_strided_slice %191 {offsets = [0, 32], sizes = [2, 32], strides = [1, 1]} : vector<2x96xf32> to vector<2x32xf32>
    %202 = arith.addf %200, %201 : vector<2x32xf32>
    %203 = arith.negf %202 : vector<2x32xf32>
    %204 = math.exp %203 : vector<2x32xf32>
    %cst_50 = arith.constant 1.000000e+00 : f32
    %205 = vector.broadcast %cst_50 : f32 to vector<2x32xf32>
    %206 = arith.addf %205, %204 : vector<2x32xf32>
    %207 = arith.divf %205, %206 : vector<2x32xf32>
    %208 = vector.extract_strided_slice %188 {offsets = [0, 64], sizes = [2, 32], strides = [1, 1]} : vector<2x96xf32> to vector<2x32xf32>
    %209 = vector.extract_strided_slice %191 {offsets = [0, 64], sizes = [2, 32], strides = [1, 1]} : vector<2x96xf32> to vector<2x32xf32>
    %210 = arith.mulf %199, %209 : vector<2x32xf32>
    %211 = arith.addf %208, %210 : vector<2x32xf32>
    %212 = math.tanh %211 : vector<2x32xf32>
    %cst_51 = arith.constant 1.000000e+00 : f32
    %213 = vector.broadcast %cst_51 : f32 to vector<2x32xf32>
    %214 = arith.subf %213, %207 : vector<2x32xf32>
    %215 = arith.mulf %214, %212 : vector<2x32xf32>
    %216 = arith.mulf %207, %181 : vector<2x32xf32>
    %217 = arith.addf %215, %216 : vector<2x32xf32>
    %218 = arith.index_cast %c5_i32 : i32 to index
    %c0_52 = arith.constant 0 : index
    %c0_53 = arith.constant 0 : index
    %219 = vector.load %arg5[%218, %c0_52, %c0_53] : memref<6x2x32xf32, #tpu.memory_space<vmem>>, vector<1x2x32xf32>
    %220 = vector.shape_cast %219 : vector<1x2x32xf32> to vector<2x32xf32>
    %221 = vector.shape_cast %217 : vector<2x32xf32> to vector<1x2x32xf32>
    tpu.vector_store %arg5[%218, %c0_52, %c0_53], %221 {strides = array<i32>} : memref<6x2x32xf32, #tpu.memory_space<vmem>>, vector<1x2x32xf32>,
    %c6_i32 = arith.constant 6 : i32
    %c0_54 = arith.constant 0 : index
    %c0_55 = arith.constant 0 : index
    %222 = vector.load %arg6[%c0_54, %c0_55] : memref<2x32xf32, #tpu.memory_space<vmem>>, vector<2x32xf32>
    tpu.vector_store %arg6[%c0_54, %c0_55], %217 {strides = array<i32>} : memref<2x32xf32, #tpu.memory_space<vmem>>, vector<2x32xf32>,
    return
  }
  func.func @transform_0(%arg0: i32) -> (i32, i32, i32) {
    %c0_i32 = arith.constant 0 : i32
    %c0_i32_0 = arith.constant 0 : i32
    %c0_i32_1 = arith.constant 0 : i32
    return %arg0, %c0_i32, %c0_i32_0 : i32, i32, i32
  }
  func.func @transform_1(%arg0: i32) -> (i32, i32) {
    %c0_i32 = arith.constant 0 : i32
    %c0_i32_0 = arith.constant 0 : i32
    %c0_i32_1 = arith.constant 0 : i32
    return %c0_i32, %c0_i32_0 : i32, i32
  }
  func.func @transform_2(%arg0: i32) -> (i32, i32) {
    %c0_i32 = arith.constant 0 : i32
    %c0_i32_0 = arith.constant 0 : i32
    %c0_i32_1 = arith.constant 0 : i32
    return %c0_i32, %c0_i32_0 : i32, i32
  }
  func.func @transform_3(%arg0: i32) -> (i32, i32) {
    %c0_i32 = arith.constant 0 : i32
    %c0_i32_0 = arith.constant 0 : i32
    %c0_i32_1 = arith.constant 0 : i32
    return %c0_i32, %c0_i32_0 : i32, i32
  }
  func.func @transform_4(%arg0: i32) -> (i32, i32, i32) {
    %c0_i32 = arith.constant 0 : i32
    %c0_i32_0 = arith.constant 0 : i32
    %c0_i32_1 = arith.constant 0 : i32
    return %arg0, %c0_i32, %c0_i32_0 : i32, i32, i32
  }
}

module attributes {stable_mosaic.version = 11 : i64} {
  func.func @attn_joiner_kernel(%arg0: i32, %arg1: memref<6x2x32xf32, #tpu.memory_space<vmem>>, %arg2: memref<8x2x32xf32, #tpu.memory_space<vmem>>, %arg3: memref<2x32x32xbf16, #tpu.memory_space<vmem>>, %arg4: memref<1x1x32xf32, #tpu.memory_space<vmem>>, %arg5: memref<6x2x8xf32, #tpu.memory_space<vmem>>, %arg6: memref<6x2x32xf32, #tpu.memory_space<vmem>>) attributes {dimension_semantics = [#tpu.dimension_semantics<arbitrary>], iteration_bounds = array<i64: 1>, scalar_prefetch = 0 : i64, scratch_operands = 0 : i64, tpu.core_type = #tpu.core_type<tc>, window_params = [{pipeline_mode = #tpu.pipeline_mode<synchronous>, transform_indices = @transform_0, window_bounds = array<i64: 6, 2, 32>}, {pipeline_mode = #tpu.pipeline_mode<synchronous>, transform_indices = @transform_1, window_bounds = array<i64: 8, 2, 32>}, {pipeline_mode = #tpu.pipeline_mode<synchronous>, transform_indices = @transform_2, window_bounds = array<i64: 2, 32, 32>}, {pipeline_mode = #tpu.pipeline_mode<synchronous>, transform_indices = @transform_3, window_bounds = array<i64: 1, 1, 32>}, {pipeline_mode = #tpu.pipeline_mode<synchronous>, transform_indices = @transform_4, window_bounds = array<i64: 6, 2, 8>}, {pipeline_mode = #tpu.pipeline_mode<synchronous>, transform_indices = @transform_5, window_bounds = array<i64: 6, 2, 32>}]} {
    %c0 = arith.constant 0 : index
    %c0_0 = arith.constant 0 : index
    %c0_1 = arith.constant 0 : index
    %0 = vector.load %arg1[%c0, %c0_0, %c0_1] : memref<6x2x32xf32, #tpu.memory_space<vmem>>, vector<6x2x32xf32>
    %c0_2 = arith.constant 0 : index
    %c0_3 = arith.constant 0 : index
    %c0_4 = arith.constant 0 : index
    %1 = vector.load %arg2[%c0_2, %c0_3, %c0_4] : memref<8x2x32xf32, #tpu.memory_space<vmem>>, vector<8x2x32xf32>
    %c0_5 = arith.constant 0 : index
    %c0_6 = arith.constant 0 : index
    %c0_7 = arith.constant 0 : index
    %2 = vector.load %arg3[%c0_5, %c0_6, %c0_7] : memref<2x32x32xbf16, #tpu.memory_space<vmem>>, vector<1x32x32xbf16>
    %3 = vector.shape_cast %2 : vector<1x32x32xbf16> to vector<32x32xbf16>
    %c1 = arith.constant 1 : index
    %c0_8 = arith.constant 0 : index
    %c0_9 = arith.constant 0 : index
    %4 = vector.load %arg3[%c1, %c0_8, %c0_9] : memref<2x32x32xbf16, #tpu.memory_space<vmem>>, vector<1x32x32xbf16>
    %5 = vector.shape_cast %4 : vector<1x32x32xbf16> to vector<32x32xbf16>
    %c0_10 = arith.constant 0 : index
    %c0_11 = arith.constant 0 : index
    %c0_12 = arith.constant 0 : index
    %6 = vector.load %arg4[%c0_10, %c0_11, %c0_12] : memref<1x1x32xf32, #tpu.memory_space<vmem>>, vector<1x1x32xf32>
    %7 = vector.shape_cast %6 : vector<1x1x32xf32> to vector<1x32xf32>
    %8 = vector.extract_strided_slice %0 {offsets = [0, 0, 0], sizes = [6, 1, 32], strides = [1, 1, 1]} : vector<6x2x32xf32> to vector<6x1x32xf32>
    %9 = vector.shape_cast %8 : vector<6x1x32xf32> to vector<6x32xf32>
    %10 = arith.truncf %9 : vector<6x32xf32> to vector<6x32xbf16>
    %11 = vector.extract_strided_slice %1 {offsets = [0, 0, 0], sizes = [8, 1, 32], strides = [1, 1, 1]} : vector<8x2x32xf32> to vector<8x1x32xf32>
    %12 = vector.shape_cast %11 : vector<8x1x32xf32> to vector<8x32xf32>
    %13 = arith.truncf %12 : vector<8x32xf32> to vector<8x32xbf16>
    %cst = arith.constant dense<0.000000e+00> : vector<6x8xf32>
    %14 = tpu.matmul %10, %13, %cst {dimension_numbers = #tpu.dot_dimension_numbers<[1], [1], [0], [0], [0, 0, 1, 0], [], []>} : vector<6x32xbf16>, vector<8x32xbf16>, vector<6x8xf32> -> vector<6x8xf32>
    %cst_13 = arith.constant dense<0xFF800000> : vector<6xf32>
    %15 = vector.multi_reduction <maximumf>, %14, %cst_13 [1] : vector<6x8xf32> to vector<6xf32>
    %16 = vector.shape_cast %15 : vector<6xf32> to vector<6x1xf32>
    %17 = vector.broadcast %16 : vector<6x1xf32> to vector<6x8xf32>
    %18 = arith.subf %14, %17 : vector<6x8xf32>
    %19 = math.exp %18 : vector<6x8xf32>
    %cst_14 = arith.constant dense<0.000000e+00> : vector<6xf32>
    %20 = vector.multi_reduction <add>, %19, %cst_14 [1] : vector<6x8xf32> to vector<6xf32>
    %21 = vector.shape_cast %20 : vector<6xf32> to vector<6x1xf32>
    %22 = tpu.reciprocal %21 {approx = true} : vector<6x1xf32> -> vector<6x1xf32>
    %23 = vector.broadcast %22 : vector<6x1xf32> to vector<6x8xf32>
    %24 = arith.mulf %19, %23 : vector<6x8xf32>
    %c0_15 = arith.constant 0 : index
    %c0_16 = arith.constant 0 : index
    %c0_17 = arith.constant 0 : index
    %25 = vector.load %arg5[%c0_15, %c0_16, %c0_17] : memref<6x2x8xf32, #tpu.memory_space<vmem>>, vector<6x1x8xf32>
    %26 = vector.shape_cast %25 : vector<6x1x8xf32> to vector<6x8xf32>
    %27 = vector.shape_cast %24 : vector<6x8xf32> to vector<6x1x8xf32>
    tpu.vector_store %arg5[%c0_15, %c0_16, %c0_17], %27 {strides = array<i32>} : memref<6x2x8xf32, #tpu.memory_space<vmem>>, vector<6x1x8xf32>,
    %28 = arith.truncf %24 : vector<6x8xf32> to vector<6x8xbf16>
    %cst_18 = arith.constant dense<0.000000e+00> : vector<6x32xf32>
    %29 = tpu.matmul %28, %13, %cst_18 {dimension_numbers = #tpu.dot_dimension_numbers<[1], [0], [0], [1], [0, 0, 1, 1], [], []>} : vector<6x8xbf16>, vector<8x32xbf16>, vector<6x32xf32> -> vector<6x32xf32>
    %30 = arith.truncf %29 : vector<6x32xf32> to vector<6x32xbf16>
    %cst_19 = arith.constant dense<0.000000e+00> : vector<6x32xf32>
    %31 = tpu.matmul %30, %3, %cst_19 {dimension_numbers = #tpu.dot_dimension_numbers<[1], [0], [0], [1], [0, 0, 1, 1], [], []>} : vector<6x32xbf16>, vector<32x32xbf16>, vector<6x32xf32> -> vector<6x32xf32>
    %cst_20 = arith.constant dense<0.000000e+00> : vector<6x32xf32>
    %32 = tpu.matmul %10, %5, %cst_20 {dimension_numbers = #tpu.dot_dimension_numbers<[1], [0], [0], [1], [0, 0, 1, 1], [], []>} : vector<6x32xbf16>, vector<32x32xbf16>, vector<6x32xf32> -> vector<6x32xf32>
    %33 = arith.addf %31, %32 : vector<6x32xf32>
    %34 = vector.broadcast %7 : vector<1x32xf32> to vector<6x32xf32>
    %35 = arith.addf %33, %34 : vector<6x32xf32>
    %36 = math.tanh %35 : vector<6x32xf32>
    %c0_21 = arith.constant 0 : index
    %c0_22 = arith.constant 0 : index
    %c0_23 = arith.constant 0 : index
    %37 = vector.load %arg6[%c0_21, %c0_22, %c0_23] : memref<6x2x32xf32, #tpu.memory_space<vmem>>, vector<6x1x32xf32>
    %38 = vector.shape_cast %37 : vector<6x1x32xf32> to vector<6x32xf32>
    %39 = vector.shape_cast %36 : vector<6x32xf32> to vector<6x1x32xf32>
    tpu.vector_store %arg6[%c0_21, %c0_22, %c0_23], %39 {strides = array<i32>} : memref<6x2x32xf32, #tpu.memory_space<vmem>>, vector<6x1x32xf32>,
    %40 = vector.extract_strided_slice %0 {offsets = [0, 1, 0], sizes = [6, 1, 32], strides = [1, 1, 1]} : vector<6x2x32xf32> to vector<6x1x32xf32>
    %41 = vector.shape_cast %40 : vector<6x1x32xf32> to vector<6x32xf32>
    %42 = arith.truncf %41 : vector<6x32xf32> to vector<6x32xbf16>
    %43 = vector.extract_strided_slice %1 {offsets = [0, 1, 0], sizes = [8, 1, 32], strides = [1, 1, 1]} : vector<8x2x32xf32> to vector<8x1x32xf32>
    %44 = vector.shape_cast %43 : vector<8x1x32xf32> to vector<8x32xf32>
    %45 = arith.truncf %44 : vector<8x32xf32> to vector<8x32xbf16>
    %cst_24 = arith.constant dense<0.000000e+00> : vector<6x8xf32>
    %46 = tpu.matmul %42, %45, %cst_24 {dimension_numbers = #tpu.dot_dimension_numbers<[1], [1], [0], [0], [0, 0, 1, 0], [], []>} : vector<6x32xbf16>, vector<8x32xbf16>, vector<6x8xf32> -> vector<6x8xf32>
    %cst_25 = arith.constant dense<0xFF800000> : vector<6xf32>
    %47 = vector.multi_reduction <maximumf>, %46, %cst_25 [1] : vector<6x8xf32> to vector<6xf32>
    %48 = vector.shape_cast %47 : vector<6xf32> to vector<6x1xf32>
    %49 = vector.broadcast %48 : vector<6x1xf32> to vector<6x8xf32>
    %50 = arith.subf %46, %49 : vector<6x8xf32>
    %51 = math.exp %50 : vector<6x8xf32>
    %cst_26 = arith.constant dense<0.000000e+00> : vector<6xf32>
    %52 = vector.multi_reduction <add>, %51, %cst_26 [1] : vector<6x8xf32> to vector<6xf32>
    %53 = vector.shape_cast %52 : vector<6xf32> to vector<6x1xf32>
    %54 = tpu.reciprocal %53 {approx = true} : vector<6x1xf32> -> vector<6x1xf32>
    %55 = vector.broadcast %54 : vector<6x1xf32> to vector<6x8xf32>
    %56 = arith.mulf %51, %55 : vector<6x8xf32>
    %c0_27 = arith.constant 0 : index
    %c1_28 = arith.constant 1 : index
    %c0_29 = arith.constant 0 : index
    %57 = vector.load %arg5[%c0_27, %c1_28, %c0_29] : memref<6x2x8xf32, #tpu.memory_space<vmem>>, vector<6x1x8xf32>
    %58 = vector.shape_cast %57 : vector<6x1x8xf32> to vector<6x8xf32>
    %59 = vector.shape_cast %56 : vector<6x8xf32> to vector<6x1x8xf32>
    tpu.vector_store %arg5[%c0_27, %c1_28, %c0_29], %59 {strides = array<i32>} : memref<6x2x8xf32, #tpu.memory_space<vmem>>, vector<6x1x8xf32>,
    %60 = arith.truncf %56 : vector<6x8xf32> to vector<6x8xbf16>
    %cst_30 = arith.constant dense<0.000000e+00> : vector<6x32xf32>
    %61 = tpu.matmul %60, %45, %cst_30 {dimension_numbers = #tpu.dot_dimension_numbers<[1], [0], [0], [1], [0, 0, 1, 1], [], []>} : vector<6x8xbf16>, vector<8x32xbf16>, vector<6x32xf32> -> vector<6x32xf32>
    %62 = arith.truncf %61 : vector<6x32xf32> to vector<6x32xbf16>
    %cst_31 = arith.constant dense<0.000000e+00> : vector<6x32xf32>
    %63 = tpu.matmul %62, %3, %cst_31 {dimension_numbers = #tpu.dot_dimension_numbers<[1], [0], [0], [1], [0, 0, 1, 1], [], []>} : vector<6x32xbf16>, vector<32x32xbf16>, vector<6x32xf32> -> vector<6x32xf32>
    %cst_32 = arith.constant dense<0.000000e+00> : vector<6x32xf32>
    %64 = tpu.matmul %42, %5, %cst_32 {dimension_numbers = #tpu.dot_dimension_numbers<[1], [0], [0], [1], [0, 0, 1, 1], [], []>} : vector<6x32xbf16>, vector<32x32xbf16>, vector<6x32xf32> -> vector<6x32xf32>
    %65 = arith.addf %63, %64 : vector<6x32xf32>
    %66 = vector.broadcast %7 : vector<1x32xf32> to vector<6x32xf32>
    %67 = arith.addf %65, %66 : vector<6x32xf32>
    %68 = math.tanh %67 : vector<6x32xf32>
    %c0_33 = arith.constant 0 : index
    %c1_34 = arith.constant 1 : index
    %c0_35 = arith.constant 0 : index
    %69 = vector.load %arg6[%c0_33, %c1_34, %c0_35] : memref<6x2x32xf32, #tpu.memory_space<vmem>>, vector<6x1x32xf32>
    %70 = vector.shape_cast %69 : vector<6x1x32xf32> to vector<6x32xf32>
    %71 = vector.shape_cast %68 : vector<6x32xf32> to vector<6x1x32xf32>
    tpu.vector_store %arg6[%c0_33, %c1_34, %c0_35], %71 {strides = array<i32>} : memref<6x2x32xf32, #tpu.memory_space<vmem>>, vector<6x1x32xf32>,
    return
  }
  func.func @transform_0(%arg0: i32) -> (i32, i32, i32) {
    %c0_i32 = arith.constant 0 : i32
    %c0_i32_0 = arith.constant 0 : i32
    %c0_i32_1 = arith.constant 0 : i32
    %c0_i32_2 = arith.constant 0 : i32
    return %c0_i32, %c0_i32_0, %c0_i32_1 : i32, i32, i32
  }
  func.func @transform_1(%arg0: i32) -> (i32, i32, i32) {
    %c0_i32 = arith.constant 0 : i32
    %c0_i32_0 = arith.constant 0 : i32
    %c0_i32_1 = arith.constant 0 : i32
    %c0_i32_2 = arith.constant 0 : i32
    return %c0_i32, %c0_i32_0, %c0_i32_1 : i32, i32, i32
  }
  func.func @transform_2(%arg0: i32) -> (i32, i32, i32) {
    %c0_i32 = arith.constant 0 : i32
    %c0_i32_0 = arith.constant 0 : i32
    %c0_i32_1 = arith.constant 0 : i32
    %c0_i32_2 = arith.constant 0 : i32
    return %c0_i32, %c0_i32_0, %c0_i32_1 : i32, i32, i32
  }
  func.func @transform_3(%arg0: i32) -> (i32, i32, i32) {
    %c0_i32 = arith.constant 0 : i32
    %c0_i32_0 = arith.constant 0 : i32
    %c0_i32_1 = arith.constant 0 : i32
    %c0_i32_2 = arith.constant 0 : i32
    return %c0_i32, %c0_i32_0, %c0_i32_1 : i32, i32, i32
  }
  func.func @transform_4(%arg0: i32) -> (i32, i32, i32) {
    %c0_i32 = arith.constant 0 : i32
    %c0_i32_0 = arith.constant 0 : i32
    %c0_i32_1 = arith.constant 0 : i32
    %c0_i32_2 = arith.constant 0 : i32
    return %c0_i32, %c0_i32_0, %c0_i32_1 : i32, i32, i32
  }
  func.func @transform_5(%arg0: i32) -> (i32, i32, i32) {
    %c0_i32 = arith.constant 0 : i32
    %c0_i32_0 = arith.constant 0 : i32
    %c0_i32_1 = arith.constant 0 : i32
    %c0_i32_2 = arith.constant 0 : i32
    return %c0_i32, %c0_i32_0, %c0_i32_1 : i32, i32, i32
  }
}

module attributes {stable_mosaic.version = 11 : i64} {
  func.func @vocab_proj_kernel(%arg0: i32, %arg1: memref<12x32xf32, #tpu.memory_space<vmem>>, %arg2: memref<32x20xbf16, #tpu.memory_space<vmem>>, %arg3: memref<1x20xf32, #tpu.memory_space<vmem>>, %arg4: memref<12x20xf32, #tpu.memory_space<vmem>>) attributes {dimension_semantics = [#tpu.dimension_semantics<parallel>], iteration_bounds = array<i64: 1>, scalar_prefetch = 0 : i64, scratch_operands = 0 : i64, tpu.core_type = #tpu.core_type<tc>, window_params = [{pipeline_mode = #tpu.pipeline_mode<synchronous>, transform_indices = @transform_0, window_bounds = array<i64: 12, 32>}, {transform_indices = @transform_1, window_bounds = array<i64: 32, 20>}, {transform_indices = @transform_2, window_bounds = array<i64: 1, 20>}, {transform_indices = @transform_3, window_bounds = array<i64: 12, 20>}]} {
    %c0 = arith.constant 0 : index
    %c0_0 = arith.constant 0 : index
    %0 = vector.load %arg1[%c0, %c0_0] : memref<12x32xf32, #tpu.memory_space<vmem>>, vector<12x32xf32>
    %1 = arith.truncf %0 : vector<12x32xf32> to vector<12x32xbf16>
    %c0_1 = arith.constant 0 : index
    %c0_2 = arith.constant 0 : index
    %2 = vector.load %arg2[%c0_1, %c0_2] : memref<32x20xbf16, #tpu.memory_space<vmem>>, vector<32x20xbf16>
    %cst = arith.constant dense<0.000000e+00> : vector<12x20xf32>
    %3 = tpu.matmul %1, %2, %cst {dimension_numbers = #tpu.dot_dimension_numbers<[1], [0], [0], [1], [0, 0, 1, 1], [], []>} : vector<12x32xbf16>, vector<32x20xbf16>, vector<12x20xf32> -> vector<12x20xf32>
    %c0_3 = arith.constant 0 : index
    %c0_4 = arith.constant 0 : index
    %4 = vector.load %arg3[%c0_3, %c0_4] : memref<1x20xf32, #tpu.memory_space<vmem>>, vector<1x20xf32>
    %5 = vector.broadcast %4 : vector<1x20xf32> to vector<12x20xf32>
    %6 = arith.addf %3, %5 : vector<12x20xf32>
    %c0_5 = arith.constant 0 : index
    %c0_6 = arith.constant 0 : index
    %7 = vector.load %arg4[%c0_5, %c0_6] : memref<12x20xf32, #tpu.memory_space<vmem>>, vector<12x20xf32>
    tpu.vector_store %arg4[%c0_5, %c0_6], %6 {strides = array<i32>} : memref<12x20xf32, #tpu.memory_space<vmem>>, vector<12x20xf32>,
    return
  }
  func.func @transform_0(%arg0: i32) -> (i32, i32) {
    %c0_i32 = arith.constant 0 : i32
    %c0_i32_0 = arith.constant 0 : i32
    %c0_i32_1 = arith.constant 0 : i32
    return %c0_i32, %c0_i32_0 : i32, i32
  }
  func.func @transform_1(%arg0: i32) -> (i32, i32) {
    %c0_i32 = arith.constant 0 : i32
    %c0_i32_0 = arith.constant 0 : i32
    return %c0_i32, %arg0 : i32, i32
  }
  func.func @transform_2(%arg0: i32) -> (i32, i32) {
    %c0_i32 = arith.constant 0 : i32
    %c0_i32_0 = arith.constant 0 : i32
    return %c0_i32, %arg0 : i32, i32
  }
  func.func @transform_3(%arg0: i32) -> (i32, i32) {
    %c0_i32 = arith.constant 0 : i32
    %c0_i32_0 = arith.constant 0 : i32
    return %c0_i32, %arg0 : i32, i32
  }
}

</mosaic_0001>

<llo_original>
// kernel: _lambda_.8
$region0: #{_lambda_.8}
  #allocation0 [shape = 'u32[]', space=smem, size = 0x4, offset = 0x4, fixed_abs, tag = 'smem constant byte address 0x4 - core index']
  #allocation1 [shape = 'u32[144,128]{1,0:T(1,128)}', space=vmem, size = 0x12000, scoped, tag = 'internal scratch']
  %s0 = inlined_call_operand.vmem [shape: f32[12,32], index: 0, kind: input, shape index: {}]
  %s1 = inlined_call_operand.vmem [shape: bf16[1,32,96], index: 1, kind: input, shape index: {}]
  %s2 = inlined_call_operand.vmem [shape: f32[1,1,96], index: 2, kind: input, shape index: {}]
  %s3 = inlined_call_operand.vmem [shape: f32[1,12,96], index: 3, kind: output, shape index: {}]
  %s4 = sld [smem:[#allocation0]]
  $region22: #{_lambda_.8} parent=0
    _
  %s6 = ssub.s32 1, %s4
  %s7 = scalar_select 0, %s6, %s4
  // Predicated region
  $region2: #{_lambda_.8} parent=0 // pred_check
    _
  $region3: #{_lambda_.8} parent=0 // pred_check_branch
    %9 = sbr.rel (0) target = $region5
  $region4: #{_lambda_.8} parent=0 // pred_region
    _
  $region5: #{_lambda_.8} parent=0 // pred_fallthru
    _
  // Predicated region
  $region6: #{_lambda_.8} parent=0 // pred_check
    _
  $region7: #{_lambda_.8} parent=0 // pred_check_branch
    %11 = sbr.rel (0) target = $region9
  $region8: #{_lambda_.8} parent=0 // pred_region
    _
  $region9: #{_lambda_.8} parent=0 // pred_fallthru
    _
  // Predicated region
  $region10: #{_lambda_.8} parent=0 // pred_check
    _
  $region11: #{_lambda_.8} parent=0 // pred_check_branch
    %13 = sbr.rel (0) target = $region13
  $region12: #{_lambda_.8} parent=0 // pred_region
    _
  $region13: #{_lambda_.8} parent=0 // pred_fallthru
    _
  %v15 = vld [vmem:[%s0] sm:$0xff]
  %v16 = vld [vmem:[%s0 + $0x8] sm:$0xf]
  %v17 = vpack.c.bf16 %v16, %v15
  %v18 = vld [vmem:[%s1] sm:$0xf]
  %v19 = vld [vmem:[%s1 + $0x4] sm:$0xf]
  %v20 = vld [vmem:[%s1 + $0x8] sm:$0xf]
  %v21 = vld [vmem:[%s1 + $0xc] sm:$0xf]
  %v22 = vld [vmem:[%s2] sm:$0x1]
  %v24 = vlaneseq
  %v25 = vshrl.u32 %v24, 7
  %v26 = vsub.s32 0, %v25
  %v27 = vrot.slane %v22, %v26
  %v33 = vunpack.c.l.b16 %v18
  %v34 = vunpack.c.l.b16 %v19
  %v35 = vunpack.c.l.b16 %v20
  %v36 = vunpack.c.l.b16 %v21
  %v37 = vpack.c.b16 %v34, %v33
  %v38 = vpack.c.b16 %v36, %v35
  %vm41 = vcmask 261120
  %v43 = vsel %vm41, %v17, 0
  %45 = vmatprep.subr.bf16.mxu0 0
  %46 = vmatpush1.bf16.msra.mxu0 %v37
  %47 = vmatprep.subr.bf16.mxu0 0
  %48 = vmatpush1.bf16.msra.mxu0 %v38
  %49 = vmatprep.subr.bf16.mxu0 0
  %50 = vmatpush1.bf16.msra.mxu0 0
  %51 = vmatprep.subr.bf16.mxu0 0
  %52 = vmatpush1.bf16.msra.mxu0 0
  %53 = vmatprep.subr.bf16.mxu0 0
  %54 = vmatpush1.bf16.msra.mxu0 0
  %55 = vmatprep.subr.bf16.mxu0 0
  %56 = vmatpush1.bf16.msra.mxu0 0
  %57 = vmatprep.subr.bf16.mxu0 0
  %58 = vmatpush1.bf16.msra.mxu0 0
  %59 = vmatprep.subr.bf16.mxu0 0
  %60 = vmatpush1.bf16.msra.mxu0 0
  %61 = vmatprep.subr.bf16.mxu0 0
  %62 = vmatpush1.bf16.msra.mxu0 0
  %63 = vmatprep.subr.bf16.mxu0 0
  %64 = vmatpush1.bf16.msra.mxu0 0
  %65 = vmatprep.subr.bf16.mxu0 0
  %66 = vmatpush1.bf16.msra.mxu0 0
  %67 = vmatprep.subr.bf16.mxu0 0
  %68 = vmatpush1.bf16.msra.mxu0 0
  %69 = vmatprep.subr.bf16.mxu0 0
  %70 = vmatpush1.bf16.msra.mxu0 0
  %71 = vmatprep.subr.bf16.mxu0 0
  %72 = vmatpush1.bf16.msra.mxu0 0
  %73 = vmatprep.subr.bf16.mxu0 0
  %74 = vmatpush1.bf16.msra.mxu0 0
  %75 = vmatprep.subr.bf16.mxu0 0
  %76 = vmatpush1.bf16.msra.mxu0 0
  %77 = vmatprep.mubr.bf16.mxu0 0
  %78 = vmatmul.mubr.bf16.gmra.mrb[0].mxu0 %v43
  %v79 = vpop.f32.mrb[0].mxu0
  %v80 = vadd.f32 %v27, %v79
  %v81 = vpop.f32.mrb[0].mxu0
  %v82 = vpop.f32.mrb[0].mxu0
  %v83 = vadd.f32 %v27, %v82
  %v84 = vpop.f32.mrb[0].mxu0
  %85 = vdwg.mxu0
  %vm86 = vcmask 785408
  %87 = vst.msk [vmem:[%s3] sm:$0xff] %vm86, %v80
  %vm88 = vcmask 781312
  %89 = vst.msk [vmem:[%s3 + $0x8] sm:$0xf] %vm88, %v83
  // Predicated region
  $region14: #{_lambda_.8} parent=0 // pred_check
    _
  $region15: #{_lambda_.8} parent=0 // pred_check_branch
    %91 = sbr.rel (0) target = $region17
  $region16: #{_lambda_.8} parent=0 // pred_region
    _
  $region17: #{_lambda_.8} parent=0 // pred_fallthru
    _
  // Predicated region
  $region18: #{_lambda_.8} parent=0 // pred_check
    _
  $region19: #{_lambda_.8} parent=0 // pred_check_branch
    %93 = sbr.rel (0) target = $region21
  $region20: #{_lambda_.8} parent=0 // pred_region
    _
  $region21: #{_lambda_.8} parent=0 // pred_fallthru
    _

// kernel: _lambda_.6
$region0: #{_lambda_.6}
  #allocation0 [shape = 'u32[]', space=smem, size = 0x4, offset = 0x4, fixed_abs, tag = 'smem constant byte address 0x4 - core index']
  #allocation1 [shape = 'u32[144,128]{1,0:T(1,128)}', space=vmem, size = 0x12000, scoped, tag = 'internal scratch']
  %s0 = inlined_call_operand.vmem [shape: f32[16,32], index: 0, kind: input, shape index: {}]
  %s1 = inlined_call_operand.vmem [shape: bf16[2,32,48], index: 1, kind: input, shape index: {}]
  %s2 = inlined_call_operand.vmem [shape: f32[2,1,48], index: 2, kind: input, shape index: {}]
  %s3 = inlined_call_operand.vmem [shape: f32[2,16,48], index: 3, kind: output, shape index: {}]
  %s4 = sld [smem:[#allocation0]]
  $region45: #{_lambda_.6} parent=0
    _
  %s6 = ssub.s32 1, %s4
  %s7 = scalar_select 0, %s6, %s4
  loop: start=0, step=1, limit=4
  $region2: #{_lambda_.6} parent=0 // loop_pre_header
    _
  $region3: #{_lambda_.6} parent=0 // loop_header
    %s9 = sphi 0, %s13
    %p10 = scmp.ge.s32.totalorder %s9, 4
    %s17 = sphi 0, %s17
    %s19 = sphi 0, %s17
    %s20 = sphi 0, %s19
    %s34 = sphi 0, %s20
    %s40 = sphi 0, %s42
    %s43 = sphi 0, %s40
    %s44 = sphi 0, %s43
    %s60 = sphi 0, %s44
    %s66 = sphi 0, %s68
    %s69 = sphi 0, %s66
    %s70 = sphi 0, %s69
    %s86 = sphi 0, %s70
    %s92 = sphi 0, %s94
    %s95 = sphi 0, %s92
    %s96 = sphi 0, %s95
    %s112 = sphi 0, %s96
  $region4: #{_lambda_.6} parent=0 // loop_header_branch
    %12 = sbr.rel (%p10) target = $region8
  $region5: #{_lambda_.6} parent=0 // loop_body
    %s14 = ssub.s32 %s9, 1
    %s15 = ssub.s32 %s9, 2
    %s16 = sadd.s32 %s9, 1
    %s18 = sadd.s32 %s17, 1
    %p21 = scmp.eq.s32.totalorder %s9, 1
    %p22 = scmp.ne.s32.totalorder %s17, %s19
    %p23 = scmp.eq.s32.totalorder %s9, 0
    %p24 = por %p22, %p23
    %p25 = scmp.ne.s32.totalorder %s17, %s19
    %p26 = scmp.eq.s32.totalorder %s14, 1
    %p27 = por %p25, %p26
    %p28 = scmp.ne.s32.totalorder %s19, %s20
    %p29 = scmp.eq.s32.totalorder %s14, 0
    %p30 = por %p28, %p29
    %p31 = scmp.ne.s32.totalorder %s19, %s20
    %p32 = scmp.eq.s32.totalorder %s15, 1
    %p33 = por %p31, %p32
    %p35 = scmp.ne.s32.totalorder %s20, %s34
    %p36 = scmp.eq.s32.totalorder %s15, 0
    %p37 = por %p35, %p36
    %s38 = ssub.s32 %s9, %s16
    %p39 = scmp.eq.s32.totalorder %s38, 0
    %s41 = sadd.s32 %s40, 1
    %s42 = scalar_select %p39, %s40, %s41
    %p45 = pneg %p39
    %p46 = scmp.eq.s32.totalorder %s9, 1
    %p47 = por %p45, %p46
    %p48 = scmp.ne.s32.totalorder %s40, %s43
    %p49 = scmp.eq.s32.totalorder %s9, 0
    %p50 = por %p48, %p49
    %p51 = scmp.ne.s32.totalorder %s40, %s43
    %p52 = scmp.eq.s32.totalorder %s14, 1
    %p53 = por %p51, %p52
    %p54 = scmp.ne.s32.totalorder %s43, %s44
    %p55 = scmp.eq.s32.totalorder %s14, 0
    %p56 = por %p54, %p55
    %p57 = scmp.ne.s32.totalorder %s43, %s44
    %p58 = scmp.eq.s32.totalorder %s15, 1
    %p59 = por %p57, %p58
    %p61 = scmp.ne.s32.totalorder %s44, %s60
    %p62 = scmp.eq.s32.totalorder %s15, 0
    %p63 = por %p61, %p62
    %s64 = ssub.s32 %s9, %s16
    %p65 = scmp.eq.s32.totalorder %s64, 0
    %s67 = sadd.s32 %s66, 1
    %s68 = scalar_select %p65, %s66, %s67
    %p71 = pneg %p65
    %p72 = scmp.eq.s32.totalorder %s9, 1
    %p73 = por %p71, %p72
    %p74 = scmp.ne.s32.totalorder %s66, %s69
    %p75 = scmp.eq.s32.totalorder %s9, 0
    %p76 = por %p74, %p75
    %p77 = scmp.ne.s32.totalorder %s66, %s69
    %p78 = scmp.eq.s32.totalorder %s14, 1
    %p79 = por %p77, %p78
    %p80 = scmp.ne.s32.totalorder %s69, %s70
    %p81 = scmp.eq.s32.totalorder %s14, 0
    %p82 = por %p80, %p81
    %p83 = scmp.ne.s32.totalorder %s69, %s70
    %p84 = scmp.eq.s32.totalorder %s15, 1
    %p85 = por %p83, %p84
    %p87 = scmp.ne.s32.totalorder %s70, %s86
    %p88 = scmp.eq.s32.totalorder %s15, 0
    %p89 = por %p87, %p88
    %s90 = ssub.s32 %s9, %s16
    %p91 = scmp.eq.s32.totalorder %s90, 0
    %s93 = sadd.s32 %s92, 1
    %s94 = scalar_select %p91, %s92, %s93
    %p97 = pneg %p91
    %p98 = scmp.eq.s32.totalorder %s9, 1
    %p99 = por %p97, %p98
    %p100 = scmp.ne.s32.totalorder %s92, %s95
    %p101 = scmp.eq.s32.totalorder %s9, 0
    %p102 = por %p100, %p101
    %p103 = scmp.ne.s32.totalorder %s92, %s95
    %p104 = scmp.eq.s32.totalorder %s14, 1
    %p105 = por %p103, %p104
    %p106 = scmp.ne.s32.totalorder %s95, %s96
    %p107 = scmp.eq.s32.totalorder %s14, 0
    %p108 = por %p106, %p107
    %p109 = scmp.ne.s32.totalorder %s95, %s96
    %p110 = scmp.eq.s32.totalorder %s15, 1
    %p111 = por %p109, %p110
    %p113 = scmp.ne.s32.totalorder %s96, %s112
    %p114 = scmp.eq.s32.totalorder %s15, 0
    %p115 = por %p113, %p114
    %p116 = scmp.le.s32.totalorder 1, %s9
    %p117 = scmp.lt.s32.totalorder %s9, 3
    %p118 = pnand %p116, %p117
    %p119 = pneg %p118
    // Predicated region
    $region9: #{_lambda_.6} parent=5 // pred_check
      _
    $region10: #{_lambda_.6} parent=5 // pred_check_branch
      %121 = sbr.rel (%p118) target = $region12
    $region11: #{_lambda_.6} parent=5 // pred_region
      %s122 = ssub.s32 %s9, 1
      // Predicated region
      $region13: #{_lambda_.6} parent=11 // pred_check
        %p123 = pneg %p30
      $region14: #{_lambda_.6} parent=11 // pred_check_branch
        %125 = sbr.rel (%p123) target = $region16
      $region15: #{_lambda_.6} parent=11 // pred_region
        _
      $region16: #{_lambda_.6} parent=11 // pred_fallthru
        _
    $region12: #{_lambda_.6} parent=5 // pred_fallthru
      _
    %p126 = scmp.lt.s32.totalorder %s9, 2
    // Predicated region
    $region17: #{_lambda_.6} parent=5 // pred_check
      %p127 = pneg %p126
    $region18: #{_lambda_.6} parent=5 // pred_check_branch
      %129 = sbr.rel (%p127) target = $region20
    $region19: #{_lambda_.6} parent=5 // pred_region
      // Predicated region
      $region21: #{_lambda_.6} parent=19 // pred_check
        %p130 = pneg %p50
      $region22: #{_lambda_.6} parent=19 // pred_check_branch
        %132 = sbr.rel (%p130) target = $region24
      $region23: #{_lambda_.6} parent=19 // pred_region
        %p133 = scmp.lt.s32.totalorder %s9, 1
        %s134 = scalar_select %p133, %s9, 1
        %s135 = smul.addr %s134, 4
        %s136 = smul.addr %s135, 4
        %s137 = scalar_lea.vmem %s1, %s136
      $region24: #{_lambda_.6} parent=19 // pred_fallthru
        _
      // Predicated region
      $region25: #{_lambda_.6} parent=19 // pred_check
        %p138 = pneg %p76
      $region26: #{_lambda_.6} parent=19 // pred_check_branch
        %140 = sbr.rel (%p138) target = $region28
      $region27: #{_lambda_.6} parent=19 // pred_region
        %p141 = scmp.lt.s32.totalorder %s9, 1
        %s142 = scalar_select %p141, %s9, 1
        %s143 = scalar_lea.vmem %s2, %s142
      $region28: #{_lambda_.6} parent=19 // pred_fallthru
        _
    $region20: #{_lambda_.6} parent=5 // pred_fallthru
      _
    %p144 = scmp.le.s32.totalorder 1, %s9
    %p145 = scmp.lt.s32.totalorder %s9, 3
    %p146 = pnand %p144, %p145
    %p147 = pneg %p146
    // Predicated region
    $region29: #{_lambda_.6} parent=5 // pred_check
      _
    $region30: #{_lambda_.6} parent=5 // pred_check_branch
      %149 = sbr.rel (%p146) target = $region32
    $region31: #{_lambda_.6} parent=5 // pred_region
      %s150 = ssub.s32 %s9, 1
      %p151 = pneg %p30
      %p152 = pneg %p27
      %p153 = scmp.lt.s32.totalorder %s14, 1
      %s154 = scalar_select %p153, %s14, 1
      %s155 = smul.addr %s154, 4
      %s156 = smul.addr %s155, 4
      %s157 = scalar_lea.vmem %s1, %s156
      %p158 = pneg %p56
      %p159 = pneg %p53
      %p160 = scmp.lt.s32.totalorder %s14, 1
      %s161 = scalar_select %p160, %s14, 1
      %s162 = scalar_lea.vmem %s2, %s161
      %p163 = pneg %p82
      %p164 = pneg %p79
      %p165 = pneg %p108
      %p166 = pneg %p105
      %p167 = scmp.lt.s32.totalorder %s14, 1
      %s168 = scalar_select %p167, %s14, 1
      %s169 = smul.addr %s168, 2
      %s170 = smul.addr %s169, 8
      %s171 = scalar_lea.vmem %s3, %s170
      %p172 = scmp.lt.s32.totalorder %s14, 1
      %s173 = scalar_select %p172, %s14, 1
      %s174 = smul.addr %s173, 4
      %s175 = smul.addr %s174, 4
      %s176 = scalar_lea.vmem %s1, %s175
      %p177 = scmp.lt.s32.totalorder %s14, 1
      %s178 = scalar_select %p177, %s14, 1
      %s179 = scalar_lea.vmem %s2, %s178
      %p180 = scmp.lt.s32.totalorder %s14, 1
      %s181 = scalar_select %p180, %s14, 1
      %s182 = smul.addr %s181, 2
      %s183 = smul.addr %s182, 8
      %s184 = scalar_lea.vmem %s3, %s183
      %v186 = vld [vmem:[%s0] sm:$0xff]
      %v187 = vld [vmem:[%s0 + $0x8] sm:$0xff]
      %v188 = vpack.c.bf16 %v187, %v186
      %v189 = vld [vmem:[%s176] sm:$0xf]
      %v190 = vld [vmem:[%s176 + $0x4] sm:$0xf]
      %v191 = vld [vmem:[%s176 + $0x8] sm:$0xf]
      %v192 = vld [vmem:[%s176 + $0xc] sm:$0xf]
      %v193 = vld [vmem:[%s179] sm:$0x1]
      %v195 = vlaneseq
      %v196 = vshrl.u32 %v195, 7
      %v197 = vsub.s32 0, %v196
      %v198 = vrot.slane %v193, %v197
      %v204 = vunpack.c.l.b16 %v189
      %v205 = vunpack.c.l.b16 %v190
      %v206 = vunpack.c.l.b16 %v191
      %v207 = vunpack.c.l.b16 %v192
      %v208 = vpack.c.b16 %v205, %v204
      %v209 = vpack.c.b16 %v207, %v206
      %vm212 = vcmask 261120
      %v214 = vsel %vm212, %v188, 0
      %216 = vmatprep.subr.bf16.mxu0 0
      %217 = vmatpush1.bf16.msra.mxu0 %v208
      %218 = vmatprep.subr.bf16.mxu0 0
      %219 = vmatpush1.bf16.msra.mxu0 %v209
      %220 = vmatprep.subr.bf16.mxu0 0
      %221 = vmatpush1.bf16.msra.mxu0 0
      %222 = vmatprep.subr.bf16.mxu0 0
      %223 = vmatpush1.bf16.msra.mxu0 0
      %224 = vmatprep.subr.bf16.mxu0 0
      %225 = vmatpush1.bf16.msra.mxu0 0
      %226 = vmatprep.subr.bf16.mxu0 0
      %227 = vmatpush1.bf16.msra.mxu0 0
      %228 = vmatprep.subr.bf16.mxu0 0
      %229 = vmatpush1.bf16.msra.mxu0 0
      %230 = vmatprep.subr.bf16.mxu0 0
      %231 = vmatpush1.bf16.msra.mxu0 0
      %232 = vmatprep.subr.bf16.mxu0 0
      %233 = vmatpush1.bf16.msra.mxu0 0
      %234 = vmatprep.subr.bf16.mxu0 0
      %235 = vmatpush1.bf16.msra.mxu0 0
      %236 = vmatprep.subr.bf16.mxu0 0
      %237 = vmatpush1.bf16.msra.mxu0 0
      %238 = vmatprep.subr.bf16.mxu0 0
      %239 = vmatpush1.bf16.msra.mxu0 0
      %240 = vmatprep.subr.bf16.mxu0 0
      %241 = vmatpush1.bf16.msra.mxu0 0
      %242 = vmatprep.subr.bf16.mxu0 0
      %243 = vmatpush1.bf16.msra.mxu0 0
      %244 = vmatprep.subr.bf16.mxu0 0
      %245 = vmatpush1.bf16.msra.mxu0 0
      %246 = vmatprep.subr.bf16.mxu0 0
      %247 = vmatpush1.bf16.msra.mxu0 0
      %248 = vmatprep.mubr.bf16.mxu0 0
      %249 = vmatmul.mubr.bf16.gmra.mrb[0].mxu0 %v214
      %v250 = vpop.f32.mrb[0].mxu0
      %v251 = vadd.f32 %v198, %v250
      %v252 = vpop.f32.mrb[0].mxu0
      %v253 = vpop.f32.mrb[0].mxu0
      %v254 = vadd.f32 %v198, %v253
      %v255 = vpop.f32.mrb[0].mxu0
      %256 = vdwg.mxu0
      %vm257 = vcmask 392192
      %258 = vst.msk [vmem:[%s184] sm:$0xff] %vm257, %v251
      %259 = vst.msk [vmem:[%s184 + $0x8] sm:$0xff] %vm257, %v254
      %p260 = scmp.lt.s32.totalorder %s14, 1
      %s261 = scalar_select %p260, %s14, 1
      %s262 = smul.addr %s261, 2
      %s263 = smul.addr %s262, 8
      %s264 = scalar_lea.vmem %s3, %s263
      // Predicated region
      $region33: #{_lambda_.6} parent=31 // pred_check
        %p265 = pneg %p105
      $region34: #{_lambda_.6} parent=31 // pred_check_branch
        %267 = sbr.rel (%p265) target = $region36
      $region35: #{_lambda_.6} parent=31 // pred_region
        _
      $region36: #{_lambda_.6} parent=31 // pred_fallthru
        _
    $region32: #{_lambda_.6} parent=5 // pred_fallthru
      _
    %p268 = scmp.le.s32.totalorder 2, %s9
    // Predicated region
    $region37: #{_lambda_.6} parent=5 // pred_check
      %p269 = pneg %p268
    $region38: #{_lambda_.6} parent=5 // pred_check_branch
      %271 = sbr.rel (%p269) target = $region40
    $region39: #{_lambda_.6} parent=5 // pred_region
      %s272 = ssub.s32 %s9, 2
      // Predicated region
      $region41: #{_lambda_.6} parent=39 // pred_check
        %p273 = pneg %p111
      $region42: #{_lambda_.6} parent=39 // pred_check_branch
        %275 = sbr.rel (%p273) target = $region44
      $region43: #{_lambda_.6} parent=39 // pred_region
        %p276 = scmp.lt.s32.totalorder %s15, 1
        %s277 = scalar_select %p276, %s15, 1
        %s278 = smul.addr %s277, 2
        %s279 = smul.addr %s278, 8
        %s280 = scalar_lea.vmem %s3, %s279
      $region44: #{_lambda_.6} parent=39 // pred_fallthru
        _
    $region40: #{_lambda_.6} parent=5 // pred_fallthru
      _
  $region6: #{_lambda_.6} parent=0 // loop_footer
    %s13 = sadd.s32 1, %s9
  $region7: #{_lambda_.6} parent=0 // loop_footer_branch
    %8 = sbr.rel target = $region3
  $region8: #{_lambda_.6} parent=0 // loop_exit
    _

// kernel: _lambda_.9
$region0: #{_lambda_.9}
  #allocation0 [shape = 'u32[]', space=smem, size = 0x4, offset = 0x4, fixed_abs, tag = 'smem constant byte address 0x4 - core index']
  #allocation1 [shape = 'u32[144,128]{1,0:T(1,128)}', space=vmem, size = 0x12000, scoped, tag = 'internal scratch']
  #allocation2 [shape = 'f32[2,32]{1,0:T(2,128)}', space=vmem, size = 0x400, scoped, tag = 'scratch operand']
  %s0 = inlined_call_operand.vmem [shape: f32[6,2,96], index: 0, kind: input, shape index: {}]
  %s1 = inlined_call_operand.vmem [shape: f32[2,32], index: 1, kind: input, shape index: {}]
  %s2 = inlined_call_operand.vmem [shape: f32[32,96], index: 2, kind: input, shape index: {}]
  %s3 = inlined_call_operand.vmem [shape: f32[1,96], index: 3, kind: input, shape index: {}]
  %s4 = inlined_call_operand.vmem [shape: f32[6,2,32], index: 4, kind: output, shape index: {}]
  %s5 = sld [smem:[#allocation0]]
  $region30: #{_lambda_.9} parent=0
    _
  %s7 = ssub.s32 1, %s5
  %s8 = scalar_select 0, %s7, %s5
  // Predicated region
  $region2: #{_lambda_.9} parent=0 // pred_check
    _
  $region3: #{_lambda_.9} parent=0 // pred_check_branch
    %10 = sbr.rel (0) target = $region5
  $region4: #{_lambda_.9} parent=0 // pred_region
    _
  $region5: #{_lambda_.9} parent=0 // pred_fallthru
    _
  // Predicated region
  $region6: #{_lambda_.9} parent=0 // pred_check
    _
  $region7: #{_lambda_.9} parent=0 // pred_check_branch
    %12 = sbr.rel (0) target = $region9
  $region8: #{_lambda_.9} parent=0 // pred_region
    _
  $region9: #{_lambda_.9} parent=0 // pred_fallthru
    _
  // Predicated region
  $region10: #{_lambda_.9} parent=0 // pred_check
    _
  $region11: #{_lambda_.9} parent=0 // pred_check_branch
    %14 = sbr.rel (0) target = $region13
  $region12: #{_lambda_.9} parent=0 // pred_region
    _
  $region13: #{_lambda_.9} parent=0 // pred_fallthru
    _
  // Predicated region
  $region14: #{_lambda_.9} parent=0 // pred_check
    _
  $region15: #{_lambda_.9} parent=0 // pred_check_branch
    %16 = sbr.rel (0) target = $region17
  $region16: #{_lambda_.9} parent=0 // pred_region
    _
  $region17: #{_lambda_.9} parent=0 // pred_fallthru
    _
  %p17 = scmp.eq.s32.totalorder 0, 0
  // Predicated region
  $region18: #{_lambda_.9} parent=0 // pred_check
    %p18 = pneg %p17
  $region19: #{_lambda_.9} parent=0 // pred_check_branch
    %20 = sbr.rel (%p18) target = $region21
  $region20: #{_lambda_.9} parent=0 // pred_region
    %v21 = vld [vmem:[%s1] sm:$0x3]
    %vm22 = vcmask 254976
    %23 = vst.msk [vmem:[#allocation2] sm:$0x3] %vm22, %v21
  $region21: #{_lambda_.9} parent=0 // pred_fallthru
    _
  %v24 = vld [vmem:[%s2] sm:$0xff]
  %v25 = vld [vmem:[%s2 + $0x8] sm:$0xff]
  %v26 = vld [vmem:[%s2 + $0x10] sm:$0xff]
  %v27 = vld [vmem:[%s2 + $0x18] sm:$0xff]
  %v28 = vld [vmem:[%s3] sm:$0x1]
  %v29 = vld [vmem:[#allocation2] sm:$0x3]
  %v30 = vld [vmem:[%s0] sm:$0x3]
  %v32 = vlaneseq
  %v33 = vshrl.u32 %v32, 7
  %v34 = vsub.s32 0, %v33
  %v35 = vrot.slane %v28, %v34
  %vm37 = vcmask 261120
  %v39 = vsel %vm37, %v29, 0
  %41 = vmatprep.subr.mxu0 0.0
  %42 = vmatpush1.msra.mxu0 %v24
  %43 = vmatprep.subr.mxu0 0.0
  %44 = vmatpush1.msra.mxu0 %v25
  %45 = vmatprep.subr.mxu0 0.0
  %46 = vmatpush1.msra.mxu0 %v26
  %47 = vmatprep.subr.mxu0 0.0
  %48 = vmatpush1.msra.mxu0 %v27
  %49 = vmatprep.subr.mxu0 0.0
  %50 = vmatpush1.msra.mxu0 0.0
  %51 = vmatprep.subr.mxu0 0.0
  %52 = vmatpush1.msra.mxu0 0.0
  %53 = vmatprep.subr.mxu0 0.0
  %54 = vmatpush1.msra.mxu0 0.0
  %55 = vmatprep.subr.mxu0 0.0
  %56 = vmatpush1.msra.mxu0 0.0
  %57 = vmatprep.subr.mxu0 0.0
  %58 = vmatpush1.msra.mxu0 0.0
  %59 = vmatprep.subr.mxu0 0.0
  %60 = vmatpush1.msra.mxu0 0.0
  %61 = vmatprep.subr.mxu0 0.0
  %62 = vmatpush1.msra.mxu0 0.0
  %63 = vmatprep.subr.mxu0 0.0
  %64 = vmatpush1.msra.mxu0 0.0
  %65 = vmatprep.subr.mxu0 0.0
  %66 = vmatpush1.msra.mxu0 0.0
  %67 = vmatprep.subr.mxu0 0.0
  %68 = vmatpush1.msra.mxu0 0.0
  %69 = vmatprep.subr.mxu0 0.0
  %70 = vmatpush1.msra.mxu0 0.0
  %71 = vmatprep.subr.mxu0 0.0
  %72 = vmatpush1.msra.mxu0 0.0
  %73 = vmatprep.subr.mxu0 0.0
  %74 = vmatpush1.msra.mxu0 0.0
  %75 = vmatprep.subr.mxu0 0.0
  %76 = vmatpush1.msra.mxu0 0.0
  %77 = vmatprep.subr.mxu0 0.0
  %78 = vmatpush1.msra.mxu0 0.0
  %79 = vmatprep.subr.mxu0 0.0
  %80 = vmatpush1.msra.mxu0 0.0
  %81 = vmatprep.subr.mxu0 0.0
  %82 = vmatpush1.msra.mxu0 0.0
  %83 = vmatprep.subr.mxu0 0.0
  %84 = vmatpush1.msra.mxu0 0.0
  %85 = vmatprep.subr.mxu0 0.0
  %86 = vmatpush1.msra.mxu0 0.0
  %87 = vmatprep.subr.mxu0 0.0
  %88 = vmatpush1.msra.mxu0 0.0
  %89 = vmatprep.subr.mxu0 0.0
  %90 = vmatpush1.msra.mxu0 0.0
  %91 = vmatprep.subr.mxu0 0.0
  %92 = vmatpush1.msra.mxu0 0.0
  %93 = vmatprep.subr.mxu0 0.0
  %94 = vmatpush1.msra.mxu0 0.0
  %95 = vmatprep.subr.mxu0 0.0
  %96 = vmatpush1.msra.mxu0 0.0
  %97 = vmatprep.subr.mxu0 0.0
  %98 = vmatpush1.msra.mxu0 0.0
  %99 = vmatprep.subr.mxu0 0.0
  %100 = vmatpush1.msra.mxu0 0.0
  %101 = vmatprep.subr.mxu0 0.0
  %102 = vmatpush1.msra.mxu0 0.0
  %103 = vmatprep.subr.mxu0 0.0
  %104 = vmatpush1.msra.mxu0 0.0
  %105 = vmatprep.mubr.f32.mxu0 0.0
  %106 = vmatmul.mubr.f32.gmra.mrb[0].mxu0 %v39
  %v107 = vpop.f32.mrb[0].mxu0
  %v108 = vadd.f32 %v35, %v107
  %v109 = vpop.f32.mrb[0].mxu0
  %110 = vdwg.mxu0
  %v111 = vadd.f32 %v30, %v108
  %v112 = vxor.u32 %v111, 2147483648
  %v113 = vmul.f32 %v112, 1.442695
  %v114 = vpow.pop %v113
  %v115 = vadd.f32 %v114, 1.0
  %v116 = vrcp.pop %v115
  %v117 = vmul.f32 1.0, %v116
  %119 = vrot.lane.b32.xlu0 %v108, 64
  %v120 = vpop.permute.xlu0 %119
  %v122 = vmul.f32 %v117, %v120
  %124 = vrot.lane.b32.xlu0 %v122, 64
  %v125 = vpop.permute.xlu0 %124
  %v127 = vadd.f32 %v30, %v125
  %v128 = vtanh.pop %v127
  %v129 = vsub.f32 1.0, %v117
  %131 = vrot.lane.b32.xlu0 %v128, 96
  %v132 = vpop.permute.xlu0 %131
  %v134 = vmul.f32 %v129, %v132
  %135 = vrot.lane.b32.xlu0 %v29, 32
  %v136 = vpop.permute.xlu0 %135
  %v138 = vmul.f32 %v117, %v136
  %v139 = vadd.f32 %v134, %v138
  %141 = vrot.lane.b32.xlu0 %v139, 96
  %v142 = vpop.permute.xlu0 %141
  %vm144 = vcmask 254976
  %145 = vst.msk [vmem:[%s4] sm:$0x3] %vm144, %v142
  %s146 = scalar_lea.vmem %s0, 2
  %v147 = vld [vmem:[%s146] sm:$0x3]
  %v148 = vsel %vm37, %v142, 0
  %150 = vmatprep.subr.mxu0 0.0
  %151 = vmatpush1.msra.mxu0 %v24
  %152 = vmatprep.subr.mxu0 0.0
  %153 = vmatpush1.msra.mxu0 %v25
  %154 = vmatprep.subr.mxu0 0.0
  %155 = vmatpush1.msra.mxu0 %v26
  %156 = vmatprep.subr.mxu0 0.0
  %157 = vmatpush1.msra.mxu0 %v27
  %158 = vmatprep.subr.mxu0 0.0
  %159 = vmatpush1.msra.mxu0 0.0
  %160 = vmatprep.subr.mxu0 0.0
  %161 = vmatpush1.msra.mxu0 0.0
  %162 = vmatprep.subr.mxu0 0.0
  %163 = vmatpush1.msra.mxu0 0.0
  %164 = vmatprep.subr.mxu0 0.0
  %165 = vmatpush1.msra.mxu0 0.0
  %166 = vmatprep.subr.mxu0 0.0
  %167 = vmatpush1.msra.mxu0 0.0
  %168 = vmatprep.subr.mxu0 0.0
  %169 = vmatpush1.msra.mxu0 0.0
  %170 = vmatprep.subr.mxu0 0.0
  %171 = vmatpush1.msra.mxu0 0.0
  %172 = vmatprep.subr.mxu0 0.0
  %173 = vmatpush1.msra.mxu0 0.0
  %174 = vmatprep.subr.mxu0 0.0
  %175 = vmatpush1.msra.mxu0 0.0
  %176 = vmatprep.subr.mxu0 0.0
  %177 = vmatpush1.msra.mxu0 0.0
  %178 = vmatprep.subr.mxu0 0.0
  %179 = vmatpush1.msra.mxu0 0.0
  %180 = vmatprep.subr.mxu0 0.0
  %181 = vmatpush1.msra.mxu0 0.0
  %182 = vmatprep.subr.mxu0 0.0
  %183 = vmatpush1.msra.mxu0 0.0
  %184 = vmatprep.subr.mxu0 0.0
  %185 = vmatpush1.msra.mxu0 0.0
  %186 = vmatprep.subr.mxu0 0.0
  %187 = vmatpush1.msra.mxu0 0.0
  %188 = vmatprep.subr.mxu0 0.0
  %189 = vmatpush1.msra.mxu0 0.0
  %190 = vmatprep.subr.mxu0 0.0
  %191 = vmatpush1.msra.mxu0 0.0
  %192 = vmatprep.subr.mxu0 0.0
  %193 = vmatpush1.msra.mxu0 0.0
  %194 = vmatprep.subr.mxu0 0.0
  %195 = vmatpush1.msra.mxu0 0.0
  %196 = vmatprep.subr.mxu0 0.0
  %197 = vmatpush1.msra.mxu0 0.0
  %198 = vmatprep.subr.mxu0 0.0
  %199 = vmatpush1.msra.mxu0 0.0
  %200 = vmatprep.subr.mxu0 0.0
  %201 = vmatpush1.msra.mxu0 0.0
  %202 = vmatprep.subr.mxu0 0.0
  %203 = vmatpush1.msra.mxu0 0.0
  %204 = vmatprep.subr.mxu0 0.0
  %205 = vmatpush1.msra.mxu0 0.0
  %206 = vmatprep.subr.mxu0 0.0
  %207 = vmatpush1.msra.mxu0 0.0
  %208 = vmatprep.subr.mxu0 0.0
  %209 = vmatpush1.msra.mxu0 0.0
  %210 = vmatprep.subr.mxu0 0.0
  %211 = vmatpush1.msra.mxu0 0.0
  %212 = vmatprep.subr.mxu0 0.0
  %213 = vmatpush1.msra.mxu0 0.0
  %214 = vmatprep.mubr.f32.mxu0 0.0
  %215 = vmatmul.mubr.f32.gmra.mrb[0].mxu0 %v148
  %v216 = vpop.f32.mrb[0].mxu0
  %v217 = vadd.f32 %v35, %v216
  %v218 = vpop.f32.mrb[0].mxu0
  %219 = vdwg.mxu0
  %v220 = vadd.f32 %v147, %v217
  %v221 = vxor.u32 %v220, 2147483648
  %v222 = vmul.f32 %v221, 1.442695
  %v223 = vpow.pop %v222
  %v224 = vadd.f32 %v223, 1.0
  %v225 = vrcp.pop %v224
  %v226 = vmul.f32 1.0, %v225
  %228 = vrot.lane.b32.xlu0 %v217, 64
  %v229 = vpop.permute.xlu0 %228
  %v231 = vmul.f32 %v226, %v229
  %233 = vrot.lane.b32.xlu0 %v231, 64
  %v234 = vpop.permute.xlu0 %233
  %v236 = vadd.f32 %v147, %v234
  %v237 = vtanh.pop %v236
  %v238 = vsub.f32 1.0, %v226
  %240 = vrot.lane.b32.xlu0 %v237, 96
  %v241 = vpop.permute.xlu0 %240
  %v243 = vmul.f32 %v238, %v241
  %v244 = vmul.f32 %v226, %v139
  %v245 = vadd.f32 %v243, %v244
  %247 = vrot.lane.b32.xlu0 %v245, 96
  %v248 = vpop.permute.xlu0 %247
  %s250 = scalar_lea.vmem %s4, 2
  %251 = vst.msk [vmem:[%s250] sm:$0x3] %vm144, %v248
  %s252 = scalar_lea.vmem %s0, 4
  %v253 = vld [vmem:[%s252] sm:$0x3]
  %v254 = vsel %vm37, %v248, 0
  %256 = vmatprep.subr.mxu0 0.0
  %257 = vmatpush1.msra.mxu0 %v24
  %258 = vmatprep.subr.mxu0 0.0
  %259 = vmatpush1.msra.mxu0 %v25
  %260 = vmatprep.subr.mxu0 0.0
  %261 = vmatpush1.msra.mxu0 %v26
  %262 = vmatprep.subr.mxu0 0.0
  %263 = vmatpush1.msra.mxu0 %v27
  %264 = vmatprep.subr.mxu0 0.0
  %265 = vmatpush1.msra.mxu0 0.0
  %266 = vmatprep.subr.mxu0 0.0
  %267 = vmatpush1.msra.mxu0 0.0
  %268 = vmatprep.subr.mxu0 0.0
  %269 = vmatpush1.msra.mxu0 0.0
  %270 = vmatprep.subr.mxu0 0.0
  %271 = vmatpush1.msra.mxu0 0.0
  %272 = vmatprep.subr.mxu0 0.0
  %273 = vmatpush1.msra.mxu0 0.0
  %274 = vmatprep.subr.mxu0 0.0
  %275 = vmatpush1.msra.mxu0 0.0
  %276 = vmatprep.subr.mxu0 0.0
  %277 = vmatpush1.msra.mxu0 0.0
  %278 = vmatprep.subr.mxu0 0.0
  %279 = vmatpush1.msra.mxu0 0.0
  %280 = vmatprep.subr.mxu0 0.0
  %281 = vmatpush1.msra.mxu0 0.0
  %282 = vmatprep.subr.mxu0 0.0
  %283 = vmatpush1.msra.mxu0 0.0
  %284 = vmatprep.subr.mxu0 0.0
  %285 = vmatpush1.msra.mxu0 0.0
  %286 = vmatprep.subr.mxu0 0.0
  %287 = vmatpush1.msra.mxu0 0.0
  %288 = vmatprep.subr.mxu0 0.0
  %289 = vmatpush1.msra.mxu0 0.0
  %290 = vmatprep.subr.mxu0 0.0
  %291 = vmatpush1.msra.mxu0 0.0
  %292 = vmatprep.subr.mxu0 0.0
  %293 = vmatpush1.msra.mxu0 0.0
  %294 = vmatprep.subr.mxu0 0.0
  %295 = vmatpush1.msra.mxu0 0.0
  %296 = vmatprep.subr.mxu0 0.0
  %297 = vmatpush1.msra.mxu0 0.0
  %298 = vmatprep.subr.mxu0 0.0
  %299 = vmatpush1.msra.mxu0 0.0
  %300 = vmatprep.subr.mxu0 0.0
  %301 = vmatpush1.msra.mxu0 0.0
  %302 = vmatprep.subr.mxu0 0.0
  %303 = vmatpush1.msra.mxu0 0.0
  %304 = vmatprep.subr.mxu0 0.0
  %305 = vmatpush1.msra.mxu0 0.0
  %306 = vmatprep.subr.mxu0 0.0
  %307 = vmatpush1.msra.mxu0 0.0
  %308 = vmatprep.subr.mxu0 0.0
  %309 = vmatpush1.msra.mxu0 0.0
  %310 = vmatprep.subr.mxu0 0.0
  %311 = vmatpush1.msra.mxu0 0.0
  %312 = vmatprep.subr.mxu0 0.0
  %313 = vmatpush1.msra.mxu0 0.0
  %314 = vmatprep.subr.mxu0 0.0
  %315 = vmatpush1.msra.mxu0 0.0
  %316 = vmatprep.subr.mxu0 0.0
  %317 = vmatpush1.msra.mxu0 0.0
  %318 = vmatprep.subr.mxu0 0.0
  %319 = vmatpush1.msra.mxu0 0.0
  %320 = vmatprep.mubr.f32.mxu0 0.0
  %321 = vmatmul.mubr.f32.gmra.mrb[0].mxu0 %v254
  %v322 = vpop.f32.mrb[0].mxu0
  %v323 = vadd.f32 %v35, %v322
  %v324 = vpop.f32.mrb[0].mxu0
  %325 = vdwg.mxu0
  %v326 = vadd.f32 %v253, %v323
  %v327 = vxor.u32 %v326, 2147483648
  %v328 = vmul.f32 %v327, 1.442695
  %v329 = vpow.pop %v328
  %v330 = vadd.f32 %v329, 1.0
  %v331 = vrcp.pop %v330
  %v332 = vmul.f32 1.0, %v331
  %334 = vrot.lane.b32.xlu0 %v323, 64
  %v335 = vpop.permute.xlu0 %334
  %v337 = vmul.f32 %v332, %v335
  %339 = vrot.lane.b32.xlu0 %v337, 64
  %v340 = vpop.permute.xlu0 %339
  %v342 = vadd.f32 %v253, %v340
  %v343 = vtanh.pop %v342
  %v344 = vsub.f32 1.0, %v332
  %346 = vrot.lane.b32.xlu0 %v343, 96
  %v347 = vpop.permute.xlu0 %346
  %v349 = vmul.f32 %v344, %v347
  %v350 = vmul.f32 %v332, %v245
  %v351 = vadd.f32 %v349, %v350
  %353 = vrot.lane.b32.xlu0 %v351, 96
  %v354 = vpop.permute.xlu0 %353
  %s356 = scalar_lea.vmem %s4, 4
  %357 = vst.msk [vmem:[%s356] sm:$0x3] %vm144, %v354
  %s358 = scalar_lea.vmem %s0, 6
  %v359 = vld [vmem:[%s358] sm:$0x3]
  %v360 = vsel %vm37, %v354, 0
  %362 = vmatprep.subr.mxu0 0.0
  %363 = vmatpush1.msra.mxu0 %v24
  %364 = vmatprep.subr.mxu0 0.0
  %365 = vmatpush1.msra.mxu0 %v25
  %366 = vmatprep.subr.mxu0 0.0
  %367 = vmatpush1.msra.mxu0 %v26
  %368 = vmatprep.subr.mxu0 0.0
  %369 = vmatpush1.msra.mxu0 %v27
  %370 = vmatprep.subr.mxu0 0.0
  %371 = vmatpush1.msra.mxu0 0.0
  %372 = vmatprep.subr.mxu0 0.0
  %373 = vmatpush1.msra.mxu0 0.0
  %374 = vmatprep.subr.mxu0 0.0
  %375 = vmatpush1.msra.mxu0 0.0
  %376 = vmatprep.subr.mxu0 0.0
  %377 = vmatpush1.msra.mxu0 0.0
  %378 = vmatprep.subr.mxu0 0.0
  %379 = vmatpush1.msra.mxu0 0.0
  %380 = vmatprep.subr.mxu0 0.0
  %381 = vmatpush1.msra.mxu0 0.0
  %382 = vmatprep.subr.mxu0 0.0
  %383 = vmatpush1.msra.mxu0 0.0
  %384 = vmatprep.subr.mxu0 0.0
  %385 = vmatpush1.msra.mxu0 0.0
  %386 = vmatprep.subr.mxu0 0.0
  %387 = vmatpush1.msra.mxu0 0.0
  %388 = vmatprep.subr.mxu0 0.0
  %389 = vmatpush1.msra.mxu0 0.0
  %390 = vmatprep.subr.mxu0 0.0
  %391 = vmatpush1.msra.mxu0 0.0
  %392 = vmatprep.subr.mxu0 0.0
  %393 = vmatpush1.msra.mxu0 0.0
  %394 = vmatprep.subr.mxu0 0.0
  %395 = vmatpush1.msra.mxu0 0.0
  %396 = vmatprep.subr.mxu0 0.0
  %397 = vmatpush1.msra.mxu0 0.0
  %398 = vmatprep.subr.mxu0 0.0
  %399 = vmatpush1.msra.mxu0 0.0
  %400 = vmatprep.subr.mxu0 0.0
  %401 = vmatpush1.msra.mxu0 0.0
  %402 = vmatprep.subr.mxu0 0.0
  %403 = vmatpush1.msra.mxu0 0.0
  %404 = vmatprep.subr.mxu0 0.0
  %405 = vmatpush1.msra.mxu0 0.0
  %406 = vmatprep.subr.mxu0 0.0
  %407 = vmatpush1.msra.mxu0 0.0
  %408 = vmatprep.subr.mxu0 0.0
  %409 = vmatpush1.msra.mxu0 0.0
  %410 = vmatprep.subr.mxu0 0.0
  %411 = vmatpush1.msra.mxu0 0.0
  %412 = vmatprep.subr.mxu0 0.0
  %413 = vmatpush1.msra.mxu0 0.0
  %414 = vmatprep.subr.mxu0 0.0
  %415 = vmatpush1.msra.mxu0 0.0
  %416 = vmatprep.subr.mxu0 0.0
  %417 = vmatpush1.msra.mxu0 0.0
  %418 = vmatprep.subr.mxu0 0.0
  %419 = vmatpush1.msra.mxu0 0.0
  %420 = vmatprep.subr.mxu0 0.0
  %421 = vmatpush1.msra.mxu0 0.0
  %422 = vmatprep.subr.mxu0 0.0
  %423 = vmatpush1.msra.mxu0 0.0
  %424 = vmatprep.subr.mxu0 0.0
  %425 = vmatpush1.msra.mxu0 0.0
  %426 = vmatprep.mubr.f32.mxu0 0.0
  %427 = vmatmul.mubr.f32.gmra.mrb[0].mxu0 %v360
  %v428 = vpop.f32.mrb[0].mxu0
  %v429 = vadd.f32 %v35, %v428
  %v430 = vpop.f32.mrb[0].mxu0
  %431 = vdwg.mxu0
  %v432 = vadd.f32 %v359, %v429
  %v433 = vxor.u32 %v432, 2147483648
  %v434 = vmul.f32 %v433, 1.442695
  %v435 = vpow.pop %v434
  %v436 = vadd.f32 %v435, 1.0
  %v437 = vrcp.pop %v436
  %v438 = vmul.f32 1.0, %v437
  %440 = vrot.lane.b32.xlu0 %v429, 64
  %v441 = vpop.permute.xlu0 %440
  %v443 = vmul.f32 %v438, %v441
  %445 = vrot.lane.b32.xlu0 %v443, 64
  %v446 = vpop.permute.xlu0 %445
  %v448 = vadd.f32 %v359, %v446
  %v449 = vtanh.pop %v448
  %v450 = vsub.f32 1.0, %v438
  %452 = vrot.lane.b32.xlu0 %v449, 96
  %v453 = vpop.permute.xlu0 %452
  %v455 = vmul.f32 %v450, %v453
  %v456 = vmul.f32 %v438, %v351
  %v457 = vadd.f32 %v455, %v456
  %459 = vrot.lane.b32.xlu0 %v457, 96
  %v460 = vpop.permute.xlu0 %459
  %s462 = scalar_lea.vmem %s4, 6
  %463 = vst.msk [vmem:[%s462] sm:$0x3] %vm144, %v460
  %s464 = scalar_lea.vmem %s0, 8
  %v465 = vld [vmem:[%s464] sm:$0x3]
  %v466 = vsel %vm37, %v460, 0
  %468 = vmatprep.subr.mxu0 0.0
  %469 = vmatpush1.msra.mxu0 %v24
  %470 = vmatprep.subr.mxu0 0.0
  %471 = vmatpush1.msra.mxu0 %v25
  %472 = vmatprep.subr.mxu0 0.0
  %473 = vmatpush1.msra.mxu0 %v26
  %474 = vmatprep.subr.mxu0 0.0
  %475 = vmatpush1.msra.mxu0 %v27
  %476 = vmatprep.subr.mxu0 0.0
  %477 = vmatpush1.msra.mxu0 0.0
  %478 = vmatprep.subr.mxu0 0.0
  %479 = vmatpush1.msra.mxu0 0.0
  %480 = vmatprep.subr.mxu0 0.0
  %481 = vmatpush1.msra.mxu0 0.0
  %482 = vmatprep.subr.mxu0 0.0
  %483 = vmatpush1.msra.mxu0 0.0
  %484 = vmatprep.subr.mxu0 0.0
  %485 = vmatpush1.msra.mxu0 0.0
  %486 = vmatprep.subr.mxu0 0.0
  %487 = vmatpush1.msra.mxu0 0.0
  %488 = vmatprep.subr.mxu0 0.0
  %489 = vmatpush1.msra.mxu0 0.0
  %490 = vmatprep.subr.mxu0 0.0
  %491 = vmatpush1.msra.mxu0 0.0
  %492 = vmatprep.subr.mxu0 0.0
  %493 = vmatpush1.msra.mxu0 0.0
  %494 = vmatprep.subr.mxu0 0.0
  %495 = vmatpush1.msra.mxu0 0.0
  %496 = vmatprep.subr.mxu0 0.0
  %497 = vmatpush1.msra.mxu0 0.0
  %498 = vmatprep.subr.mxu0 0.0
  %499 = vmatpush1.msra.mxu0 0.0
  %500 = vmatprep.subr.mxu0 0.0
  %501 = vmatpush1.msra.mxu0 0.0
  %502 = vmatprep.subr.mxu0 0.0
  %503 = vmatpush1.msra.mxu0 0.0
  %504 = vmatprep.subr.mxu0 0.0
  %505 = vmatpush1.msra.mxu0 0.0
  %506 = vmatprep.subr.mxu0 0.0
  %507 = vmatpush1.msra.mxu0 0.0
  %508 = vmatprep.subr.mxu0 0.0
  %509 = vmatpush1.msra.mxu0 0.0
  %510 = vmatprep.subr.mxu0 0.0
  %511 = vmatpush1.msra.mxu0 0.0
  %512 = vmatprep.subr.mxu0 0.0
  %513 = vmatpush1.msra.mxu0 0.0
  %514 = vmatprep.subr.mxu0 0.0
  %515 = vmatpush1.msra.mxu0 0.0
  %516 = vmatprep.subr.mxu0 0.0
  %517 = vmatpush1.msra.mxu0 0.0
  %518 = vmatprep.subr.mxu0 0.0
  %519 = vmatpush1.msra.mxu0 0.0
  %520 = vmatprep.subr.mxu0 0.0
  %521 = vmatpush1.msra.mxu0 0.0
  %522 = vmatprep.subr.mxu0 0.0
  %523 = vmatpush1.msra.mxu0 0.0
  %524 = vmatprep.subr.mxu0 0.0
  %525 = vmatpush1.msra.mxu0 0.0
  %526 = vmatprep.subr.mxu0 0.0
  %527 = vmatpush1.msra.mxu0 0.0
  %528 = vmatprep.subr.mxu0 0.0
  %529 = vmatpush1.msra.mxu0 0.0
  %530 = vmatprep.subr.mxu0 0.0
  %531 = vmatpush1.msra.mxu0 0.0
  %532 = vmatprep.mubr.f32.mxu0 0.0
  %533 = vmatmul.mubr.f32.gmra.mrb[0].mxu0 %v466
  %v534 = vpop.f32.mrb[0].mxu0
  %v535 = vadd.f32 %v35, %v534
  %v536 = vpop.f32.mrb[0].mxu0
  %537 = vdwg.mxu0
  %v538 = vadd.f32 %v465, %v535
  %v539 = vxor.u32 %v538, 2147483648
  %v540 = vmul.f32 %v539, 1.442695
  %v541 = vpow.pop %v540
  %v542 = vadd.f32 %v541, 1.0
  %v543 = vrcp.pop %v542
  %v544 = vmul.f32 1.0, %v543
  %546 = vrot.lane.b32.xlu0 %v535, 64
  %v547 = vpop.permute.xlu0 %546
  %v549 = vmul.f32 %v544, %v547
  %551 = vrot.lane.b32.xlu0 %v549, 64
  %v552 = vpop.permute.xlu0 %551
  %v554 = vadd.f32 %v465, %v552
  %v555 = vtanh.pop %v554
  %v556 = vsub.f32 1.0, %v544
  %558 = vrot.lane.b32.xlu0 %v555, 96
  %v559 = vpop.permute.xlu0 %558
  %v561 = vmul.f32 %v556, %v559
  %v562 = vmul.f32 %v544, %v457
  %v563 = vadd.f32 %v561, %v562
  %565 = vrot.lane.b32.xlu0 %v563, 96
  %v566 = vpop.permute.xlu0 %565
  %s568 = scalar_lea.vmem %s4, 8
  %569 = vst.msk [vmem:[%s568] sm:$0x3] %vm144, %v566
  %s570 = scalar_lea.vmem %s0, 10
  %v571 = vld [vmem:[%s570] sm:$0x3]
  %v572 = vsel %vm37, %v566, 0
  %574 = vmatprep.subr.mxu0 0.0
  %575 = vmatpush1.msra.mxu0 %v24
  %576 = vmatprep.subr.mxu0 0.0
  %577 = vmatpush1.msra.mxu0 %v25
  %578 = vmatprep.subr.mxu0 0.0
  %579 = vmatpush1.msra.mxu0 %v26
  %580 = vmatprep.subr.mxu0 0.0
  %581 = vmatpush1.msra.mxu0 %v27
  %582 = vmatprep.subr.mxu0 0.0
  %583 = vmatpush1.msra.mxu0 0.0
  %584 = vmatprep.subr.mxu0 0.0
  %585 = vmatpush1.msra.mxu0 0.0
  %586 = vmatprep.subr.mxu0 0.0
  %587 = vmatpush1.msra.mxu0 0.0
  %588 = vmatprep.subr.mxu0 0.0
  %589 = vmatpush1.msra.mxu0 0.0
  %590 = vmatprep.subr.mxu0 0.0
  %591 = vmatpush1.msra.mxu0 0.0
  %592 = vmatprep.subr.mxu0 0.0
  %593 = vmatpush1.msra.mxu0 0.0
  %594 = vmatprep.subr.mxu0 0.0
  %595 = vmatpush1.msra.mxu0 0.0
  %596 = vmatprep.subr.mxu0 0.0
  %597 = vmatpush1.msra.mxu0 0.0
  %598 = vmatprep.subr.mxu0 0.0
  %599 = vmatpush1.msra.mxu0 0.0
  %600 = vmatprep.subr.mxu0 0.0
  %601 = vmatpush1.msra.mxu0 0.0
  %602 = vmatprep.subr.mxu0 0.0
  %603 = vmatpush1.msra.mxu0 0.0
  %604 = vmatprep.subr.mxu0 0.0
  %605 = vmatpush1.msra.mxu0 0.0
  %606 = vmatprep.subr.mxu0 0.0
  %607 = vmatpush1.msra.mxu0 0.0
  %608 = vmatprep.subr.mxu0 0.0
  %609 = vmatpush1.msra.mxu0 0.0
  %610 = vmatprep.subr.mxu0 0.0
  %611 = vmatpush1.msra.mxu0 0.0
  %612 = vmatprep.subr.mxu0 0.0
  %613 = vmatpush1.msra.mxu0 0.0
  %614 = vmatprep.subr.mxu0 0.0
  %615 = vmatpush1.msra.mxu0 0.0
  %616 = vmatprep.subr.mxu0 0.0
  %617 = vmatpush1.msra.mxu0 0.0
  %618 = vmatprep.subr.mxu0 0.0
  %619 = vmatpush1.msra.mxu0 0.0
  %620 = vmatprep.subr.mxu0 0.0
  %621 = vmatpush1.msra.mxu0 0.0
  %622 = vmatprep.subr.mxu0 0.0
  %623 = vmatpush1.msra.mxu0 0.0
  %624 = vmatprep.subr.mxu0 0.0
  %625 = vmatpush1.msra.mxu0 0.0
  %626 = vmatprep.subr.mxu0 0.0
  %627 = vmatpush1.msra.mxu0 0.0
  %628 = vmatprep.subr.mxu0 0.0
  %629 = vmatpush1.msra.mxu0 0.0
  %630 = vmatprep.subr.mxu0 0.0
  %631 = vmatpush1.msra.mxu0 0.0
  %632 = vmatprep.subr.mxu0 0.0
  %633 = vmatpush1.msra.mxu0 0.0
  %634 = vmatprep.subr.mxu0 0.0
  %635 = vmatpush1.msra.mxu0 0.0
  %636 = vmatprep.subr.mxu0 0.0
  %637 = vmatpush1.msra.mxu0 0.0
  %638 = vmatprep.mubr.f32.mxu0 0.0
  %639 = vmatmul.mubr.f32.gmra.mrb[0].mxu0 %v572
  %v640 = vpop.f32.mrb[0].mxu0
  %v641 = vadd.f32 %v35, %v640
  %v642 = vpop.f32.mrb[0].mxu0
  %643 = vdwg.mxu0
  %v644 = vadd.f32 %v571, %v641
  %v645 = vxor.u32 %v644, 2147483648
  %v646 = vmul.f32 %v645, 1.442695
  %v647 = vpow.pop %v646
  %v648 = vadd.f32 %v647, 1.0
  %v649 = vrcp.pop %v648
  %v650 = vmul.f32 1.0, %v649
  %652 = vrot.lane.b32.xlu0 %v641, 64
  %v653 = vpop.permute.xlu0 %652
  %v655 = vmul.f32 %v650, %v653
  %657 = vrot.lane.b32.xlu0 %v655, 64
  %v658 = vpop.permute.xlu0 %657
  %v660 = vadd.f32 %v571, %v658
  %v661 = vtanh.pop %v660
  %v662 = vsub.f32 1.0, %v650
  %664 = vrot.lane.b32.xlu0 %v661, 96
  %v665 = vpop.permute.xlu0 %664
  %v667 = vmul.f32 %v662, %v665
  %v668 = vmul.f32 %v650, %v563
  %v669 = vadd.f32 %v667, %v668
  %671 = vrot.lane.b32.xlu0 %v669, 96
  %v672 = vpop.permute.xlu0 %671
  %s674 = scalar_lea.vmem %s4, 10
  %675 = vst.msk [vmem:[%s674] sm:$0x3] %vm144, %v672
  %676 = vst.msk [vmem:[#allocation2] sm:$0x3] %vm144, %v672
  // Predicated region
  $region22: #{_lambda_.9} parent=0 // pred_check
    _
  $region23: #{_lambda_.9} parent=0 // pred_check_branch
    %678 = sbr.rel (0) target = $region25
  $region24: #{_lambda_.9} parent=0 // pred_region
    _
  $region25: #{_lambda_.9} parent=0 // pred_fallthru
    _
  // Predicated region
  $region26: #{_lambda_.9} parent=0 // pred_check
    _
  $region27: #{_lambda_.9} parent=0 // pred_check_branch
    %680 = sbr.rel (0) target = $region29
  $region28: #{_lambda_.9} parent=0 // pred_region
    _
  $region29: #{_lambda_.9} parent=0 // pred_fallthru
    _

// kernel: _lambda_.11
$region0: #{_lambda_.11}
  #allocation0 [shape = 'u32[]', space=smem, size = 0x4, offset = 0x4, fixed_abs, tag = 'smem constant byte address 0x4 - core index']
  #allocation1 [shape = 'u32[144,128]{1,0:T(1,128)}', space=vmem, size = 0x12000, scoped, tag = 'internal scratch']
  %s0 = inlined_call_operand.vmem [shape: f32[12,32], index: 0, kind: input, shape index: {}]
  %s1 = inlined_call_operand.vmem [shape: bf16[32,20], index: 1, kind: input, shape index: {}]
  %s2 = inlined_call_operand.vmem [shape: f32[1,20], index: 2, kind: input, shape index: {}]
  %s3 = inlined_call_operand.vmem [shape: f32[12,20], index: 3, kind: output, shape index: {}]
  %s4 = sld [smem:[#allocation0]]
  $region22: #{_lambda_.11} parent=0
    _
  %s6 = ssub.s32 1, %s4
  %s7 = scalar_select 0, %s6, %s4
  // Predicated region
  $region2: #{_lambda_.11} parent=0 // pred_check
    _
  $region3: #{_lambda_.11} parent=0 // pred_check_branch
    %9 = sbr.rel (0) target = $region5
  $region4: #{_lambda_.11} parent=0 // pred_region
    _
  $region5: #{_lambda_.11} parent=0 // pred_fallthru
    _
  // Predicated region
  $region6: #{_lambda_.11} parent=0 // pred_check
    _
  $region7: #{_lambda_.11} parent=0 // pred_check_branch
    %11 = sbr.rel (0) target = $region9
  $region8: #{_lambda_.11} parent=0 // pred_region
    _
  $region9: #{_lambda_.11} parent=0 // pred_fallthru
    _
  // Predicated region
  $region10: #{_lambda_.11} parent=0 // pred_check
    _
  $region11: #{_lambda_.11} parent=0 // pred_check_branch
    %13 = sbr.rel (0) target = $region13
  $region12: #{_lambda_.11} parent=0 // pred_region
    _
  $region13: #{_lambda_.11} parent=0 // pred_fallthru
    _
  %v15 = vld [vmem:[%s0] sm:$0xff]
  %v16 = vld [vmem:[%s0 + $0x8] sm:$0xf]
  %v17 = vpack.c.bf16 %v16, %v15
  %v18 = vld [vmem:[%s1] sm:$0xf]
  %v19 = vld [vmem:[%s1 + $0x4] sm:$0xf]
  %v20 = vld [vmem:[%s1 + $0x8] sm:$0xf]
  %v21 = vld [vmem:[%s1 + $0xc] sm:$0xf]
  %v22 = vld [vmem:[%s2] sm:$0x1]
  %v24 = vlaneseq
  %v25 = vshrl.u32 %v24, 7
  %v26 = vsub.s32 0, %v25
  %v27 = vrot.slane %v22, %v26
  %v33 = vunpack.c.l.b16 %v18
  %v34 = vunpack.c.l.b16 %v19
  %v35 = vunpack.c.l.b16 %v20
  %v36 = vunpack.c.l.b16 %v21
  %v37 = vpack.c.b16 %v34, %v33
  %v38 = vpack.c.b16 %v36, %v35
  %vm41 = vcmask 261120
  %v43 = vsel %vm41, %v17, 0
  %45 = vmatprep.subr.bf16.mxu0 0
  %46 = vmatpush1.bf16.msra.mxu0 %v37
  %47 = vmatprep.subr.bf16.mxu0 0
  %48 = vmatpush1.bf16.msra.mxu0 %v38
  %49 = vmatprep.subr.bf16.mxu0 0
  %50 = vmatpush1.bf16.msra.mxu0 0
  %51 = vmatprep.subr.bf16.mxu0 0
  %52 = vmatpush1.bf16.msra.mxu0 0
  %53 = vmatprep.subr.bf16.mxu0 0
  %54 = vmatpush1.bf16.msra.mxu0 0
  %55 = vmatprep.subr.bf16.mxu0 0
  %56 = vmatpush1.bf16.msra.mxu0 0
  %57 = vmatprep.subr.bf16.mxu0 0
  %58 = vmatpush1.bf16.msra.mxu0 0
  %59 = vmatprep.subr.bf16.mxu0 0
  %60 = vmatpush1.bf16.msra.mxu0 0
  %61 = vmatprep.subr.bf16.mxu0 0
  %62 = vmatpush1.bf16.msra.mxu0 0
  %63 = vmatprep.subr.bf16.mxu0 0
  %64 = vmatpush1.bf16.msra.mxu0 0
  %65 = vmatprep.subr.bf16.mxu0 0
  %66 = vmatpush1.bf16.msra.mxu0 0
  %67 = vmatprep.subr.bf16.mxu0 0
  %68 = vmatpush1.bf16.msra.mxu0 0
  %69 = vmatprep.subr.bf16.mxu0 0
  %70 = vmatpush1.bf16.msra.mxu0 0
  %71 = vmatprep.subr.bf16.mxu0 0
  %72 = vmatpush1.bf16.msra.mxu0 0
  %73 = vmatprep.subr.bf16.mxu0 0
  %74 = vmatpush1.bf16.msra.mxu0 0
  %75 = vmatprep.subr.bf16.mxu0 0
  %76 = vmatpush1.bf16.msra.mxu0 0
  %77 = vmatprep.mubr.bf16.mxu0 0
  %78 = vmatmul.mubr.bf16.gmra.mrb[0].mxu0 %v43
  %v79 = vpop.f32.mrb[0].mxu0
  %v80 = vadd.f32 %v27, %v79
  %v81 = vpop.f32.mrb[0].mxu0
  %v82 = vpop.f32.mrb[0].mxu0
  %v83 = vadd.f32 %v27, %v82
  %v84 = vpop.f32.mrb[0].mxu0
  %85 = vdwg.mxu0
  %vm86 = vcmask 162816
  %87 = vst.msk [vmem:[%s3] sm:$0xff] %vm86, %v80
  %vm88 = vcmask 158720
  %89 = vst.msk [vmem:[%s3 + $0x8] sm:$0xf] %vm88, %v83
  // Predicated region
  $region14: #{_lambda_.11} parent=0 // pred_check
    _
  $region15: #{_lambda_.11} parent=0 // pred_check_branch
    %91 = sbr.rel (0) target = $region17
  $region16: #{_lambda_.11} parent=0 // pred_region
    _
  $region17: #{_lambda_.11} parent=0 // pred_fallthru
    _
  // Predicated region
  $region18: #{_lambda_.11} parent=0 // pred_check
    _
  $region19: #{_lambda_.11} parent=0 // pred_check_branch
    %93 = sbr.rel (0) target = $region21
  $region20: #{_lambda_.11} parent=0 // pred_region
    _
  $region21: #{_lambda_.11} parent=0 // pred_fallthru
    _

// kernel: _lambda_.7
$region0: #{_lambda_.7}
  #allocation0 [shape = 'u32[]', space=smem, size = 0x4, offset = 0x4, fixed_abs, tag = 'smem constant byte address 0x4 - core index']
  #allocation1 [shape = 'u32[144,128]{1,0:T(1,128)}', space=vmem, size = 0x12000, scoped, tag = 'internal scratch']
  #allocation2 [shape = 'f32[2,16]{1,0:T(2,128)}', space=vmem, size = 0x400, scoped, tag = 'scratch operand']
  %s0 = inlined_call_operand.vmem [shape: f32[2,8,2,48], index: 0, kind: input, shape index: {}]
  %s1 = inlined_call_operand.vmem [shape: f32[2,16,48], index: 1, kind: input, shape index: {}]
  %s2 = inlined_call_operand.vmem [shape: f32[2,1,48], index: 2, kind: input, shape index: {}]
  %s3 = inlined_call_operand.vmem [shape: f32[2,8,2,16], index: 3, kind: output, shape index: {}]
  %s4 = sld [smem:[#allocation0]]
  $region57: #{_lambda_.7} parent=0
    _
  %s6 = ssub.s32 1, %s4
  %s7 = scalar_select 0, %s6, %s4
  loop: start=0, step=1, limit=4
  $region2: #{_lambda_.7} parent=0 // loop_pre_header
    _
  $region3: #{_lambda_.7} parent=0 // loop_header
    %s9 = sphi 0, %s13
    %p10 = scmp.ge.s32.totalorder %s9, 4
    %s16 = sphi 0, %s28
    %s17 = sphi 0, %s24
    %s18 = sphi 0, %s16
    %s19 = sphi 0, %s17
    %s20 = sphi 0, %s18
    %s21 = sphi 0, %s19
    %s41 = sphi 0, %s43
    %s44 = sphi 0, %s41
    %s45 = sphi 0, %s44
    %s61 = sphi 0, %s45
    %s67 = sphi 0, %s69
    %s70 = sphi 0, %s67
    %s71 = sphi 0, %s70
    %s87 = sphi 0, %s71
    %s93 = sphi 0, %s95
    %s96 = sphi 0, %s93
    %s97 = sphi 0, %s96
    %s113 = sphi 0, %s97
    %s129 = sphi 0, %s131
    %s132 = sphi 0, %s129
    %s133 = sphi 0, %s132
    %s149 = sphi 0, %s133
  $region4: #{_lambda_.7} parent=0 // loop_header_branch
    %12 = sbr.rel (%p10) target = $region8
  $region5: #{_lambda_.7} parent=0 // loop_body
    %s14 = ssub.s32 %s9, 1
    %s15 = ssub.s32 %s9, 2
    %s22 = sadd.s32 1, %s17
    %p23 = scmp.ge.s32.totalorder %s22, 1
    %s24 = scalar_select %p23, 0, %s22
    %s25 = sadd.s32 1, %s16
    %s26 = scalar_select %p23, %s25, %s16
    %p27 = scmp.ge.s32.totalorder %s26, 2
    %s28 = scalar_select %p27, 0, %s26
    %s29 = smul.u32 %s17, 2
    %s30 = ssub.s32 0, %s29
    %s31 = smul.u32 %s16, %s30
    %s32 = sadd.s32 %s17, %s31
    %s33 = smul.u32 %s24, 2
    %s34 = ssub.s32 0, %s33
    %s35 = smul.u32 %s28, %s34
    %s36 = sadd.s32 %s24, %s35
    %s37 = ssub.s32 %s16, %s28
    %s38 = ssub.s32 %s32, %s36
    %s39 = sor.u32 %s37, %s38
    %p40 = scmp.eq.s32.totalorder %s39, 0
    %s42 = sadd.s32 %s41, 1
    %s43 = scalar_select %p40, %s41, %s42
    %p46 = pneg %p40
    %p47 = scmp.eq.s32.totalorder %s9, 1
    %p48 = por %p46, %p47
    %p49 = scmp.ne.s32.totalorder %s41, %s44
    %p50 = scmp.eq.s32.totalorder %s9, 0
    %p51 = por %p49, %p50
    %p52 = scmp.ne.s32.totalorder %s41, %s44
    %p53 = scmp.eq.s32.totalorder %s14, 1
    %p54 = por %p52, %p53
    %p55 = scmp.ne.s32.totalorder %s44, %s45
    %p56 = scmp.eq.s32.totalorder %s14, 0
    %p57 = por %p55, %p56
    %p58 = scmp.ne.s32.totalorder %s44, %s45
    %p59 = scmp.eq.s32.totalorder %s15, 1
    %p60 = por %p58, %p59
    %p62 = scmp.ne.s32.totalorder %s45, %s61
    %p63 = scmp.eq.s32.totalorder %s15, 0
    %p64 = por %p62, %p63
    %s65 = ssub.s32 %s16, %s28
    %p66 = scmp.eq.s32.totalorder %s65, 0
    %s68 = sadd.s32 %s67, 1
    %s69 = scalar_select %p66, %s67, %s68
    %p72 = pneg %p66
    %p73 = scmp.eq.s32.totalorder %s9, 1
    %p74 = por %p72, %p73
    %p75 = scmp.ne.s32.totalorder %s67, %s70
    %p76 = scmp.eq.s32.totalorder %s9, 0
    %p77 = por %p75, %p76
    %p78 = scmp.ne.s32.totalorder %s67, %s70
    %p79 = scmp.eq.s32.totalorder %s14, 1
    %p80 = por %p78, %p79
    %p81 = scmp.ne.s32.totalorder %s70, %s71
    %p82 = scmp.eq.s32.totalorder %s14, 0
    %p83 = por %p81, %p82
    %p84 = scmp.ne.s32.totalorder %s70, %s71
    %p85 = scmp.eq.s32.totalorder %s15, 1
    %p86 = por %p84, %p85
    %p88 = scmp.ne.s32.totalorder %s71, %s87
    %p89 = scmp.eq.s32.totalorder %s15, 0
    %p90 = por %p88, %p89
    %s91 = ssub.s32 %s16, %s28
    %p92 = scmp.eq.s32.totalorder %s91, 0
    %s94 = sadd.s32 %s93, 1
    %s95 = scalar_select %p92, %s93, %s94
    %p98 = pneg %p92
    %p99 = scmp.eq.s32.totalorder %s9, 1
    %p100 = por %p98, %p99
    %p101 = scmp.ne.s32.totalorder %s93, %s96
    %p102 = scmp.eq.s32.totalorder %s9, 0
    %p103 = por %p101, %p102
    %p104 = scmp.ne.s32.totalorder %s93, %s96
    %p105 = scmp.eq.s32.totalorder %s14, 1
    %p106 = por %p104, %p105
    %p107 = scmp.ne.s32.totalorder %s96, %s97
    %p108 = scmp.eq.s32.totalorder %s14, 0
    %p109 = por %p107, %p108
    %p110 = scmp.ne.s32.totalorder %s96, %s97
    %p111 = scmp.eq.s32.totalorder %s15, 1
    %p112 = por %p110, %p111
    %p114 = scmp.ne.s32.totalorder %s97, %s113
    %p115 = scmp.eq.s32.totalorder %s15, 0
    %p116 = por %p114, %p115
    %s117 = smul.u32 %s17, 2
    %s118 = ssub.s32 0, %s117
    %s119 = smul.u32 %s16, %s118
    %s120 = sadd.s32 %s17, %s119
    %s121 = smul.u32 %s24, 2
    %s122 = ssub.s32 0, %s121
    %s123 = smul.u32 %s28, %s122
    %s124 = sadd.s32 %s24, %s123
    %s125 = ssub.s32 %s16, %s28
    %s126 = ssub.s32 %s120, %s124
    %s127 = sor.u32 %s125, %s126
    %p128 = scmp.eq.s32.totalorder %s127, 0
    %s130 = sadd.s32 %s129, 1
    %s131 = scalar_select %p128, %s129, %s130
    %p134 = pneg %p128
    %p135 = scmp.eq.s32.totalorder %s9, 1
    %p136 = por %p134, %p135
    %p137 = scmp.ne.s32.totalorder %s129, %s132
    %p138 = scmp.eq.s32.totalorder %s9, 0
    %p139 = por %p137, %p138
    %p140 = scmp.ne.s32.totalorder %s129, %s132
    %p141 = scmp.eq.s32.totalorder %s14, 1
    %p142 = por %p140, %p141
    %p143 = scmp.ne.s32.totalorder %s132, %s133
    %p144 = scmp.eq.s32.totalorder %s14, 0
    %p145 = por %p143, %p144
    %p146 = scmp.ne.s32.totalorder %s132, %s133
    %p147 = scmp.eq.s32.totalorder %s15, 1
    %p148 = por %p146, %p147
    %p150 = scmp.ne.s32.totalorder %s133, %s149
    %p151 = scmp.eq.s32.totalorder %s15, 0
    %p152 = por %p150, %p151
    %p153 = scmp.le.s32.totalorder 1, %s9
    %p154 = scmp.lt.s32.totalorder %s9, 3
    %p155 = pnand %p153, %p154
    %p156 = pneg %p155
    // Predicated region
    $region9: #{_lambda_.7} parent=5 // pred_check
      _
    $region10: #{_lambda_.7} parent=5 // pred_check_branch
      %158 = sbr.rel (%p155) target = $region12
    $region11: #{_lambda_.7} parent=5 // pred_region
      %s159 = ssub.s32 %s9, 1
    $region12: #{_lambda_.7} parent=5 // pred_fallthru
      _
    %p160 = scmp.lt.s32.totalorder %s9, 2
    // Predicated region
    $region13: #{_lambda_.7} parent=5 // pred_check
      %p161 = pneg %p160
    $region14: #{_lambda_.7} parent=5 // pred_check_branch
      %163 = sbr.rel (%p161) target = $region16
    $region15: #{_lambda_.7} parent=5 // pred_region
      // Predicated region
      $region17: #{_lambda_.7} parent=15 // pred_check
        %p164 = pneg %p51
      $region18: #{_lambda_.7} parent=15 // pred_check_branch
        %166 = sbr.rel (%p164) target = $region20
      $region19: #{_lambda_.7} parent=15 // pred_region
        %s167 = smul.u32 %s17, 2
        %s168 = ssub.s32 0, %s167
        %s169 = smul.u32 %s16, %s168
        %s170 = sadd.s32 %s17, %s169
        %s171 = smul.u32 8, %s170
        %p172 = scmp.lt.s32.totalorder %s16, 1
        %s173 = scalar_select %p172, %s16, 1
        %p174 = scmp.lt.s32.totalorder %s171, 7
        %s175 = scalar_select %p174, %s171, 7
        %s176 = smul.addr %s173, 8
        %s177 = sadd.s32 %s175, %s176
        %s178 = smul.addr %s177, 2
        %s179 = scalar_lea.vmem %s0, %s178
        %s180 = smul.u32 %s17, 2
        %s181 = ssub.s32 0, %s180
        %s182 = smul.u32 %s16, %s181
        %s183 = sadd.s32 %s17, %s182
        %s184 = smul.u32 8, %s183
      $region20: #{_lambda_.7} parent=15 // pred_fallthru
        _
      // Predicated region
      $region21: #{_lambda_.7} parent=15 // pred_check
        %p185 = pneg %p77
      $region22: #{_lambda_.7} parent=15 // pred_check_branch
        %187 = sbr.rel (%p185) target = $region24
      $region23: #{_lambda_.7} parent=15 // pred_region
        %p188 = scmp.lt.s32.totalorder %s16, 1
        %s189 = scalar_select %p188, %s16, 1
        %s190 = smul.addr %s189, 2
        %s191 = smul.addr %s190, 8
        %s192 = scalar_lea.vmem %s1, %s191
      $region24: #{_lambda_.7} parent=15 // pred_fallthru
        _
      // Predicated region
      $region25: #{_lambda_.7} parent=15 // pred_check
        %p193 = pneg %p103
      $region26: #{_lambda_.7} parent=15 // pred_check_branch
        %195 = sbr.rel (%p193) target = $region28
      $region27: #{_lambda_.7} parent=15 // pred_region
        %p196 = scmp.lt.s32.totalorder %s16, 1
        %s197 = scalar_select %p196, %s16, 1
        %s198 = scalar_lea.vmem %s2, %s197
      $region28: #{_lambda_.7} parent=15 // pred_fallthru
        _
    $region16: #{_lambda_.7} parent=5 // pred_fallthru
      _
    %p199 = scmp.le.s32.totalorder 1, %s9
    %p200 = scmp.lt.s32.totalorder %s9, 3
    %p201 = pnand %p199, %p200
    %p202 = pneg %p201
    // Predicated region
    $region29: #{_lambda_.7} parent=5 // pred_check
      _
    $region30: #{_lambda_.7} parent=5 // pred_check_branch
      %204 = sbr.rel (%p201) target = $region32
    $region31: #{_lambda_.7} parent=5 // pred_region
      %s205 = ssub.s32 %s9, 1
      %s206 = smul.u32 %s19, 2
      %s207 = ssub.s32 0, %s206
      %s208 = smul.u32 %s18, %s207
      %s209 = sadd.s32 %s19, %s208
      %s210 = smul.u32 8, %s209
      %p211 = scmp.lt.s32.totalorder %s18, 1
      %s212 = scalar_select %p211, %s18, 1
      %p213 = scmp.lt.s32.totalorder %s210, 7
      %s214 = scalar_select %p213, %s210, 7
      %s215 = smul.addr %s212, 8
      %s216 = sadd.s32 %s214, %s215
      %s217 = smul.addr %s216, 2
      %s218 = scalar_lea.vmem %s0, %s217
      %p219 = pneg %p57
      %p220 = pneg %p54
      %p221 = scmp.lt.s32.totalorder %s18, 1
      %s222 = scalar_select %p221, %s18, 1
      %s223 = smul.addr %s222, 2
      %s224 = smul.addr %s223, 8
      %s225 = scalar_lea.vmem %s1, %s224
      %p226 = pneg %p83
      %p227 = pneg %p80
      %p228 = scmp.lt.s32.totalorder %s18, 1
      %s229 = scalar_select %p228, %s18, 1
      %s230 = scalar_lea.vmem %s2, %s229
      %p231 = pneg %p109
      %p232 = pneg %p106
      %p233 = pneg %p145
      %p234 = pneg %p142
      %s235 = smul.u32 %s19, 2
      %s236 = ssub.s32 0, %s235
      %s237 = smul.u32 %s18, %s236
      %s238 = sadd.s32 %s19, %s237
      %s239 = smul.u32 8, %s238
      %p240 = scmp.lt.s32.totalorder %s18, 1
      %s241 = scalar_select %p240, %s18, 1
      %p242 = scmp.lt.s32.totalorder %s239, 7
      %s243 = scalar_select %p242, %s239, 7
      %s244 = smul.addr %s241, 8
      %s245 = sadd.s32 %s243, %s244
      %s246 = smul.addr %s245, 2
      %s247 = scalar_lea.vmem %s3, %s246
      %s248 = smul.u32 %s19, 2
      %s249 = ssub.s32 0, %s248
      %s250 = smul.u32 %s18, %s249
      %s251 = sadd.s32 %s19, %s250
      %s252 = smul.u32 8, %s251
      %p253 = scmp.lt.s32.totalorder %s18, 1
      %s254 = scalar_select %p253, %s18, 1
      %p255 = scmp.lt.s32.totalorder %s252, 7
      %s256 = scalar_select %p255, %s252, 7
      %s257 = smul.addr %s254, 8
      %s258 = sadd.s32 %s256, %s257
      %s259 = smul.addr %s258, 2
      %s260 = scalar_lea.vmem %s0, %s259
      %s261 = smul.u32 %s19, 2
      %s262 = ssub.s32 0, %s261
      %s263 = smul.u32 %s18, %s262
      %s264 = sadd.s32 %s19, %s263
      %s265 = smul.u32 8, %s264
      %p266 = scmp.lt.s32.totalorder %s18, 1
      %s267 = scalar_select %p266, %s18, 1
      %s268 = smul.addr %s267, 2
      %s269 = smul.addr %s268, 8
      %s270 = scalar_lea.vmem %s1, %s269
      %p271 = scmp.lt.s32.totalorder %s18, 1
      %s272 = scalar_select %p271, %s18, 1
      %s273 = scalar_lea.vmem %s2, %s272
      %s274 = smul.u32 %s19, 2
      %s275 = ssub.s32 0, %s274
      %s276 = smul.u32 %s18, %s275
      %s277 = sadd.s32 %s19, %s276
      %s278 = smul.u32 8, %s277
      %p279 = scmp.lt.s32.totalorder %s18, 1
      %s280 = scalar_select %p279, %s18, 1
      %p281 = scmp.lt.s32.totalorder %s278, 7
      %s282 = scalar_select %p281, %s278, 7
      %s283 = smul.addr %s280, 8
      %s284 = sadd.s32 %s282, %s283
      %s285 = smul.addr %s284, 2
      %s286 = scalar_lea.vmem %s3, %s285
      %s287 = smul.u32 %s19, 2
      %s288 = ssub.s32 0, %s287
      %s289 = smul.u32 %s18, %s288
      %s290 = sadd.s32 %s19, %s289
      %s291 = smul.u32 8, %s290
      %p292 = scmp.eq.s32.totalorder %s19, 0
      // Predicated region
      $region33: #{_lambda_.7} parent=31 // pred_check
        %p293 = pneg %p292
      $region34: #{_lambda_.7} parent=31 // pred_check_branch
        %295 = sbr.rel (%p293) target = $region36
      $region35: #{_lambda_.7} parent=31 // pred_region
        %vm296 = vcmask 123904
        %297 = vst.msk [vmem:[#allocation2] sm:$0x3] %vm296, 0.0
      $region36: #{_lambda_.7} parent=31 // pred_fallthru
        _
      %p298 = scmp.eq.s32.totalorder %s18, 0
      // Predicated region
      $region37: #{_lambda_.7} parent=31 // pred_check
        %p299 = pneg %p298
      $region38: #{_lambda_.7} parent=31 // pred_check_branch
        %301 = sbr.rel (%p299) target = $region40
      $region39: #{_lambda_.7} parent=31 // pred_region
        %v302 = vld [vmem:[%s270] sm:$0xff]
        %v303 = vld [vmem:[%s270 + $0x8] sm:$0xff]
        %v304 = vld [vmem:[%s273] sm:$0x1]
        %v305 = vld [vmem:[#allocation2] sm:$0x3]
        %v306 = vld [vmem:[%s260] sm:$0x3]
        %v308 = vlaneseq
        %v309 = vshrl.u32 %v308, 7
        %v310 = vsub.s32 0, %v309
        %v311 = vrot.slane %v304, %v310
        %vm313 = vcmask 130048
        %v315 = vsel %vm313, %v305, 0
        %317 = vmatprep.subr.mxu0 0.0
        %318 = vmatpush1.msra.mxu0 %v302
        %319 = vmatprep.subr.mxu0 0.0
        %320 = vmatpush1.msra.mxu0 %v303
        %321 = vmatprep.subr.mxu0 0.0
        %322 = vmatpush1.msra.mxu0 0.0
        %323 = vmatprep.subr.mxu0 0.0
        %324 = vmatpush1.msra.mxu0 0.0
        %325 = vmatprep.subr.mxu0 0.0
        %326 = vmatpush1.msra.mxu0 0.0
        %327 = vmatprep.subr.mxu0 0.0
        %328 = vmatpush1.msra.mxu0 0.0
        %329 = vmatprep.subr.mxu0 0.0
        %330 = vmatpush1.msra.mxu0 0.0
        %331 = vmatprep.subr.mxu0 0.0
        %332 = vmatpush1.msra.mxu0 0.0
        %333 = vmatprep.subr.mxu0 0.0
        %334 = vmatpush1.msra.mxu0 0.0
        %335 = vmatprep.subr.mxu0 0.0
        %336 = vmatpush1.msra.mxu0 0.0
        %337 = vmatprep.subr.mxu0 0.0
        %338 = vmatpush1.msra.mxu0 0.0
        %339 = vmatprep.subr.mxu0 0.0
        %340 = vmatpush1.msra.mxu0 0.0
        %341 = vmatprep.subr.mxu0 0.0
        %342 = vmatpush1.msra.mxu0 0.0
        %343 = vmatprep.subr.mxu0 0.0
        %344 = vmatpush1.msra.mxu0 0.0
        %345 = vmatprep.subr.mxu0 0.0
        %346 = vmatpush1.msra.mxu0 0.0
        %347 = vmatprep.subr.mxu0 0.0
        %348 = vmatpush1.msra.mxu0 0.0
        %349 = vmatprep.subr.mxu0 0.0
        %350 = vmatpush1.msra.mxu0 0.0
        %351 = vmatprep.subr.mxu0 0.0
        %352 = vmatpush1.msra.mxu0 0.0
        %353 = vmatprep.subr.mxu0 0.0
        %354 = vmatpush1.msra.mxu0 0.0
        %355 = vmatprep.subr.mxu0 0.0
        %356 = vmatpush1.msra.mxu0 0.0
        %357 = vmatprep.subr.mxu0 0.0
        %358 = vmatpush1.msra.mxu0 0.0
        %359 = vmatprep.subr.mxu0 0.0
        %360 = vmatpush1.msra.mxu0 0.0
        %361 = vmatprep.subr.mxu0 0.0
        %362 = vmatpush1.msra.mxu0 0.0
        %363 = vmatprep.subr.mxu0 0.0
        %364 = vmatpush1.msra.mxu0 0.0
        %365 = vmatprep.subr.mxu0 0.0
        %366 = vmatpush1.msra.mxu0 0.0
        %367 = vmatprep.subr.mxu0 0.0
        %368 = vmatpush1.msra.mxu0 0.0
        %369 = vmatprep.subr.mxu0 0.0
        %370 = vmatpush1.msra.mxu0 0.0
        %371 = vmatprep.subr.mxu0 0.0
        %372 = vmatpush1.msra.mxu0 0.0
        %373 = vmatprep.subr.mxu0 0.0
        %374 = vmatpush1.msra.mxu0 0.0
        %375 = vmatprep.subr.mxu0 0.0
        %376 = vmatpush1.msra.mxu0 0.0
        %377 = vmatprep.subr.mxu0 0.0
        %378 = vmatpush1.msra.mxu0 0.0
        %379 = vmatprep.subr.mxu0 0.0
        %380 = vmatpush1.msra.mxu0 0.0
        %381 = vmatprep.mubr.f32.mxu0 0.0
        %382 = vmatmul.mubr.f32.gmra.mrb[0].mxu0 %v315
        %v383 = vpop.f32.mrb[0].mxu0
        %v384 = vadd.f32 %v311, %v383
        %v385 = vpop.f32.mrb[0].mxu0
        %386 = vdwg.mxu0
        %v387 = vadd.f32 %v306, %v384
        %v388 = vxor.u32 %v387, 2147483648
        %v389 = vmul.f32 %v388, 1.442695
        %v390 = vpow.pop %v389
        %v391 = vadd.f32 %v390, 1.0
        %v392 = vrcp.pop %v391
        %v393 = vmul.f32 1.0, %v392
        %395 = vrot.lane.b32.xlu0 %v384, 96
        %v396 = vpop.permute.xlu0 %395
        %v398 = vmul.f32 %v393, %v396
        %400 = vrot.lane.b32.xlu0 %v398, 32
        %v401 = vpop.permute.xlu0 %400
        %v403 = vadd.f32 %v306, %v401
        %v404 = vtanh.pop %v403
        %v405 = vsub.f32 1.0, %v393
        %407 = vrot.lane.b32.xlu0 %v404, 112
        %v408 = vpop.permute.xlu0 %407
        %v410 = vmul.f32 %v405, %v408
        %411 = vrot.lane.b32.xlu0 %v305, 16
        %v412 = vpop.permute.xlu0 %411
        %v414 = vmul.f32 %v393, %v412
        %v415 = vadd.f32 %v410, %v414
        %417 = vrot.lane.b32.xlu0 %v415, 112
        %v418 = vpop.permute.xlu0 %417
        %vm420 = vcmask 123904
        %421 = vst.msk [vmem:[%s286] sm:$0x3] %vm420, %v418
        %s422 = scalar_lea.vmem %s260, 2
        %v423 = vld [vmem:[%s422] sm:$0x3]
        %v424 = vsel %vm313, %v418, 0
        %426 = vmatprep.subr.mxu0 0.0
        %427 = vmatpush1.msra.mxu0 %v302
        %428 = vmatprep.subr.mxu0 0.0
        %429 = vmatpush1.msra.mxu0 %v303
        %430 = vmatprep.subr.mxu0 0.0
        %431 = vmatpush1.msra.mxu0 0.0
        %432 = vmatprep.subr.mxu0 0.0
        %433 = vmatpush1.msra.mxu0 0.0
        %434 = vmatprep.subr.mxu0 0.0
        %435 = vmatpush1.msra.mxu0 0.0
        %436 = vmatprep.subr.mxu0 0.0
        %437 = vmatpush1.msra.mxu0 0.0
        %438 = vmatprep.subr.mxu0 0.0
        %439 = vmatpush1.msra.mxu0 0.0
        %440 = vmatprep.subr.mxu0 0.0
        %441 = vmatpush1.msra.mxu0 0.0
        %442 = vmatprep.subr.mxu0 0.0
        %443 = vmatpush1.msra.mxu0 0.0
        %444 = vmatprep.subr.mxu0 0.0
        %445 = vmatpush1.msra.mxu0 0.0
        %446 = vmatprep.subr.mxu0 0.0
        %447 = vmatpush1.msra.mxu0 0.0
        %448 = vmatprep.subr.mxu0 0.0
        %449 = vmatpush1.msra.mxu0 0.0
        %450 = vmatprep.subr.mxu0 0.0
        %451 = vmatpush1.msra.mxu0 0.0
        %452 = vmatprep.subr.mxu0 0.0
        %453 = vmatpush1.msra.mxu0 0.0
        %454 = vmatprep.subr.mxu0 0.0
        %455 = vmatpush1.msra.mxu0 0.0
        %456 = vmatprep.subr.mxu0 0.0
        %457 = vmatpush1.msra.mxu0 0.0
        %458 = vmatprep.subr.mxu0 0.0
        %459 = vmatpush1.msra.mxu0 0.0
        %460 = vmatprep.subr.mxu0 0.0
        %461 = vmatpush1.msra.mxu0 0.0
        %462 = vmatprep.subr.mxu0 0.0
        %463 = vmatpush1.msra.mxu0 0.0
        %464 = vmatprep.subr.mxu0 0.0
        %465 = vmatpush1.msra.mxu0 0.0
        %466 = vmatprep.subr.mxu0 0.0
        %467 = vmatpush1.msra.mxu0 0.0
        %468 = vmatprep.subr.mxu0 0.0
        %469 = vmatpush1.msra.mxu0 0.0
        %470 = vmatprep.subr.mxu0 0.0
        %471 = vmatpush1.msra.mxu0 0.0
        %472 = vmatprep.subr.mxu0 0.0
        %473 = vmatpush1.msra.mxu0 0.0
        %474 = vmatprep.subr.mxu0 0.0
        %475 = vmatpush1.msra.mxu0 0.0
        %476 = vmatprep.subr.mxu0 0.0
        %477 = vmatpush1.msra.mxu0 0.0
        %478 = vmatprep.subr.mxu0 0.0
        %479 = vmatpush1.msra.mxu0 0.0
        %480 = vmatprep.subr.mxu0 0.0
        %481 = vmatpush1.msra.mxu0 0.0
        %482 = vmatprep.subr.mxu0 0.0
        %483 = vmatpush1.msra.mxu0 0.0
        %484 = vmatprep.subr.mxu0 0.0
        %485 = vmatpush1.msra.mxu0 0.0
        %486 = vmatprep.subr.mxu0 0.0
        %487 = vmatpush1.msra.mxu0 0.0
        %488 = vmatprep.subr.mxu0 0.0
        %489 = vmatpush1.msra.mxu0 0.0
        %490 = vmatprep.mubr.f32.mxu0 0.0
        %491 = vmatmul.mubr.f32.gmra.mrb[0].mxu0 %v424
        %v492 = vpop.f32.mrb[0].mxu0
        %v493 = vadd.f32 %v311, %v492
        %v494 = vpop.f32.mrb[0].mxu0
        %495 = vdwg.mxu0
        %v496 = vadd.f32 %v423, %v493
        %v497 = vxor.u32 %v496, 2147483648
        %v498 = vmul.f32 %v497, 1.442695
        %v499 = vpow.pop %v498
        %v500 = vadd.f32 %v499, 1.0
        %v501 = vrcp.pop %v500
        %v502 = vmul.f32 1.0, %v501
        %504 = vrot.lane.b32.xlu0 %v493, 96
        %v505 = vpop.permute.xlu0 %504
        %v507 = vmul.f32 %v502, %v505
        %509 = vrot.lane.b32.xlu0 %v507, 32
        %v510 = vpop.permute.xlu0 %509
        %v512 = vadd.f32 %v423, %v510
        %v513 = vtanh.pop %v512
        %v514 = vsub.f32 1.0, %v502
        %516 = vrot.lane.b32.xlu0 %v513, 112
        %v517 = vpop.permute.xlu0 %516
        %v519 = vmul.f32 %v514, %v517
        %v520 = vmul.f32 %v502, %v415
        %v521 = vadd.f32 %v519, %v520
        %523 = vrot.lane.b32.xlu0 %v521, 112
        %v524 = vpop.permute.xlu0 %523
        %s526 = scalar_lea.vmem %s286, 2
        %527 = vst.msk [vmem:[%s526] sm:$0x3] %vm420, %v524
        %s528 = scalar_lea.vmem %s260, 4
        %v529 = vld [vmem:[%s528] sm:$0x3]
        %v530 = vsel %vm313, %v524, 0
        %532 = vmatprep.subr.mxu0 0.0
        %533 = vmatpush1.msra.mxu0 %v302
        %534 = vmatprep.subr.mxu0 0.0
        %535 = vmatpush1.msra.mxu0 %v303
        %536 = vmatprep.subr.mxu0 0.0
        %537 = vmatpush1.msra.mxu0 0.0
        %538 = vmatprep.subr.mxu0 0.0
        %539 = vmatpush1.msra.mxu0 0.0
        %540 = vmatprep.subr.mxu0 0.0
        %541 = vmatpush1.msra.mxu0 0.0
        %542 = vmatprep.subr.mxu0 0.0
        %543 = vmatpush1.msra.mxu0 0.0
        %544 = vmatprep.subr.mxu0 0.0
        %545 = vmatpush1.msra.mxu0 0.0
        %546 = vmatprep.subr.mxu0 0.0
        %547 = vmatpush1.msra.mxu0 0.0
        %548 = vmatprep.subr.mxu0 0.0
        %549 = vmatpush1.msra.mxu0 0.0
        %550 = vmatprep.subr.mxu0 0.0
        %551 = vmatpush1.msra.mxu0 0.0
        %552 = vmatprep.subr.mxu0 0.0
        %553 = vmatpush1.msra.mxu0 0.0
        %554 = vmatprep.subr.mxu0 0.0
        %555 = vmatpush1.msra.mxu0 0.0
        %556 = vmatprep.subr.mxu0 0.0
        %557 = vmatpush1.msra.mxu0 0.0
        %558 = vmatprep.subr.mxu0 0.0
        %559 = vmatpush1.msra.mxu0 0.0
        %560 = vmatprep.subr.mxu0 0.0
        %561 = vmatpush1.msra.mxu0 0.0
        %562 = vmatprep.subr.mxu0 0.0
        %563 = vmatpush1.msra.mxu0 0.0
        %564 = vmatprep.subr.mxu0 0.0
        %565 = vmatpush1.msra.mxu0 0.0
        %566 = vmatprep.subr.mxu0 0.0
        %567 = vmatpush1.msra.mxu0 0.0
        %568 = vmatprep.subr.mxu0 0.0
        %569 = vmatpush1.msra.mxu0 0.0
        %570 = vmatprep.subr.mxu0 0.0
        %571 = vmatpush1.msra.mxu0 0.0
        %572 = vmatprep.subr.mxu0 0.0
        %573 = vmatpush1.msra.mxu0 0.0
        %574 = vmatprep.subr.mxu0 0.0
        %575 = vmatpush1.msra.mxu0 0.0
        %576 = vmatprep.subr.mxu0 0.0
        %577 = vmatpush1.msra.mxu0 0.0
        %578 = vmatprep.subr.mxu0 0.0
        %579 = vmatpush1.msra.mxu0 0.0
        %580 = vmatprep.subr.mxu0 0.0
        %581 = vmatpush1.msra.mxu0 0.0
        %582 = vmatprep.subr.mxu0 0.0
        %583 = vmatpush1.msra.mxu0 0.0
        %584 = vmatprep.subr.mxu0 0.0
        %585 = vmatpush1.msra.mxu0 0.0
        %586 = vmatprep.subr.mxu0 0.0
        %587 = vmatpush1.msra.mxu0 0.0
        %588 = vmatprep.subr.mxu0 0.0
        %589 = vmatpush1.msra.mxu0 0.0
        %590 = vmatprep.subr.mxu0 0.0
        %591 = vmatpush1.msra.mxu0 0.0
        %592 = vmatprep.subr.mxu0 0.0
        %593 = vmatpush1.msra.mxu0 0.0
        %594 = vmatprep.subr.mxu0 0.0
        %595 = vmatpush1.msra.mxu0 0.0
        %596 = vmatprep.mubr.f32.mxu0 0.0
        %597 = vmatmul.mubr.f32.gmra.mrb[0].mxu0 %v530
        %v598 = vpop.f32.mrb[0].mxu0
        %v599 = vadd.f32 %v311, %v598
        %v600 = vpop.f32.mrb[0].mxu0
        %601 = vdwg.mxu0
        %v602 = vadd.f32 %v529, %v599
        %v603 = vxor.u32 %v602, 2147483648
        %v604 = vmul.f32 %v603, 1.442695
        %v605 = vpow.pop %v604
        %v606 = vadd.f32 %v605, 1.0
        %v607 = vrcp.pop %v606
        %v608 = vmul.f32 1.0, %v607
        %610 = vrot.lane.b32.xlu0 %v599, 96
        %v611 = vpop.permute.xlu0 %610
        %v613 = vmul.f32 %v608, %v611
        %615 = vrot.lane.b32.xlu0 %v613, 32
        %v616 = vpop.permute.xlu0 %615
        %v618 = vadd.f32 %v529, %v616
        %v619 = vtanh.pop %v618
        %v620 = vsub.f32 1.0, %v608
        %622 = vrot.lane.b32.xlu0 %v619, 112
        %v623 = vpop.permute.xlu0 %622
        %v625 = vmul.f32 %v620, %v623
        %v626 = vmul.f32 %v608, %v521
        %v627 = vadd.f32 %v625, %v626
        %629 = vrot.lane.b32.xlu0 %v627, 112
        %v630 = vpop.permute.xlu0 %629
        %s632 = scalar_lea.vmem %s286, 4
        %633 = vst.msk [vmem:[%s632] sm:$0x3] %vm420, %v630
        %s634 = scalar_lea.vmem %s260, 6
        %v635 = vld [vmem:[%s634] sm:$0x3]
        %v636 = vsel %vm313, %v630, 0
        %638 = vmatprep.subr.mxu0 0.0
        %639 = vmatpush1.msra.mxu0 %v302
        %640 = vmatprep.subr.mxu0 0.0
        %641 = vmatpush1.msra.mxu0 %v303
        %642 = vmatprep.subr.mxu0 0.0
        %643 = vmatpush1.msra.mxu0 0.0
        %644 = vmatprep.subr.mxu0 0.0
        %645 = vmatpush1.msra.mxu0 0.0
        %646 = vmatprep.subr.mxu0 0.0
        %647 = vmatpush1.msra.mxu0 0.0
        %648 = vmatprep.subr.mxu0 0.0
        %649 = vmatpush1.msra.mxu0 0.0
        %650 = vmatprep.subr.mxu0 0.0
        %651 = vmatpush1.msra.mxu0 0.0
        %652 = vmatprep.subr.mxu0 0.0
        %653 = vmatpush1.msra.mxu0 0.0
        %654 = vmatprep.subr.mxu0 0.0
        %655 = vmatpush1.msra.mxu0 0.0
        %656 = vmatprep.subr.mxu0 0.0
        %657 = vmatpush1.msra.mxu0 0.0
        %658 = vmatprep.subr.mxu0 0.0
        %659 = vmatpush1.msra.mxu0 0.0
        %660 = vmatprep.subr.mxu0 0.0
        %661 = vmatpush1.msra.mxu0 0.0
        %662 = vmatprep.subr.mxu0 0.0
        %663 = vmatpush1.msra.mxu0 0.0
        %664 = vmatprep.subr.mxu0 0.0
        %665 = vmatpush1.msra.mxu0 0.0
        %666 = vmatprep.subr.mxu0 0.0
        %667 = vmatpush1.msra.mxu0 0.0
        %668 = vmatprep.subr.mxu0 0.0
        %669 = vmatpush1.msra.mxu0 0.0
        %670 = vmatprep.subr.mxu0 0.0
        %671 = vmatpush1.msra.mxu0 0.0
        %672 = vmatprep.subr.mxu0 0.0
        %673 = vmatpush1.msra.mxu0 0.0
        %674 = vmatprep.subr.mxu0 0.0
        %675 = vmatpush1.msra.mxu0 0.0
        %676 = vmatprep.subr.mxu0 0.0
        %677 = vmatpush1.msra.mxu0 0.0
        %678 = vmatprep.subr.mxu0 0.0
        %679 = vmatpush1.msra.mxu0 0.0
        %680 = vmatprep.subr.mxu0 0.0
        %681 = vmatpush1.msra.mxu0 0.0
        %682 = vmatprep.subr.mxu0 0.0
        %683 = vmatpush1.msra.mxu0 0.0
        %684 = vmatprep.subr.mxu0 0.0
        %685 = vmatpush1.msra.mxu0 0.0
        %686 = vmatprep.subr.mxu0 0.0
        %687 = vmatpush1.msra.mxu0 0.0
        %688 = vmatprep.subr.mxu0 0.0
        %689 = vmatpush1.msra.mxu0 0.0
        %690 = vmatprep.subr.mxu0 0.0
        %691 = vmatpush1.msra.mxu0 0.0
        %692 = vmatprep.subr.mxu0 0.0
        %693 = vmatpush1.msra.mxu0 0.0
        %694 = vmatprep.subr.mxu0 0.0
        %695 = vmatpush1.msra.mxu0 0.0
        %696 = vmatprep.subr.mxu0 0.0
        %697 = vmatpush1.msra.mxu0 0.0
        %698 = vmatprep.subr.mxu0 0.0
        %699 = vmatpush1.msra.mxu0 0.0
        %700 = vmatprep.subr.mxu0 0.0
        %701 = vmatpush1.msra.mxu0 0.0
        %702 = vmatprep.mubr.f32.mxu0 0.0
        %703 = vmatmul.mubr.f32.gmra.mrb[0].mxu0 %v636
        %v704 = vpop.f32.mrb[0].mxu0
        %v705 = vadd.f32 %v311, %v704
        %v706 = vpop.f32.mrb[0].mxu0
        %707 = vdwg.mxu0
        %v708 = vadd.f32 %v635, %v705
        %v709 = vxor.u32 %v708, 2147483648
        %v710 = vmul.f32 %v709, 1.442695
        %v711 = vpow.pop %v710
        %v712 = vadd.f32 %v711, 1.0
        %v713 = vrcp.pop %v712
        %v714 = vmul.f32 1.0, %v713
        %716 = vrot.lane.b32.xlu0 %v705, 96
        %v717 = vpop.permute.xlu0 %716
        %v719 = vmul.f32 %v714, %v717
        %721 = vrot.lane.b32.xlu0 %v719, 32
        %v722 = vpop.permute.xlu0 %721
        %v724 = vadd.f32 %v635, %v722
        %v725 = vtanh.pop %v724
        %v726 = vsub.f32 1.0, %v714
        %728 = vrot.lane.b32.xlu0 %v725, 112
        %v729 = vpop.permute.xlu0 %728
        %v731 = vmul.f32 %v726, %v729
        %v732 = vmul.f32 %v714, %v627
        %v733 = vadd.f32 %v731, %v732
        %735 = vrot.lane.b32.xlu0 %v733, 112
        %v736 = vpop.permute.xlu0 %735
        %s738 = scalar_lea.vmem %s286, 6
        %739 = vst.msk [vmem:[%s738] sm:$0x3] %vm420, %v736
        %s740 = scalar_lea.vmem %s260, 8
        %v741 = vld [vmem:[%s740] sm:$0x3]
        %v742 = vsel %vm313, %v736, 0
        %744 = vmatprep.subr.mxu0 0.0
        %745 = vmatpush1.msra.mxu0 %v302
        %746 = vmatprep.subr.mxu0 0.0
        %747 = vmatpush1.msra.mxu0 %v303
        %748 = vmatprep.subr.mxu0 0.0
        %749 = vmatpush1.msra.mxu0 0.0
        %750 = vmatprep.subr.mxu0 0.0
        %751 = vmatpush1.msra.mxu0 0.0
        %752 = vmatprep.subr.mxu0 0.0
        %753 = vmatpush1.msra.mxu0 0.0
        %754 = vmatprep.subr.mxu0 0.0
        %755 = vmatpush1.msra.mxu0 0.0
        %756 = vmatprep.subr.mxu0 0.0
        %757 = vmatpush1.msra.mxu0 0.0
        %758 = vmatprep.subr.mxu0 0.0
        %759 = vmatpush1.msra.mxu0 0.0
        %760 = vmatprep.subr.mxu0 0.0
        %761 = vmatpush1.msra.mxu0 0.0
        %762 = vmatprep.subr.mxu0 0.0
        %763 = vmatpush1.msra.mxu0 0.0
        %764 = vmatprep.subr.mxu0 0.0
        %765 = vmatpush1.msra.mxu0 0.0
        %766 = vmatprep.subr.mxu0 0.0
        %767 = vmatpush1.msra.mxu0 0.0
        %768 = vmatprep.subr.mxu0 0.0
        %769 = vmatpush1.msra.mxu0 0.0
        %770 = vmatprep.subr.mxu0 0.0
        %771 = vmatpush1.msra.mxu0 0.0
        %772 = vmatprep.subr.mxu0 0.0
        %773 = vmatpush1.msra.mxu0 0.0
        %774 = vmatprep.subr.mxu0 0.0
        %775 = vmatpush1.msra.mxu0 0.0
        %776 = vmatprep.subr.mxu0 0.0
        %777 = vmatpush1.msra.mxu0 0.0
        %778 = vmatprep.subr.mxu0 0.0
        %779 = vmatpush1.msra.mxu0 0.0
        %780 = vmatprep.subr.mxu0 0.0
        %781 = vmatpush1.msra.mxu0 0.0
        %782 = vmatprep.subr.mxu0 0.0
        %783 = vmatpush1.msra.mxu0 0.0
        %784 = vmatprep.subr.mxu0 0.0
        %785 = vmatpush1.msra.mxu0 0.0
        %786 = vmatprep.subr.mxu0 0.0
        %787 = vmatpush1.msra.mxu0 0.0
        %788 = vmatprep.subr.mxu0 0.0
        %789 = vmatpush1.msra.mxu0 0.0
        %790 = vmatprep.subr.mxu0 0.0
        %791 = vmatpush1.msra.mxu0 0.0
        %792 = vmatprep.subr.mxu0 0.0
        %793 = vmatpush1.msra.mxu0 0.0
        %794 = vmatprep.subr.mxu0 0.0
        %795 = vmatpush1.msra.mxu0 0.0
        %796 = vmatprep.subr.mxu0 0.0
        %797 = vmatpush1.msra.mxu0 0.0
        %798 = vmatprep.subr.mxu0 0.0
        %799 = vmatpush1.msra.mxu0 0.0
        %800 = vmatprep.subr.mxu0 0.0
        %801 = vmatpush1.msra.mxu0 0.0
        %802 = vmatprep.subr.mxu0 0.0
        %803 = vmatpush1.msra.mxu0 0.0
        %804 = vmatprep.subr.mxu0 0.0
        %805 = vmatpush1.msra.mxu0 0.0
        %806 = vmatprep.subr.mxu0 0.0
        %807 = vmatpush1.msra.mxu0 0.0
        %808 = vmatprep.mubr.f32.mxu0 0.0
        %809 = vmatmul.mubr.f32.gmra.mrb[0].mxu0 %v742
        %v810 = vpop.f32.mrb[0].mxu0
        %v811 = vadd.f32 %v311, %v810
        %v812 = vpop.f32.mrb[0].mxu0
        %813 = vdwg.mxu0
        %v814 = vadd.f32 %v741, %v811
        %v815 = vxor.u32 %v814, 2147483648
        %v816 = vmul.f32 %v815, 1.442695
        %v817 = vpow.pop %v816
        %v818 = vadd.f32 %v817, 1.0
        %v819 = vrcp.pop %v818
        %v820 = vmul.f32 1.0, %v819
        %822 = vrot.lane.b32.xlu0 %v811, 96
        %v823 = vpop.permute.xlu0 %822
        %v825 = vmul.f32 %v820, %v823
        %827 = vrot.lane.b32.xlu0 %v825, 32
        %v828 = vpop.permute.xlu0 %827
        %v830 = vadd.f32 %v741, %v828
        %v831 = vtanh.pop %v830
        %v832 = vsub.f32 1.0, %v820
        %834 = vrot.lane.b32.xlu0 %v831, 112
        %v835 = vpop.permute.xlu0 %834
        %v837 = vmul.f32 %v832, %v835
        %v838 = vmul.f32 %v820, %v733
        %v839 = vadd.f32 %v837, %v838
        %841 = vrot.lane.b32.xlu0 %v839, 112
        %v842 = vpop.permute.xlu0 %841
        %s844 = scalar_lea.vmem %s286, 8
        %845 = vst.msk [vmem:[%s844] sm:$0x3] %vm420, %v842
        %s846 = scalar_lea.vmem %s260, 10
        %v847 = vld [vmem:[%s846] sm:$0x3]
        %v848 = vsel %vm313, %v842, 0
        %850 = vmatprep.subr.mxu0 0.0
        %851 = vmatpush1.msra.mxu0 %v302
        %852 = vmatprep.subr.mxu0 0.0
        %853 = vmatpush1.msra.mxu0 %v303
        %854 = vmatprep.subr.mxu0 0.0
        %855 = vmatpush1.msra.mxu0 0.0
        %856 = vmatprep.subr.mxu0 0.0
        %857 = vmatpush1.msra.mxu0 0.0
        %858 = vmatprep.subr.mxu0 0.0
        %859 = vmatpush1.msra.mxu0 0.0
        %860 = vmatprep.subr.mxu0 0.0
        %861 = vmatpush1.msra.mxu0 0.0
        %862 = vmatprep.subr.mxu0 0.0
        %863 = vmatpush1.msra.mxu0 0.0
        %864 = vmatprep.subr.mxu0 0.0
        %865 = vmatpush1.msra.mxu0 0.0
        %866 = vmatprep.subr.mxu0 0.0
        %867 = vmatpush1.msra.mxu0 0.0
        %868 = vmatprep.subr.mxu0 0.0
        %869 = vmatpush1.msra.mxu0 0.0
        %870 = vmatprep.subr.mxu0 0.0
        %871 = vmatpush1.msra.mxu0 0.0
        %872 = vmatprep.subr.mxu0 0.0
        %873 = vmatpush1.msra.mxu0 0.0
        %874 = vmatprep.subr.mxu0 0.0
        %875 = vmatpush1.msra.mxu0 0.0
        %876 = vmatprep.subr.mxu0 0.0
        %877 = vmatpush1.msra.mxu0 0.0
        %878 = vmatprep.subr.mxu0 0.0
        %879 = vmatpush1.msra.mxu0 0.0
        %880 = vmatprep.subr.mxu0 0.0
        %881 = vmatpush1.msra.mxu0 0.0
        %882 = vmatprep.subr.mxu0 0.0
        %883 = vmatpush1.msra.mxu0 0.0
        %884 = vmatprep.subr.mxu0 0.0
        %885 = vmatpush1.msra.mxu0 0.0
        %886 = vmatprep.subr.mxu0 0.0
        %887 = vmatpush1.msra.mxu0 0.0
        %888 = vmatprep.subr.mxu0 0.0
        %889 = vmatpush1.msra.mxu0 0.0
        %890 = vmatprep.subr.mxu0 0.0
        %891 = vmatpush1.msra.mxu0 0.0
        %892 = vmatprep.subr.mxu0 0.0
        %893 = vmatpush1.msra.mxu0 0.0
        %894 = vmatprep.subr.mxu0 0.0
        %895 = vmatpush1.msra.mxu0 0.0
        %896 = vmatprep.subr.mxu0 0.0
        %897 = vmatpush1.msra.mxu0 0.0
        %898 = vmatprep.subr.mxu0 0.0
        %899 = vmatpush1.msra.mxu0 0.0
        %900 = vmatprep.subr.mxu0 0.0
        %901 = vmatpush1.msra.mxu0 0.0
        %902 = vmatprep.subr.mxu0 0.0
        %903 = vmatpush1.msra.mxu0 0.0
        %904 = vmatprep.subr.mxu0 0.0
        %905 = vmatpush1.msra.mxu0 0.0
        %906 = vmatprep.subr.mxu0 0.0
        %907 = vmatpush1.msra.mxu0 0.0
        %908 = vmatprep.subr.mxu0 0.0
        %909 = vmatpush1.msra.mxu0 0.0
        %910 = vmatprep.subr.mxu0 0.0
        %911 = vmatpush1.msra.mxu0 0.0
        %912 = vmatprep.subr.mxu0 0.0
        %913 = vmatpush1.msra.mxu0 0.0
        %914 = vmatprep.mubr.f32.mxu0 0.0
        %915 = vmatmul.mubr.f32.gmra.mrb[0].mxu0 %v848
        %v916 = vpop.f32.mrb[0].mxu0
        %v917 = vadd.f32 %v311, %v916
        %v918 = vpop.f32.mrb[0].mxu0
        %919 = vdwg.mxu0
        %v920 = vadd.f32 %v847, %v917
        %v921 = vxor.u32 %v920, 2147483648
        %v922 = vmul.f32 %v921, 1.442695
        %v923 = vpow.pop %v922
        %v924 = vadd.f32 %v923, 1.0
        %v925 = vrcp.pop %v924
        %v926 = vmul.f32 1.0, %v925
        %928 = vrot.lane.b32.xlu0 %v917, 96
        %v929 = vpop.permute.xlu0 %928
        %v931 = vmul.f32 %v926, %v929
        %933 = vrot.lane.b32.xlu0 %v931, 32
        %v934 = vpop.permute.xlu0 %933
        %v936 = vadd.f32 %v847, %v934
        %v937 = vtanh.pop %v936
        %v938 = vsub.f32 1.0, %v926
        %940 = vrot.lane.b32.xlu0 %v937, 112
        %v941 = vpop.permute.xlu0 %940
        %v943 = vmul.f32 %v938, %v941
        %v944 = vmul.f32 %v926, %v839
        %v945 = vadd.f32 %v943, %v944
        %947 = vrot.lane.b32.xlu0 %v945, 112
        %v948 = vpop.permute.xlu0 %947
        %s950 = scalar_lea.vmem %s286, 10
        %951 = vst.msk [vmem:[%s950] sm:$0x3] %vm420, %v948
        %s952 = scalar_lea.vmem %s260, 12
        %v953 = vld [vmem:[%s952] sm:$0x3]
        %v954 = vsel %vm313, %v948, 0
        %956 = vmatprep.subr.mxu0 0.0
        %957 = vmatpush1.msra.mxu0 %v302
        %958 = vmatprep.subr.mxu0 0.0
        %959 = vmatpush1.msra.mxu0 %v303
        %960 = vmatprep.subr.mxu0 0.0
        %961 = vmatpush1.msra.mxu0 0.0
        %962 = vmatprep.subr.mxu0 0.0
        %963 = vmatpush1.msra.mxu0 0.0
        %964 = vmatprep.subr.mxu0 0.0
        %965 = vmatpush1.msra.mxu0 0.0
        %966 = vmatprep.subr.mxu0 0.0
        %967 = vmatpush1.msra.mxu0 0.0
        %968 = vmatprep.subr.mxu0 0.0
        %969 = vmatpush1.msra.mxu0 0.0
        %970 = vmatprep.subr.mxu0 0.0
        %971 = vmatpush1.msra.mxu0 0.0
        %972 = vmatprep.subr.mxu0 0.0
        %973 = vmatpush1.msra.mxu0 0.0
        %974 = vmatprep.subr.mxu0 0.0
        %975 = vmatpush1.msra.mxu0 0.0
        %976 = vmatprep.subr.mxu0 0.0
        %977 = vmatpush1.msra.mxu0 0.0
        %978 = vmatprep.subr.mxu0 0.0
        %979 = vmatpush1.msra.mxu0 0.0
        %980 = vmatprep.subr.mxu0 0.0
        %981 = vmatpush1.msra.mxu0 0.0
        %982 = vmatprep.subr.mxu0 0.0
        %983 = vmatpush1.msra.mxu0 0.0
        %984 = vmatprep.subr.mxu0 0.0
        %985 = vmatpush1.msra.mxu0 0.0
        %986 = vmatprep.subr.mxu0 0.0
        %987 = vmatpush1.msra.mxu0 0.0
        %988 = vmatprep.subr.mxu0 0.0
        %989 = vmatpush1.msra.mxu0 0.0
        %990 = vmatprep.subr.mxu0 0.0
        %991 = vmatpush1.msra.mxu0 0.0
        %992 = vmatprep.subr.mxu0 0.0
        %993 = vmatpush1.msra.mxu0 0.0
        %994 = vmatprep.subr.mxu0 0.0
        %995 = vmatpush1.msra.mxu0 0.0
        %996 = vmatprep.subr.mxu0 0.0
        %997 = vmatpush1.msra.mxu0 0.0
        %998 = vmatprep.subr.mxu0 0.0
        %999 = vmatpush1.msra.mxu0 0.0
        %1000 = vmatprep.subr.mxu0 0.0
        %1001 = vmatpush1.msra.mxu0 0.0
        %1002 = vmatprep.subr.mxu0 0.0
        %1003 = vmatpush1.msra.mxu0 0.0
        %1004 = vmatprep.subr.mxu0 0.0
        %1005 = vmatpush1.msra.mxu0 0.0
        %1006 = vmatprep.subr.mxu0 0.0
        %1007 = vmatpush1.msra.mxu0 0.0
        %1008 = vmatprep.subr.mxu0 0.0
        %1009 = vmatpush1.msra.mxu0 0.0
        %1010 = vmatprep.subr.mxu0 0.0
        %1011 = vmatpush1.msra.mxu0 0.0
        %1012 = vmatprep.subr.mxu0 0.0
        %1013 = vmatpush1.msra.mxu0 0.0
        %1014 = vmatprep.subr.mxu0 0.0
        %1015 = vmatpush1.msra.mxu0 0.0
        %1016 = vmatprep.subr.mxu0 0.0
        %1017 = vmatpush1.msra.mxu0 0.0
        %1018 = vmatprep.subr.mxu0 0.0
        %1019 = vmatpush1.msra.mxu0 0.0
        %1020 = vmatprep.mubr.f32.mxu0 0.0
        %1021 = vmatmul.mubr.f32.gmra.mrb[0].mxu0 %v954
        %v1022 = vpop.f32.mrb[0].mxu0
        %v1023 = vadd.f32 %v311, %v1022
        %v1024 = vpop.f32.mrb[0].mxu0
        %1025 = vdwg.mxu0
        %v1026 = vadd.f32 %v953, %v1023
        %v1027 = vxor.u32 %v1026, 2147483648
        %v1028 = vmul.f32 %v1027, 1.442695
        %v1029 = vpow.pop %v1028
        %v1030 = vadd.f32 %v1029, 1.0
        %v1031 = vrcp.pop %v1030
        %v1032 = vmul.f32 1.0, %v1031
        %1034 = vrot.lane.b32.xlu0 %v1023, 96
        %v1035 = vpop.permute.xlu0 %1034
        %v1037 = vmul.f32 %v1032, %v1035
        %1039 = vrot.lane.b32.xlu0 %v1037, 32
        %v1040 = vpop.permute.xlu0 %1039
        %v1042 = vadd.f32 %v953, %v1040
        %v1043 = vtanh.pop %v1042
        %v1044 = vsub.f32 1.0, %v1032
        %1046 = vrot.lane.b32.xlu0 %v1043, 112
        %v1047 = vpop.permute.xlu0 %1046
        %v1049 = vmul.f32 %v1044, %v1047
        %v1050 = vmul.f32 %v1032, %v945
        %v1051 = vadd.f32 %v1049, %v1050
        %1053 = vrot.lane.b32.xlu0 %v1051, 112
        %v1054 = vpop.permute.xlu0 %1053
        %s1056 = scalar_lea.vmem %s286, 12
        %1057 = vst.msk [vmem:[%s1056] sm:$0x3] %vm420, %v1054
        %s1058 = scalar_lea.vmem %s260, 14
        %v1059 = vld [vmem:[%s1058] sm:$0x3]
        %v1060 = vsel %vm313, %v1054, 0
        %1062 = vmatprep.subr.mxu0 0.0
        %1063 = vmatpush1.msra.mxu0 %v302
        %1064 = vmatprep.subr.mxu0 0.0
        %1065 = vmatpush1.msra.mxu0 %v303
        %1066 = vmatprep.subr.mxu0 0.0
        %1067 = vmatpush1.msra.mxu0 0.0
        %1068 = vmatprep.subr.mxu0 0.0
        %1069 = vmatpush1.msra.mxu0 0.0
        %1070 = vmatprep.subr.mxu0 0.0
        %1071 = vmatpush1.msra.mxu0 0.0
        %1072 = vmatprep.subr.mxu0 0.0
        %1073 = vmatpush1.msra.mxu0 0.0
        %1074 = vmatprep.subr.mxu0 0.0
        %1075 = vmatpush1.msra.mxu0 0.0
        %1076 = vmatprep.subr.mxu0 0.0
        %1077 = vmatpush1.msra.mxu0 0.0
        %1078 = vmatprep.subr.mxu0 0.0
        %1079 = vmatpush1.msra.mxu0 0.0
        %1080 = vmatprep.subr.mxu0 0.0
        %1081 = vmatpush1.msra.mxu0 0.0
        %1082 = vmatprep.subr.mxu0 0.0
        %1083 = vmatpush1.msra.mxu0 0.0
        %1084 = vmatprep.subr.mxu0 0.0
        %1085 = vmatpush1.msra.mxu0 0.0
        %1086 = vmatprep.subr.mxu0 0.0
        %1087 = vmatpush1.msra.mxu0 0.0
        %1088 = vmatprep.subr.mxu0 0.0
        %1089 = vmatpush1.msra.mxu0 0.0
        %1090 = vmatprep.subr.mxu0 0.0
        %1091 = vmatpush1.msra.mxu0 0.0
        %1092 = vmatprep.subr.mxu0 0.0
        %1093 = vmatpush1.msra.mxu0 0.0
        %1094 = vmatprep.subr.mxu0 0.0
        %1095 = vmatpush1.msra.mxu0 0.0
        %1096 = vmatprep.subr.mxu0 0.0
        %1097 = vmatpush1.msra.mxu0 0.0
        %1098 = vmatprep.subr.mxu0 0.0
        %1099 = vmatpush1.msra.mxu0 0.0
        %1100 = vmatprep.subr.mxu0 0.0
        %1101 = vmatpush1.msra.mxu0 0.0
        %1102 = vmatprep.subr.mxu0 0.0
        %1103 = vmatpush1.msra.mxu0 0.0
        %1104 = vmatprep.subr.mxu0 0.0
        %1105 = vmatpush1.msra.mxu0 0.0
        %1106 = vmatprep.subr.mxu0 0.0
        %1107 = vmatpush1.msra.mxu0 0.0
        %1108 = vmatprep.subr.mxu0 0.0
        %1109 = vmatpush1.msra.mxu0 0.0
        %1110 = vmatprep.subr.mxu0 0.0
        %1111 = vmatpush1.msra.mxu0 0.0
        %1112 = vmatprep.subr.mxu0 0.0
        %1113 = vmatpush1.msra.mxu0 0.0
        %1114 = vmatprep.subr.mxu0 0.0
        %1115 = vmatpush1.msra.mxu0 0.0
        %1116 = vmatprep.subr.mxu0 0.0
        %1117 = vmatpush1.msra.mxu0 0.0
        %1118 = vmatprep.subr.mxu0 0.0
        %1119 = vmatpush1.msra.mxu0 0.0
        %1120 = vmatprep.subr.mxu0 0.0
        %1121 = vmatpush1.msra.mxu0 0.0
        %1122 = vmatprep.subr.mxu0 0.0
        %1123 = vmatpush1.msra.mxu0 0.0
        %1124 = vmatprep.subr.mxu0 0.0
        %1125 = vmatpush1.msra.mxu0 0.0
        %1126 = vmatprep.mubr.f32.mxu0 0.0
        %1127 = vmatmul.mubr.f32.gmra.mrb[0].mxu0 %v1060
        %v1128 = vpop.f32.mrb[0].mxu0
        %v1129 = vadd.f32 %v311, %v1128
        %v1130 = vpop.f32.mrb[0].mxu0
        %1131 = vdwg.mxu0
        %v1132 = vadd.f32 %v1059, %v1129
        %v1133 = vxor.u32 %v1132, 2147483648
        %v1134 = vmul.f32 %v1133, 1.442695
        %v1135 = vpow.pop %v1134
        %v1136 = vadd.f32 %v1135, 1.0
        %v1137 = vrcp.pop %v1136
        %v1138 = vmul.f32 1.0, %v1137
        %1140 = vrot.lane.b32.xlu0 %v1129, 96
        %v1141 = vpop.permute.xlu0 %1140
        %v1143 = vmul.f32 %v1138, %v1141
        %1145 = vrot.lane.b32.xlu0 %v1143, 32
        %v1146 = vpop.permute.xlu0 %1145
        %v1148 = vadd.f32 %v1059, %v1146
        %v1149 = vtanh.pop %v1148
        %v1150 = vsub.f32 1.0, %v1138
        %1152 = vrot.lane.b32.xlu0 %v1149, 112
        %v1153 = vpop.permute.xlu0 %1152
        %v1155 = vmul.f32 %v1150, %v1153
        %v1156 = vmul.f32 %v1138, %v1051
        %v1157 = vadd.f32 %v1155, %v1156
        %1159 = vrot.lane.b32.xlu0 %v1157, 112
        %v1160 = vpop.permute.xlu0 %1159
        %s1162 = scalar_lea.vmem %s286, 14
        %1163 = vst.msk [vmem:[%s1162] sm:$0x3] %vm420, %v1160
        %1164 = vst.msk [vmem:[#allocation2] sm:$0x3] %vm420, %v1160
      $region40: #{_lambda_.7} parent=31 // pred_fallthru
        _
      %p1165 = scmp.eq.s32.totalorder %s18, 1
      // Predicated region
      $region41: #{_lambda_.7} parent=31 // pred_check
        %p1166 = pneg %p1165
      $region42: #{_lambda_.7} parent=31 // pred_check_branch
        %1168 = sbr.rel (%p1166) target = $region44
      $region43: #{_lambda_.7} parent=31 // pred_region
        %v1169 = vld [vmem:[%s270] sm:$0xff]
        %v1170 = vld [vmem:[%s270 + $0x8] sm:$0xff]
        %v1171 = vld [vmem:[%s273] sm:$0x1]
        %v1172 = vld [vmem:[#allocation2] sm:$0x3]
        %s1173 = scalar_lea.vmem %s260, 14
        %v1174 = vld [vmem:[%s1173] sm:$0x3]
        %v1176 = vlaneseq
        %v1177 = vshrl.u32 %v1176, 7
        %v1178 = vsub.s32 0, %v1177
        %v1179 = vrot.slane %v1171, %v1178
        %vm1181 = vcmask 130048
        %v1183 = vsel %vm1181, %v1172, 0
        %1185 = vmatprep.subr.mxu0 0.0
        %1186 = vmatpush1.msra.mxu0 %v1169
        %1187 = vmatprep.subr.mxu0 0.0
        %1188 = vmatpush1.msra.mxu0 %v1170
        %1189 = vmatprep.subr.mxu0 0.0
        %1190 = vmatpush1.msra.mxu0 0.0
        %1191 = vmatprep.subr.mxu0 0.0
        %1192 = vmatpush1.msra.mxu0 0.0
        %1193 = vmatprep.subr.mxu0 0.0
        %1194 = vmatpush1.msra.mxu0 0.0
        %1195 = vmatprep.subr.mxu0 0.0
        %1196 = vmatpush1.msra.mxu0 0.0
        %1197 = vmatprep.subr.mxu0 0.0
        %1198 = vmatpush1.msra.mxu0 0.0
        %1199 = vmatprep.subr.mxu0 0.0
        %1200 = vmatpush1.msra.mxu0 0.0
        %1201 = vmatprep.subr.mxu0 0.0
        %1202 = vmatpush1.msra.mxu0 0.0
        %1203 = vmatprep.subr.mxu0 0.0
        %1204 = vmatpush1.msra.mxu0 0.0
        %1205 = vmatprep.subr.mxu0 0.0
        %1206 = vmatpush1.msra.mxu0 0.0
        %1207 = vmatprep.subr.mxu0 0.0
        %1208 = vmatpush1.msra.mxu0 0.0
        %1209 = vmatprep.subr.mxu0 0.0
        %1210 = vmatpush1.msra.mxu0 0.0
        %1211 = vmatprep.subr.mxu0 0.0
        %1212 = vmatpush1.msra.mxu0 0.0
        %1213 = vmatprep.subr.mxu0 0.0
        %1214 = vmatpush1.msra.mxu0 0.0
        %1215 = vmatprep.subr.mxu0 0.0
        %1216 = vmatpush1.msra.mxu0 0.0
        %1217 = vmatprep.subr.mxu0 0.0
        %1218 = vmatpush1.msra.mxu0 0.0
        %1219 = vmatprep.subr.mxu0 0.0
        %1220 = vmatpush1.msra.mxu0 0.0
        %1221 = vmatprep.subr.mxu0 0.0
        %1222 = vmatpush1.msra.mxu0 0.0
        %1223 = vmatprep.subr.mxu0 0.0
        %1224 = vmatpush1.msra.mxu0 0.0
        %1225 = vmatprep.subr.mxu0 0.0
        %1226 = vmatpush1.msra.mxu0 0.0
        %1227 = vmatprep.subr.mxu0 0.0
        %1228 = vmatpush1.msra.mxu0 0.0
        %1229 = vmatprep.subr.mxu0 0.0
        %1230 = vmatpush1.msra.mxu0 0.0
        %1231 = vmatprep.subr.mxu0 0.0
        %1232 = vmatpush1.msra.mxu0 0.0
        %1233 = vmatprep.subr.mxu0 0.0
        %1234 = vmatpush1.msra.mxu0 0.0
        %1235 = vmatprep.subr.mxu0 0.0
        %1236 = vmatpush1.msra.mxu0 0.0
        %1237 = vmatprep.subr.mxu0 0.0
        %1238 = vmatpush1.msra.mxu0 0.0
        %1239 = vmatprep.subr.mxu0 0.0
        %1240 = vmatpush1.msra.mxu0 0.0
        %1241 = vmatprep.subr.mxu0 0.0
        %1242 = vmatpush1.msra.mxu0 0.0
        %1243 = vmatprep.subr.mxu0 0.0
        %1244 = vmatpush1.msra.mxu0 0.0
        %1245 = vmatprep.subr.mxu0 0.0
        %1246 = vmatpush1.msra.mxu0 0.0
        %1247 = vmatprep.subr.mxu0 0.0
        %1248 = vmatpush1.msra.mxu0 0.0
        %1249 = vmatprep.mubr.f32.mxu0 0.0
        %1250 = vmatmul.mubr.f32.gmra.mrb[0].mxu0 %v1183
        %v1251 = vpop.f32.mrb[0].mxu0
        %v1252 = vadd.f32 %v1179, %v1251
        %v1253 = vpop.f32.mrb[0].mxu0
        %1254 = vdwg.mxu0
        %v1255 = vadd.f32 %v1174, %v1252
        %v1256 = vxor.u32 %v1255, 2147483648
        %v1257 = vmul.f32 %v1256, 1.442695
        %v1258 = vpow.pop %v1257
        %v1259 = vadd.f32 %v1258, 1.0
        %v1260 = vrcp.pop %v1259
        %v1261 = vmul.f32 1.0, %v1260
        %1263 = vrot.lane.b32.xlu0 %v1252, 96
        %v1264 = vpop.permute.xlu0 %1263
        %v1266 = vmul.f32 %v1261, %v1264
        %1268 = vrot.lane.b32.xlu0 %v1266, 32
        %v1269 = vpop.permute.xlu0 %1268
        %v1271 = vadd.f32 %v1174, %v1269
        %v1272 = vtanh.pop %v1271
        %v1273 = vsub.f32 1.0, %v1261
        %1275 = vrot.lane.b32.xlu0 %v1272, 112
        %v1276 = vpop.permute.xlu0 %1275
        %v1278 = vmul.f32 %v1273, %v1276
        %1279 = vrot.lane.b32.xlu0 %v1172, 16
        %v1280 = vpop.permute.xlu0 %1279
        %v1282 = vmul.f32 %v1261, %v1280
        %v1283 = vadd.f32 %v1278, %v1282
        %1285 = vrot.lane.b32.xlu0 %v1283, 112
        %v1286 = vpop.permute.xlu0 %1285
        %s1288 = scalar_lea.vmem %s286, 14
        %vm1289 = vcmask 123904
        %1290 = vst.msk [vmem:[%s1288] sm:$0x3] %vm1289, %v1286
        %s1291 = scalar_lea.vmem %s260, 12
        %v1292 = vld [vmem:[%s1291] sm:$0x3]
        %v1293 = vsel %vm1181, %v1286, 0
        %1295 = vmatprep.subr.mxu0 0.0
        %1296 = vmatpush1.msra.mxu0 %v1169
        %1297 = vmatprep.subr.mxu0 0.0
        %1298 = vmatpush1.msra.mxu0 %v1170
        %1299 = vmatprep.subr.mxu0 0.0
        %1300 = vmatpush1.msra.mxu0 0.0
        %1301 = vmatprep.subr.mxu0 0.0
        %1302 = vmatpush1.msra.mxu0 0.0
        %1303 = vmatprep.subr.mxu0 0.0
        %1304 = vmatpush1.msra.mxu0 0.0
        %1305 = vmatprep.subr.mxu0 0.0
        %1306 = vmatpush1.msra.mxu0 0.0
        %1307 = vmatprep.subr.mxu0 0.0
        %1308 = vmatpush1.msra.mxu0 0.0
        %1309 = vmatprep.subr.mxu0 0.0
        %1310 = vmatpush1.msra.mxu0 0.0
        %1311 = vmatprep.subr.mxu0 0.0
        %1312 = vmatpush1.msra.mxu0 0.0
        %1313 = vmatprep.subr.mxu0 0.0
        %1314 = vmatpush1.msra.mxu0 0.0
        %1315 = vmatprep.subr.mxu0 0.0
        %1316 = vmatpush1.msra.mxu0 0.0
        %1317 = vmatprep.subr.mxu0 0.0
        %1318 = vmatpush1.msra.mxu0 0.0
        %1319 = vmatprep.subr.mxu0 0.0
        %1320 = vmatpush1.msra.mxu0 0.0
        %1321 = vmatprep.subr.mxu0 0.0
        %1322 = vmatpush1.msra.mxu0 0.0
        %1323 = vmatprep.subr.mxu0 0.0
        %1324 = vmatpush1.msra.mxu0 0.0
        %1325 = vmatprep.subr.mxu0 0.0
        %1326 = vmatpush1.msra.mxu0 0.0
        %1327 = vmatprep.subr.mxu0 0.0
        %1328 = vmatpush1.msra.mxu0 0.0
        %1329 = vmatprep.subr.mxu0 0.0
        %1330 = vmatpush1.msra.mxu0 0.0
        %1331 = vmatprep.subr.mxu0 0.0
        %1332 = vmatpush1.msra.mxu0 0.0
        %1333 = vmatprep.subr.mxu0 0.0
        %1334 = vmatpush1.msra.mxu0 0.0
        %1335 = vmatprep.subr.mxu0 0.0
        %1336 = vmatpush1.msra.mxu0 0.0
        %1337 = vmatprep.subr.mxu0 0.0
        %1338 = vmatpush1.msra.mxu0 0.0
        %1339 = vmatprep.subr.mxu0 0.0
        %1340 = vmatpush1.msra.mxu0 0.0
        %1341 = vmatprep.subr.mxu0 0.0
        %1342 = vmatpush1.msra.mxu0 0.0
        %1343 = vmatprep.subr.mxu0 0.0
        %1344 = vmatpush1.msra.mxu0 0.0
        %1345 = vmatprep.subr.mxu0 0.0
        %1346 = vmatpush1.msra.mxu0 0.0
        %1347 = vmatprep.subr.mxu0 0.0
        %1348 = vmatpush1.msra.mxu0 0.0
        %1349 = vmatprep.subr.mxu0 0.0
        %1350 = vmatpush1.msra.mxu0 0.0
        %1351 = vmatprep.subr.mxu0 0.0
        %1352 = vmatpush1.msra.mxu0 0.0
        %1353 = vmatprep.subr.mxu0 0.0
        %1354 = vmatpush1.msra.mxu0 0.0
        %1355 = vmatprep.subr.mxu0 0.0
        %1356 = vmatpush1.msra.mxu0 0.0
        %1357 = vmatprep.subr.mxu0 0.0
        %1358 = vmatpush1.msra.mxu0 0.0
        %1359 = vmatprep.mubr.f32.mxu0 0.0
        %1360 = vmatmul.mubr.f32.gmra.mrb[0].mxu0 %v1293
        %v1361 = vpop.f32.mrb[0].mxu0
        %v1362 = vadd.f32 %v1179, %v1361
        %v1363 = vpop.f32.mrb[0].mxu0
        %1364 = vdwg.mxu0
        %v1365 = vadd.f32 %v1292, %v1362
        %v1366 = vxor.u32 %v1365, 2147483648
        %v1367 = vmul.f32 %v1366, 1.442695
        %v1368 = vpow.pop %v1367
        %v1369 = vadd.f32 %v1368, 1.0
        %v1370 = vrcp.pop %v1369
        %v1371 = vmul.f32 1.0, %v1370
        %1373 = vrot.lane.b32.xlu0 %v1362, 96
        %v1374 = vpop.permute.xlu0 %1373
        %v1376 = vmul.f32 %v1371, %v1374
        %1378 = vrot.lane.b32.xlu0 %v1376, 32
        %v1379 = vpop.permute.xlu0 %1378
        %v1381 = vadd.f32 %v1292, %v1379
        %v1382 = vtanh.pop %v1381
        %v1383 = vsub.f32 1.0, %v1371
        %1385 = vrot.lane.b32.xlu0 %v1382, 112
        %v1386 = vpop.permute.xlu0 %1385
        %v1388 = vmul.f32 %v1383, %v1386
        %v1389 = vmul.f32 %v1371, %v1283
        %v1390 = vadd.f32 %v1388, %v1389
        %1392 = vrot.lane.b32.xlu0 %v1390, 112
        %v1393 = vpop.permute.xlu0 %1392
        %s1395 = scalar_lea.vmem %s286, 12
        %1396 = vst.msk [vmem:[%s1395] sm:$0x3] %vm1289, %v1393
        %s1397 = scalar_lea.vmem %s260, 10
        %v1398 = vld [vmem:[%s1397] sm:$0x3]
        %v1399 = vsel %vm1181, %v1393, 0
        %1401 = vmatprep.subr.mxu0 0.0
        %1402 = vmatpush1.msra.mxu0 %v1169
        %1403 = vmatprep.subr.mxu0 0.0
        %1404 = vmatpush1.msra.mxu0 %v1170
        %1405 = vmatprep.subr.mxu0 0.0
        %1406 = vmatpush1.msra.mxu0 0.0
        %1407 = vmatprep.subr.mxu0 0.0
        %1408 = vmatpush1.msra.mxu0 0.0
        %1409 = vmatprep.subr.mxu0 0.0
        %1410 = vmatpush1.msra.mxu0 0.0
        %1411 = vmatprep.subr.mxu0 0.0
        %1412 = vmatpush1.msra.mxu0 0.0
        %1413 = vmatprep.subr.mxu0 0.0
        %1414 = vmatpush1.msra.mxu0 0.0
        %1415 = vmatprep.subr.mxu0 0.0
        %1416 = vmatpush1.msra.mxu0 0.0
        %1417 = vmatprep.subr.mxu0 0.0
        %1418 = vmatpush1.msra.mxu0 0.0
        %1419 = vmatprep.subr.mxu0 0.0
        %1420 = vmatpush1.msra.mxu0 0.0
        %1421 = vmatprep.subr.mxu0 0.0
        %1422 = vmatpush1.msra.mxu0 0.0
        %1423 = vmatprep.subr.mxu0 0.0
        %1424 = vmatpush1.msra.mxu0 0.0
        %1425 = vmatprep.subr.mxu0 0.0
        %1426 = vmatpush1.msra.mxu0 0.0
        %1427 = vmatprep.subr.mxu0 0.0
        %1428 = vmatpush1.msra.mxu0 0.0
        %1429 = vmatprep.subr.mxu0 0.0
        %1430 = vmatpush1.msra.mxu0 0.0
        %1431 = vmatprep.subr.mxu0 0.0
        %1432 = vmatpush1.msra.mxu0 0.0
        %1433 = vmatprep.subr.mxu0 0.0
        %1434 = vmatpush1.msra.mxu0 0.0
        %1435 = vmatprep.subr.mxu0 0.0
        %1436 = vmatpush1.msra.mxu0 0.0
        %1437 = vmatprep.subr.mxu0 0.0
        %1438 = vmatpush1.msra.mxu0 0.0
        %1439 = vmatprep.subr.mxu0 0.0
        %1440 = vmatpush1.msra.mxu0 0.0
        %1441 = vmatprep.subr.mxu0 0.0
        %1442 = vmatpush1.msra.mxu0 0.0
        %1443 = vmatprep.subr.mxu0 0.0
        %1444 = vmatpush1.msra.mxu0 0.0
        %1445 = vmatprep.subr.mxu0 0.0
        %1446 = vmatpush1.msra.mxu0 0.0
        %1447 = vmatprep.subr.mxu0 0.0
        %1448 = vmatpush1.msra.mxu0 0.0
        %1449 = vmatprep.subr.mxu0 0.0
        %1450 = vmatpush1.msra.mxu0 0.0
        %1451 = vmatprep.subr.mxu0 0.0
        %1452 = vmatpush1.msra.mxu0 0.0
        %1453 = vmatprep.subr.mxu0 0.0
        %1454 = vmatpush1.msra.mxu0 0.0
        %1455 = vmatprep.subr.mxu0 0.0
        %1456 = vmatpush1.msra.mxu0 0.0
        %1457 = vmatprep.subr.mxu0 0.0
        %1458 = vmatpush1.msra.mxu0 0.0
        %1459 = vmatprep.subr.mxu0 0.0
        %1460 = vmatpush1.msra.mxu0 0.0
        %1461 = vmatprep.subr.mxu0 0.0
        %1462 = vmatpush1.msra.mxu0 0.0
        %1463 = vmatprep.subr.mxu0 0.0
        %1464 = vmatpush1.msra.mxu0 0.0
        %1465 = vmatprep.mubr.f32.mxu0 0.0
        %1466 = vmatmul.mubr.f32.gmra.mrb[0].mxu0 %v1399
        %v1467 = vpop.f32.mrb[0].mxu0
        %v1468 = vadd.f32 %v1179, %v1467
        %v1469 = vpop.f32.mrb[0].mxu0
        %1470 = vdwg.mxu0
        %v1471 = vadd.f32 %v1398, %v1468
        %v1472 = vxor.u32 %v1471, 2147483648
        %v1473 = vmul.f32 %v1472, 1.442695
        %v1474 = vpow.pop %v1473
        %v1475 = vadd.f32 %v1474, 1.0
        %v1476 = vrcp.pop %v1475
        %v1477 = vmul.f32 1.0, %v1476
        %1479 = vrot.lane.b32.xlu0 %v1468, 96
        %v1480 = vpop.permute.xlu0 %1479
        %v1482 = vmul.f32 %v1477, %v1480
        %1484 = vrot.lane.b32.xlu0 %v1482, 32
        %v1485 = vpop.permute.xlu0 %1484
        %v1487 = vadd.f32 %v1398, %v1485
        %v1488 = vtanh.pop %v1487
        %v1489 = vsub.f32 1.0, %v1477
        %1491 = vrot.lane.b32.xlu0 %v1488, 112
        %v1492 = vpop.permute.xlu0 %1491
        %v1494 = vmul.f32 %v1489, %v1492
        %v1495 = vmul.f32 %v1477, %v1390
        %v1496 = vadd.f32 %v1494, %v1495
        %1498 = vrot.lane.b32.xlu0 %v1496, 112
        %v1499 = vpop.permute.xlu0 %1498
        %s1501 = scalar_lea.vmem %s286, 10
        %1502 = vst.msk [vmem:[%s1501] sm:$0x3] %vm1289, %v1499
        %s1503 = scalar_lea.vmem %s260, 8
        %v1504 = vld [vmem:[%s1503] sm:$0x3]
        %v1505 = vsel %vm1181, %v1499, 0
        %1507 = vmatprep.subr.mxu0 0.0
        %1508 = vmatpush1.msra.mxu0 %v1169
        %1509 = vmatprep.subr.mxu0 0.0
        %1510 = vmatpush1.msra.mxu0 %v1170
        %1511 = vmatprep.subr.mxu0 0.0
        %1512 = vmatpush1.msra.mxu0 0.0
        %1513 = vmatprep.subr.mxu0 0.0
        %1514 = vmatpush1.msra.mxu0 0.0
        %1515 = vmatprep.subr.mxu0 0.0
        %1516 = vmatpush1.msra.mxu0 0.0
        %1517 = vmatprep.subr.mxu0 0.0
        %1518 = vmatpush1.msra.mxu0 0.0
        %1519 = vmatprep.subr.mxu0 0.0
        %1520 = vmatpush1.msra.mxu0 0.0
        %1521 = vmatprep.subr.mxu0 0.0
        %1522 = vmatpush1.msra.mxu0 0.0
        %1523 = vmatprep.subr.mxu0 0.0
        %1524 = vmatpush1.msra.mxu0 0.0
        %1525 = vmatprep.subr.mxu0 0.0
        %1526 = vmatpush1.msra.mxu0 0.0
        %1527 = vmatprep.subr.mxu0 0.0
        %1528 = vmatpush1.msra.mxu0 0.0
        %1529 = vmatprep.subr.mxu0 0.0
        %1530 = vmatpush1.msra.mxu0 0.0
        %1531 = vmatprep.subr.mxu0 0.0
        %1532 = vmatpush1.msra.mxu0 0.0
        %1533 = vmatprep.subr.mxu0 0.0
        %1534 = vmatpush1.msra.mxu0 0.0
        %1535 = vmatprep.subr.mxu0 0.0
        %1536 = vmatpush1.msra.mxu0 0.0
        %1537 = vmatprep.subr.mxu0 0.0
        %1538 = vmatpush1.msra.mxu0 0.0
        %1539 = vmatprep.subr.mxu0 0.0
        %1540 = vmatpush1.msra.mxu0 0.0
        %1541 = vmatprep.subr.mxu0 0.0
        %1542 = vmatpush1.msra.mxu0 0.0
        %1543 = vmatprep.subr.mxu0 0.0
        %1544 = vmatpush1.msra.mxu0 0.0
        %1545 = vmatprep.subr.mxu0 0.0
        %1546 = vmatpush1.msra.mxu0 0.0
        %1547 = vmatprep.subr.mxu0 0.0
        %1548 = vmatpush1.msra.mxu0 0.0
        %1549 = vmatprep.subr.mxu0 0.0
        %1550 = vmatpush1.msra.mxu0 0.0
        %1551 = vmatprep.subr.mxu0 0.0
        %1552 = vmatpush1.msra.mxu0 0.0
        %1553 = vmatprep.subr.mxu0 0.0
        %1554 = vmatpush1.msra.mxu0 0.0
        %1555 = vmatprep.subr.mxu0 0.0
        %1556 = vmatpush1.msra.mxu0 0.0
        %1557 = vmatprep.subr.mxu0 0.0
        %1558 = vmatpush1.msra.mxu0 0.0
        %1559 = vmatprep.subr.mxu0 0.0
        %1560 = vmatpush1.msra.mxu0 0.0
        %1561 = vmatprep.subr.mxu0 0.0
        %1562 = vmatpush1.msra.mxu0 0.0
        %1563 = vmatprep.subr.mxu0 0.0
        %1564 = vmatpush1.msra.mxu0 0.0
        %1565 = vmatprep.subr.mxu0 0.0
        %1566 = vmatpush1.msra.mxu0 0.0
        %1567 = vmatprep.subr.mxu0 0.0
        %1568 = vmatpush1.msra.mxu0 0.0
        %1569 = vmatprep.subr.mxu0 0.0
        %1570 = vmatpush1.msra.mxu0 0.0
        %1571 = vmatprep.mubr.f32.mxu0 0.0
        %1572 = vmatmul.mubr.f32.gmra.mrb[0].mxu0 %v1505
        %v1573 = vpop.f32.mrb[0].mxu0
        %v1574 = vadd.f32 %v1179, %v1573
        %v1575 = vpop.f32.mrb[0].mxu0
        %1576 = vdwg.mxu0
        %v1577 = vadd.f32 %v1504, %v1574
        %v1578 = vxor.u32 %v1577, 2147483648
        %v1579 = vmul.f32 %v1578, 1.442695
        %v1580 = vpow.pop %v1579
        %v1581 = vadd.f32 %v1580, 1.0
        %v1582 = vrcp.pop %v1581
        %v1583 = vmul.f32 1.0, %v1582
        %1585 = vrot.lane.b32.xlu0 %v1574, 96
        %v1586 = vpop.permute.xlu0 %1585
        %v1588 = vmul.f32 %v1583, %v1586
        %1590 = vrot.lane.b32.xlu0 %v1588, 32
        %v1591 = vpop.permute.xlu0 %1590
        %v1593 = vadd.f32 %v1504, %v1591
        %v1594 = vtanh.pop %v1593
        %v1595 = vsub.f32 1.0, %v1583
        %1597 = vrot.lane.b32.xlu0 %v1594, 112
        %v1598 = vpop.permute.xlu0 %1597
        %v1600 = vmul.f32 %v1595, %v1598
        %v1601 = vmul.f32 %v1583, %v1496
        %v1602 = vadd.f32 %v1600, %v1601
        %1604 = vrot.lane.b32.xlu0 %v1602, 112
        %v1605 = vpop.permute.xlu0 %1604
        %s1607 = scalar_lea.vmem %s286, 8
        %1608 = vst.msk [vmem:[%s1607] sm:$0x3] %vm1289, %v1605
        %s1609 = scalar_lea.vmem %s260, 6
        %v1610 = vld [vmem:[%s1609] sm:$0x3]
        %v1611 = vsel %vm1181, %v1605, 0
        %1613 = vmatprep.subr.mxu0 0.0
        %1614 = vmatpush1.msra.mxu0 %v1169
        %1615 = vmatprep.subr.mxu0 0.0
        %1616 = vmatpush1.msra.mxu0 %v1170
        %1617 = vmatprep.subr.mxu0 0.0
        %1618 = vmatpush1.msra.mxu0 0.0
        %1619 = vmatprep.subr.mxu0 0.0
        %1620 = vmatpush1.msra.mxu0 0.0
        %1621 = vmatprep.subr.mxu0 0.0
        %1622 = vmatpush1.msra.mxu0 0.0
        %1623 = vmatprep.subr.mxu0 0.0
        %1624 = vmatpush1.msra.mxu0 0.0
        %1625 = vmatprep.subr.mxu0 0.0
        %1626 = vmatpush1.msra.mxu0 0.0
        %1627 = vmatprep.subr.mxu0 0.0
        %1628 = vmatpush1.msra.mxu0 0.0
        %1629 = vmatprep.subr.mxu0 0.0
        %1630 = vmatpush1.msra.mxu0 0.0
        %1631 = vmatprep.subr.mxu0 0.0
        %1632 = vmatpush1.msra.mxu0 0.0
        %1633 = vmatprep.subr.mxu0 0.0
        %1634 = vmatpush1.msra.mxu0 0.0
        %1635 = vmatprep.subr.mxu0 0.0
        %1636 = vmatpush1.msra.mxu0 0.0
        %1637 = vmatprep.subr.mxu0 0.0
        %1638 = vmatpush1.msra.mxu0 0.0
        %1639 = vmatprep.subr.mxu0 0.0
        %1640 = vmatpush1.msra.mxu0 0.0
        %1641 = vmatprep.subr.mxu0 0.0
        %1642 = vmatpush1.msra.mxu0 0.0
        %1643 = vmatprep.subr.mxu0 0.0
        %1644 = vmatpush1.msra.mxu0 0.0
        %1645 = vmatprep.subr.mxu0 0.0
        %1646 = vmatpush1.msra.mxu0 0.0
        %1647 = vmatprep.subr.mxu0 0.0
        %1648 = vmatpush1.msra.mxu0 0.0
        %1649 = vmatprep.subr.mxu0 0.0
        %1650 = vmatpush1.msra.mxu0 0.0
        %1651 = vmatprep.subr.mxu0 0.0
        %1652 = vmatpush1.msra.mxu0 0.0
        %1653 = vmatprep.subr.mxu0 0.0
        %1654 = vmatpush1.msra.mxu0 0.0
        %1655 = vmatprep.subr.mxu0 0.0
        %1656 = vmatpush1.msra.mxu0 0.0
        %1657 = vmatprep.subr.mxu0 0.0
        %1658 = vmatpush1.msra.mxu0 0.0
        %1659 = vmatprep.subr.mxu0 0.0
        %1660 = vmatpush1.msra.mxu0 0.0
        %1661 = vmatprep.subr.mxu0 0.0
        %1662 = vmatpush1.msra.mxu0 0.0
        %1663 = vmatprep.subr.mxu0 0.0
        %1664 = vmatpush1.msra.mxu0 0.0
        %1665 = vmatprep.subr.mxu0 0.0
        %1666 = vmatpush1.msra.mxu0 0.0
        %1667 = vmatprep.subr.mxu0 0.0
        %1668 = vmatpush1.msra.mxu0 0.0
        %1669 = vmatprep.subr.mxu0 0.0
        %1670 = vmatpush1.msra.mxu0 0.0
        %1671 = vmatprep.subr.mxu0 0.0
        %1672 = vmatpush1.msra.mxu0 0.0
        %1673 = vmatprep.subr.mxu0 0.0
        %1674 = vmatpush1.msra.mxu0 0.0
        %1675 = vmatprep.subr.mxu0 0.0
        %1676 = vmatpush1.msra.mxu0 0.0
        %1677 = vmatprep.mubr.f32.mxu0 0.0
        %1678 = vmatmul.mubr.f32.gmra.mrb[0].mxu0 %v1611
        %v1679 = vpop.f32.mrb[0].mxu0
        %v1680 = vadd.f32 %v1179, %v1679
        %v1681 = vpop.f32.mrb[0].mxu0
        %1682 = vdwg.mxu0
        %v1683 = vadd.f32 %v1610, %v1680
        %v1684 = vxor.u32 %v1683, 2147483648
        %v1685 = vmul.f32 %v1684, 1.442695
        %v1686 = vpow.pop %v1685
        %v1687 = vadd.f32 %v1686, 1.0
        %v1688 = vrcp.pop %v1687
        %v1689 = vmul.f32 1.0, %v1688
        %1691 = vrot.lane.b32.xlu0 %v1680, 96
        %v1692 = vpop.permute.xlu0 %1691
        %v1694 = vmul.f32 %v1689, %v1692
        %1696 = vrot.lane.b32.xlu0 %v1694, 32
        %v1697 = vpop.permute.xlu0 %1696
        %v1699 = vadd.f32 %v1610, %v1697
        %v1700 = vtanh.pop %v1699
        %v1701 = vsub.f32 1.0, %v1689
        %1703 = vrot.lane.b32.xlu0 %v1700, 112
        %v1704 = vpop.permute.xlu0 %1703
        %v1706 = vmul.f32 %v1701, %v1704
        %v1707 = vmul.f32 %v1689, %v1602
        %v1708 = vadd.f32 %v1706, %v1707
        %1710 = vrot.lane.b32.xlu0 %v1708, 112
        %v1711 = vpop.permute.xlu0 %1710
        %s1713 = scalar_lea.vmem %s286, 6
        %1714 = vst.msk [vmem:[%s1713] sm:$0x3] %vm1289, %v1711
        %s1715 = scalar_lea.vmem %s260, 4
        %v1716 = vld [vmem:[%s1715] sm:$0x3]
        %v1717 = vsel %vm1181, %v1711, 0
        %1719 = vmatprep.subr.mxu0 0.0
        %1720 = vmatpush1.msra.mxu0 %v1169
        %1721 = vmatprep.subr.mxu0 0.0
        %1722 = vmatpush1.msra.mxu0 %v1170
        %1723 = vmatprep.subr.mxu0 0.0
        %1724 = vmatpush1.msra.mxu0 0.0
        %1725 = vmatprep.subr.mxu0 0.0
        %1726 = vmatpush1.msra.mxu0 0.0
        %1727 = vmatprep.subr.mxu0 0.0
        %1728 = vmatpush1.msra.mxu0 0.0
        %1729 = vmatprep.subr.mxu0 0.0
        %1730 = vmatpush1.msra.mxu0 0.0
        %1731 = vmatprep.subr.mxu0 0.0
        %1732 = vmatpush1.msra.mxu0 0.0
        %1733 = vmatprep.subr.mxu0 0.0
        %1734 = vmatpush1.msra.mxu0 0.0
        %1735 = vmatprep.subr.mxu0 0.0
        %1736 = vmatpush1.msra.mxu0 0.0
        %1737 = vmatprep.subr.mxu0 0.0
        %1738 = vmatpush1.msra.mxu0 0.0
        %1739 = vmatprep.subr.mxu0 0.0
        %1740 = vmatpush1.msra.mxu0 0.0
        %1741 = vmatprep.subr.mxu0 0.0
        %1742 = vmatpush1.msra.mxu0 0.0
        %1743 = vmatprep.subr.mxu0 0.0
        %1744 = vmatpush1.msra.mxu0 0.0
        %1745 = vmatprep.subr.mxu0 0.0
        %1746 = vmatpush1.msra.mxu0 0.0
        %1747 = vmatprep.subr.mxu0 0.0
        %1748 = vmatpush1.msra.mxu0 0.0
        %1749 = vmatprep.subr.mxu0 0.0
        %1750 = vmatpush1.msra.mxu0 0.0
        %1751 = vmatprep.subr.mxu0 0.0
        %1752 = vmatpush1.msra.mxu0 0.0
        %1753 = vmatprep.subr.mxu0 0.0
        %1754 = vmatpush1.msra.mxu0 0.0
        %1755 = vmatprep.subr.mxu0 0.0
        %1756 = vmatpush1.msra.mxu0 0.0
        %1757 = vmatprep.subr.mxu0 0.0
        %1758 = vmatpush1.msra.mxu0 0.0
        %1759 = vmatprep.subr.mxu0 0.0
        %1760 = vmatpush1.msra.mxu0 0.0
        %1761 = vmatprep.subr.mxu0 0.0
        %1762 = vmatpush1.msra.mxu0 0.0
        %1763 = vmatprep.subr.mxu0 0.0
        %1764 = vmatpush1.msra.mxu0 0.0
        %1765 = vmatprep.subr.mxu0 0.0
        %1766 = vmatpush1.msra.mxu0 0.0
        %1767 = vmatprep.subr.mxu0 0.0
        %1768 = vmatpush1.msra.mxu0 0.0
        %1769 = vmatprep.subr.mxu0 0.0
        %1770 = vmatpush1.msra.mxu0 0.0
        %1771 = vmatprep.subr.mxu0 0.0
        %1772 = vmatpush1.msra.mxu0 0.0
        %1773 = vmatprep.subr.mxu0 0.0
        %1774 = vmatpush1.msra.mxu0 0.0
        %1775 = vmatprep.subr.mxu0 0.0
        %1776 = vmatpush1.msra.mxu0 0.0
        %1777 = vmatprep.subr.mxu0 0.0
        %1778 = vmatpush1.msra.mxu0 0.0
        %1779 = vmatprep.subr.mxu0 0.0
        %1780 = vmatpush1.msra.mxu0 0.0
        %1781 = vmatprep.subr.mxu0 0.0
        %1782 = vmatpush1.msra.mxu0 0.0
        %1783 = vmatprep.mubr.f32.mxu0 0.0
        %1784 = vmatmul.mubr.f32.gmra.mrb[0].mxu0 %v1717
        %v1785 = vpop.f32.mrb[0].mxu0
        %v1786 = vadd.f32 %v1179, %v1785
        %v1787 = vpop.f32.mrb[0].mxu0
        %1788 = vdwg.mxu0
        %v1789 = vadd.f32 %v1716, %v1786
        %v1790 = vxor.u32 %v1789, 2147483648
        %v1791 = vmul.f32 %v1790, 1.442695
        %v1792 = vpow.pop %v1791
        %v1793 = vadd.f32 %v1792, 1.0
        %v1794 = vrcp.pop %v1793
        %v1795 = vmul.f32 1.0, %v1794
        %1797 = vrot.lane.b32.xlu0 %v1786, 96
        %v1798 = vpop.permute.xlu0 %1797
        %v1800 = vmul.f32 %v1795, %v1798
        %1802 = vrot.lane.b32.xlu0 %v1800, 32
        %v1803 = vpop.permute.xlu0 %1802
        %v1805 = vadd.f32 %v1716, %v1803
        %v1806 = vtanh.pop %v1805
        %v1807 = vsub.f32 1.0, %v1795
        %1809 = vrot.lane.b32.xlu0 %v1806, 112
        %v1810 = vpop.permute.xlu0 %1809
        %v1812 = vmul.f32 %v1807, %v1810
        %v1813 = vmul.f32 %v1795, %v1708
        %v1814 = vadd.f32 %v1812, %v1813
        %1816 = vrot.lane.b32.xlu0 %v1814, 112
        %v1817 = vpop.permute.xlu0 %1816
        %s1819 = scalar_lea.vmem %s286, 4
        %1820 = vst.msk [vmem:[%s1819] sm:$0x3] %vm1289, %v1817
        %s1821 = scalar_lea.vmem %s260, 2
        %v1822 = vld [vmem:[%s1821] sm:$0x3]
        %v1823 = vsel %vm1181, %v1817, 0
        %1825 = vmatprep.subr.mxu0 0.0
        %1826 = vmatpush1.msra.mxu0 %v1169
        %1827 = vmatprep.subr.mxu0 0.0
        %1828 = vmatpush1.msra.mxu0 %v1170
        %1829 = vmatprep.subr.mxu0 0.0
        %1830 = vmatpush1.msra.mxu0 0.0
        %1831 = vmatprep.subr.mxu0 0.0
        %1832 = vmatpush1.msra.mxu0 0.0
        %1833 = vmatprep.subr.mxu0 0.0
        %1834 = vmatpush1.msra.mxu0 0.0
        %1835 = vmatprep.subr.mxu0 0.0
        %1836 = vmatpush1.msra.mxu0 0.0
        %1837 = vmatprep.subr.mxu0 0.0
        %1838 = vmatpush1.msra.mxu0 0.0
        %1839 = vmatprep.subr.mxu0 0.0
        %1840 = vmatpush1.msra.mxu0 0.0
        %1841 = vmatprep.subr.mxu0 0.0
        %1842 = vmatpush1.msra.mxu0 0.0
        %1843 = vmatprep.subr.mxu0 0.0
        %1844 = vmatpush1.msra.mxu0 0.0
        %1845 = vmatprep.subr.mxu0 0.0
        %1846 = vmatpush1.msra.mxu0 0.0
        %1847 = vmatprep.subr.mxu0 0.0
        %1848 = vmatpush1.msra.mxu0 0.0
        %1849 = vmatprep.subr.mxu0 0.0
        %1850 = vmatpush1.msra.mxu0 0.0
        %1851 = vmatprep.subr.mxu0 0.0
        %1852 = vmatpush1.msra.mxu0 0.0
        %1853 = vmatprep.subr.mxu0 0.0
        %1854 = vmatpush1.msra.mxu0 0.0
        %1855 = vmatprep.subr.mxu0 0.0
        %1856 = vmatpush1.msra.mxu0 0.0
        %1857 = vmatprep.subr.mxu0 0.0
        %1858 = vmatpush1.msra.mxu0 0.0
        %1859 = vmatprep.subr.mxu0 0.0
        %1860 = vmatpush1.msra.mxu0 0.0
        %1861 = vmatprep.subr.mxu0 0.0
        %1862 = vmatpush1.msra.mxu0 0.0
        %1863 = vmatprep.subr.mxu0 0.0
        %1864 = vmatpush1.msra.mxu0 0.0
        %1865 = vmatprep.subr.mxu0 0.0
        %1866 = vmatpush1.msra.mxu0 0.0
        %1867 = vmatprep.subr.mxu0 0.0
        %1868 = vmatpush1.msra.mxu0 0.0
        %1869 = vmatprep.subr.mxu0 0.0
        %1870 = vmatpush1.msra.mxu0 0.0
        %1871 = vmatprep.subr.mxu0 0.0
        %1872 = vmatpush1.msra.mxu0 0.0
        %1873 = vmatprep.subr.mxu0 0.0
        %1874 = vmatpush1.msra.mxu0 0.0
        %1875 = vmatprep.subr.mxu0 0.0
        %1876 = vmatpush1.msra.mxu0 0.0
        %1877 = vmatprep.subr.mxu0 0.0
        %1878 = vmatpush1.msra.mxu0 0.0
        %1879 = vmatprep.subr.mxu0 0.0
        %1880 = vmatpush1.msra.mxu0 0.0
        %1881 = vmatprep.subr.mxu0 0.0
        %1882 = vmatpush1.msra.mxu0 0.0
        %1883 = vmatprep.subr.mxu0 0.0
        %1884 = vmatpush1.msra.mxu0 0.0
        %1885 = vmatprep.subr.mxu0 0.0
        %1886 = vmatpush1.msra.mxu0 0.0
        %1887 = vmatprep.subr.mxu0 0.0
        %1888 = vmatpush1.msra.mxu0 0.0
        %1889 = vmatprep.mubr.f32.mxu0 0.0
        %1890 = vmatmul.mubr.f32.gmra.mrb[0].mxu0 %v1823
        %v1891 = vpop.f32.mrb[0].mxu0
        %v1892 = vadd.f32 %v1179, %v1891
        %v1893 = vpop.f32.mrb[0].mxu0
        %1894 = vdwg.mxu0
        %v1895 = vadd.f32 %v1822, %v1892
        %v1896 = vxor.u32 %v1895, 2147483648
        %v1897 = vmul.f32 %v1896, 1.442695
        %v1898 = vpow.pop %v1897
        %v1899 = vadd.f32 %v1898, 1.0
        %v1900 = vrcp.pop %v1899
        %v1901 = vmul.f32 1.0, %v1900
        %1903 = vrot.lane.b32.xlu0 %v1892, 96
        %v1904 = vpop.permute.xlu0 %1903
        %v1906 = vmul.f32 %v1901, %v1904
        %1908 = vrot.lane.b32.xlu0 %v1906, 32
        %v1909 = vpop.permute.xlu0 %1908
        %v1911 = vadd.f32 %v1822, %v1909
        %v1912 = vtanh.pop %v1911
        %v1913 = vsub.f32 1.0, %v1901
        %1915 = vrot.lane.b32.xlu0 %v1912, 112
        %v1916 = vpop.permute.xlu0 %1915
        %v1918 = vmul.f32 %v1913, %v1916
        %v1919 = vmul.f32 %v1901, %v1814
        %v1920 = vadd.f32 %v1918, %v1919
        %1922 = vrot.lane.b32.xlu0 %v1920, 112
        %v1923 = vpop.permute.xlu0 %1922
        %s1925 = scalar_lea.vmem %s286, 2
        %1926 = vst.msk [vmem:[%s1925] sm:$0x3] %vm1289, %v1923
        %v1927 = vld [vmem:[%s260] sm:$0x3]
        %v1928 = vsel %vm1181, %v1923, 0
        %1930 = vmatprep.subr.mxu0 0.0
        %1931 = vmatpush1.msra.mxu0 %v1169
        %1932 = vmatprep.subr.mxu0 0.0
        %1933 = vmatpush1.msra.mxu0 %v1170
        %1934 = vmatprep.subr.mxu0 0.0
        %1935 = vmatpush1.msra.mxu0 0.0
        %1936 = vmatprep.subr.mxu0 0.0
        %1937 = vmatpush1.msra.mxu0 0.0
        %1938 = vmatprep.subr.mxu0 0.0
        %1939 = vmatpush1.msra.mxu0 0.0
        %1940 = vmatprep.subr.mxu0 0.0
        %1941 = vmatpush1.msra.mxu0 0.0
        %1942 = vmatprep.subr.mxu0 0.0
        %1943 = vmatpush1.msra.mxu0 0.0
        %1944 = vmatprep.subr.mxu0 0.0
        %1945 = vmatpush1.msra.mxu0 0.0
        %1946 = vmatprep.subr.mxu0 0.0
        %1947 = vmatpush1.msra.mxu0 0.0
        %1948 = vmatprep.subr.mxu0 0.0
        %1949 = vmatpush1.msra.mxu0 0.0
        %1950 = vmatprep.subr.mxu0 0.0
        %1951 = vmatpush1.msra.mxu0 0.0
        %1952 = vmatprep.subr.mxu0 0.0
        %1953 = vmatpush1.msra.mxu0 0.0
        %1954 = vmatprep.subr.mxu0 0.0
        %1955 = vmatpush1.msra.mxu0 0.0
        %1956 = vmatprep.subr.mxu0 0.0
        %1957 = vmatpush1.msra.mxu0 0.0
        %1958 = vmatprep.subr.mxu0 0.0
        %1959 = vmatpush1.msra.mxu0 0.0
        %1960 = vmatprep.subr.mxu0 0.0
        %1961 = vmatpush1.msra.mxu0 0.0
        %1962 = vmatprep.subr.mxu0 0.0
        %1963 = vmatpush1.msra.mxu0 0.0
        %1964 = vmatprep.subr.mxu0 0.0
        %1965 = vmatpush1.msra.mxu0 0.0
        %1966 = vmatprep.subr.mxu0 0.0
        %1967 = vmatpush1.msra.mxu0 0.0
        %1968 = vmatprep.subr.mxu0 0.0
        %1969 = vmatpush1.msra.mxu0 0.0
        %1970 = vmatprep.subr.mxu0 0.0
        %1971 = vmatpush1.msra.mxu0 0.0
        %1972 = vmatprep.subr.mxu0 0.0
        %1973 = vmatpush1.msra.mxu0 0.0
        %1974 = vmatprep.subr.mxu0 0.0
        %1975 = vmatpush1.msra.mxu0 0.0
        %1976 = vmatprep.subr.mxu0 0.0
        %1977 = vmatpush1.msra.mxu0 0.0
        %1978 = vmatprep.subr.mxu0 0.0
        %1979 = vmatpush1.msra.mxu0 0.0
        %1980 = vmatprep.subr.mxu0 0.0
        %1981 = vmatpush1.msra.mxu0 0.0
        %1982 = vmatprep.subr.mxu0 0.0
        %1983 = vmatpush1.msra.mxu0 0.0
        %1984 = vmatprep.subr.mxu0 0.0
        %1985 = vmatpush1.msra.mxu0 0.0
        %1986 = vmatprep.subr.mxu0 0.0
        %1987 = vmatpush1.msra.mxu0 0.0
        %1988 = vmatprep.subr.mxu0 0.0
        %1989 = vmatpush1.msra.mxu0 0.0
        %1990 = vmatprep.subr.mxu0 0.0
        %1991 = vmatpush1.msra.mxu0 0.0
        %1992 = vmatprep.subr.mxu0 0.0
        %1993 = vmatpush1.msra.mxu0 0.0
        %1994 = vmatprep.mubr.f32.mxu0 0.0
        %1995 = vmatmul.mubr.f32.gmra.mrb[0].mxu0 %v1928
        %v1996 = vpop.f32.mrb[0].mxu0
        %v1997 = vadd.f32 %v1179, %v1996
        %v1998 = vpop.f32.mrb[0].mxu0
        %1999 = vdwg.mxu0
        %v2000 = vadd.f32 %v1927, %v1997
        %v2001 = vxor.u32 %v2000, 2147483648
        %v2002 = vmul.f32 %v2001, 1.442695
        %v2003 = vpow.pop %v2002
        %v2004 = vadd.f32 %v2003, 1.0
        %v2005 = vrcp.pop %v2004
        %v2006 = vmul.f32 1.0, %v2005
        %2008 = vrot.lane.b32.xlu0 %v1997, 96
        %v2009 = vpop.permute.xlu0 %2008
        %v2011 = vmul.f32 %v2006, %v2009
        %2013 = vrot.lane.b32.xlu0 %v2011, 32
        %v2014 = vpop.permute.xlu0 %2013
        %v2016 = vadd.f32 %v1927, %v2014
        %v2017 = vtanh.pop %v2016
        %v2018 = vsub.f32 1.0, %v2006
        %2020 = vrot.lane.b32.xlu0 %v2017, 112
        %v2021 = vpop.permute.xlu0 %2020
        %v2023 = vmul.f32 %v2018, %v2021
        %v2024 = vmul.f32 %v2006, %v1920
        %v2025 = vadd.f32 %v2023, %v2024
        %2027 = vrot.lane.b32.xlu0 %v2025, 112
        %v2028 = vpop.permute.xlu0 %2027
        %2030 = vst.msk [vmem:[%s286] sm:$0x3] %vm1289, %v2028
        %2031 = vst.msk [vmem:[#allocation2] sm:$0x3] %vm1289, %v2028
      $region44: #{_lambda_.7} parent=31 // pred_fallthru
        _
      %s2032 = smul.u32 %s19, 2
      %s2033 = ssub.s32 0, %s2032
      %s2034 = smul.u32 %s18, %s2033
      %s2035 = sadd.s32 %s19, %s2034
      %s2036 = smul.u32 8, %s2035
      %p2037 = scmp.lt.s32.totalorder %s18, 1
      %s2038 = scalar_select %p2037, %s18, 1
      %p2039 = scmp.lt.s32.totalorder %s2036, 7
      %s2040 = scalar_select %p2039, %s2036, 7
      %s2041 = smul.addr %s2038, 8
      %s2042 = sadd.s32 %s2040, %s2041
      %s2043 = smul.addr %s2042, 2
      %s2044 = scalar_lea.vmem %s3, %s2043
      // Predicated region
      $region45: #{_lambda_.7} parent=31 // pred_check
        %p2045 = pneg %p142
      $region46: #{_lambda_.7} parent=31 // pred_check_branch
        %2047 = sbr.rel (%p2045) target = $region48
      $region47: #{_lambda_.7} parent=31 // pred_region
        %s2048 = smul.u32 %s19, 2
        %s2049 = ssub.s32 0, %s2048
        %s2050 = smul.u32 %s18, %s2049
        %s2051 = sadd.s32 %s19, %s2050
        %s2052 = smul.u32 8, %s2051
      $region48: #{_lambda_.7} parent=31 // pred_fallthru
        _
    $region32: #{_lambda_.7} parent=5 // pred_fallthru
      _
    %p2053 = scmp.le.s32.totalorder 2, %s9
    // Predicated region
    $region49: #{_lambda_.7} parent=5 // pred_check
      %p2054 = pneg %p2053
    $region50: #{_lambda_.7} parent=5 // pred_check_branch
      %2056 = sbr.rel (%p2054) target = $region52
    $region51: #{_lambda_.7} parent=5 // pred_region
      %s2057 = ssub.s32 %s9, 2
      // Predicated region
      $region53: #{_lambda_.7} parent=51 // pred_check
        %p2058 = pneg %p148
      $region54: #{_lambda_.7} parent=51 // pred_check_branch
        %2060 = sbr.rel (%p2058) target = $region56
      $region55: #{_lambda_.7} parent=51 // pred_region
        %s2061 = smul.u32 %s21, 2
        %s2062 = ssub.s32 0, %s2061
        %s2063 = smul.u32 %s20, %s2062
        %s2064 = sadd.s32 %s21, %s2063
        %s2065 = smul.u32 8, %s2064
        %p2066 = scmp.lt.s32.totalorder %s20, 1
        %s2067 = scalar_select %p2066, %s20, 1
        %p2068 = scmp.lt.s32.totalorder %s2065, 7
        %s2069 = scalar_select %p2068, %s2065, 7
        %s2070 = smul.addr %s2067, 8
        %s2071 = sadd.s32 %s2069, %s2070
        %s2072 = smul.addr %s2071, 2
        %s2073 = scalar_lea.vmem %s3, %s2072
      $region56: #{_lambda_.7} parent=51 // pred_fallthru
        _
    $region52: #{_lambda_.7} parent=5 // pred_fallthru
      _
  $region6: #{_lambda_.7} parent=0 // loop_footer
    %s13 = sadd.s32 1, %s9
  $region7: #{_lambda_.7} parent=0 // loop_footer_branch
    %8 = sbr.rel target = $region3
  $region8: #{_lambda_.7} parent=0 // loop_exit
    _

// kernel: _lambda_.10
$region0: #{_lambda_.10}
  #allocation0 [shape = 'u32[]', space=smem, size = 0x4, offset = 0x4, fixed_abs, tag = 'smem constant byte address 0x4 - core index']
  #allocation1 [shape = 'u32[144,128]{1,0:T(1,128)}', space=vmem, size = 0x12000, scoped, tag = 'internal scratch']
  %s0 = inlined_call_operand.vmem [shape: f32[6,2,32], index: 0, kind: input, shape index: {}]
  %s1 = inlined_call_operand.vmem [shape: f32[8,2,32], index: 1, kind: input, shape index: {}]
  %s2 = inlined_call_operand.vmem [shape: bf16[2,32,32], index: 2, kind: input, shape index: {}]
  %s3 = inlined_call_operand.vmem [shape: f32[1,1,32], index: 3, kind: input, shape index: {}]
  %s4 = inlined_call_operand.hbm [shape: f32[6,2,8], index: 4, kind: output, shape index: {0}]
  %s5 = inlined_call_operand.vmem [shape: f32[6,2,32], index: 5, kind: output, shape index: {1}]
  %6 = xla_tuple %s4, %s5
  %s7 = sld [smem:[#allocation0]]
  $region34: #{_lambda_.10} parent=0
    _
  %s9 = ssub.s32 1, %s7
  %s10 = scalar_select 0, %s9, %s7
  $region1: #{_lambda_.10} parent=0
    #allocation2 [shape = 'u8[6144]{0}', space=vmem, size = 0x1800, scoped, tag = 'output window, operand 0, single buffered']
    #allocation3 [shape = 's32[1]{0}', space=sflag, size = 0x4, scoped, tag = 'scoped memory for _lambda_.10']
    %11 = vsyncpa [#allocation3], 0
    // Predicated region
    $region2: #{_lambda_.10} parent=1 // pred_check
      _
    $region3: #{_lambda_.10} parent=1 // pred_check_branch
      %13 = sbr.rel (0) target = $region5
    $region4: #{_lambda_.10} parent=1 // pred_region
      _
    $region5: #{_lambda_.10} parent=1 // pred_fallthru
      _
    // Predicated region
    $region6: #{_lambda_.10} parent=1 // pred_check
      _
    $region7: #{_lambda_.10} parent=1 // pred_check_branch
      %15 = sbr.rel (0) target = $region9
    $region8: #{_lambda_.10} parent=1 // pred_region
      _
    $region9: #{_lambda_.10} parent=1 // pred_fallthru
      _
    // Predicated region
    $region10: #{_lambda_.10} parent=1 // pred_check
      _
    $region11: #{_lambda_.10} parent=1 // pred_check_branch
      %17 = sbr.rel (0) target = $region13
    $region12: #{_lambda_.10} parent=1 // pred_region
      _
    $region13: #{_lambda_.10} parent=1 // pred_fallthru
      _
    // Predicated region
    $region14: #{_lambda_.10} parent=1 // pred_check
      _
    $region15: #{_lambda_.10} parent=1 // pred_check_branch
      %19 = sbr.rel (0) target = $region17
    $region16: #{_lambda_.10} parent=1 // pred_region
      _
    $region17: #{_lambda_.10} parent=1 // pred_fallthru
      _
    %v21 = vld [vmem:[%s0] sm:$0x3]
    %v22 = vld [vmem:[%s0 + $0x2] sm:$0x3]
    %v23 = vld [vmem:[%s0 + $0x4] sm:$0x3]
    %v24 = vld [vmem:[%s0 + $0x6] sm:$0x3]
    %v25 = vld [vmem:[%s0 + $0x8] sm:$0x3]
    %v26 = vld [vmem:[%s0 + $0xa] sm:$0x3]
    %v27 = vld [vmem:[%s1] sm:$0x3]
    %v28 = vld [vmem:[%s1 + $0x2] sm:$0x3]
    %v29 = vld [vmem:[%s1 + $0x4] sm:$0x3]
    %v30 = vld [vmem:[%s1 + $0x6] sm:$0x3]
    %v31 = vld [vmem:[%s1 + $0x8] sm:$0x3]
    %v32 = vld [vmem:[%s1 + $0xa] sm:$0x3]
    %v33 = vld [vmem:[%s1 + $0xc] sm:$0x3]
    %v34 = vld [vmem:[%s1 + $0xe] sm:$0x3]
    %v35 = vld [vmem:[%s2] sm:$0xf]
    %v36 = vld [vmem:[%s2 + $0x4] sm:$0xf]
    %v37 = vld [vmem:[%s2 + $0x8] sm:$0xf]
    %v38 = vld [vmem:[%s2 + $0xc] sm:$0xf]
    %s39 = scalar_lea.vmem %s2, 16
    %v40 = vld [vmem:[%s39] sm:$0xf]
    %v41 = vld [vmem:[%s39 + $0x4] sm:$0xf]
    %v42 = vld [vmem:[%s39 + $0x8] sm:$0xf]
    %v43 = vld [vmem:[%s39 + $0xc] sm:$0xf]
    %v44 = vld [vmem:[%s3] sm:$0x1]
    %v45 = vpack.c.bf16 %v21, %v21
    %v46 = vpack.c.bf16 %v22, %v22
    %v47 = vpack.c.bf16 %v23, %v23
    %v48 = vpack.c.bf16 %v24, %v24
    %v49 = vpack.c.bf16 %v25, %v25
    %v50 = vpack.c.bf16 %v26, %v26
    %v51 = vpack.c.bf16 %v27, %v27
    %v52 = vpack.c.bf16 %v28, %v28
    %v53 = vpack.c.bf16 %v29, %v29
    %v54 = vpack.c.bf16 %v30, %v30
    %v55 = vpack.c.bf16 %v31, %v31
    %v56 = vpack.c.bf16 %v32, %v32
    %v57 = vpack.c.bf16 %v33, %v33
    %v58 = vpack.c.bf16 %v34, %v34
    %v65 = vunpack.c.l.b16 %v45
    %v66 = vunpack.c.l.b16 %v46
    %v67 = vunpack.c.l.b16 %v47
    %v68 = vunpack.c.l.b16 %v48
    %v69 = vunpack.c.l.b16 %v49
    %v70 = vunpack.c.l.b16 %v50
    %v71 = vrot.slane %v66, 7
    %vm72 = vcmask 1041409
    %v73 = vsel %vm72, %v71, %v65
    %v74 = vrot.slane %v67, 6
    %vm75 = vcmask 1042434
    %v76 = vsel %vm75, %v74, %v73
    %v77 = vrot.slane %v68, 5
    %vm78 = vcmask 1043459
    %v79 = vsel %vm78, %v77, %v76
    %v80 = vrot.slane %v69, 4
    %vm81 = vcmask 1044484
    %v82 = vsel %vm81, %v80, %v79
    %v83 = vrot.slane %v70, 3
    %vm84 = vcmask 1045509
    %v85 = vsel %vm84, %v83, %v82
    %v86 = vpack.c.b16 %v85, %v85
    %v95 = vunpack.c.l.b16 %v51
    %v96 = vunpack.c.l.b16 %v52
    %v97 = vunpack.c.l.b16 %v53
    %v98 = vunpack.c.l.b16 %v54
    %v99 = vunpack.c.l.b16 %v55
    %v100 = vunpack.c.l.b16 %v56
    %v101 = vunpack.c.l.b16 %v57
    %v102 = vunpack.c.l.b16 %v58
    %v103 = vrot.slane %v96, 7
    %v104 = vsel %vm72, %v103, %v95
    %v105 = vrot.slane %v97, 6
    %v106 = vsel %vm75, %v105, %v104
    %v107 = vrot.slane %v98, 5
    %v108 = vsel %vm78, %v107, %v106
    %v109 = vrot.slane %v99, 4
    %v110 = vsel %vm81, %v109, %v108
    %v111 = vrot.slane %v100, 3
    %v112 = vsel %vm84, %v111, %v110
    %v113 = vrot.slane %v101, 2
    %vm114 = vcmask 1046534
    %v115 = vsel %vm114, %v113, %v112
    %v116 = vrot.slane %v102, 1
    %vm117 = vcmask 1047559
    %v118 = vsel %vm117, %v116, %v115
    %v119 = vpack.c.b16 %v118, %v118
    %vm120 = vcmask 261120
    %v122 = vsel %vm120, %v86, 0
    %v125 = vsel %vm120, %v119, 0
    %127 = vmatprep.subr.bf16.mxu0 0
    %128 = vmatpush1.bf16.xpose.msra.mxu0 %v125
    %129 = vmatprep.subr.bf16.mxu0 0
    %130 = vmatpush1.bf16.xpose.msra.mxu0 0
    %131 = vmatprep.subr.bf16.mxu0 0
    %132 = vmatpush1.bf16.xpose.msra.mxu0 0
    %133 = vmatprep.subr.bf16.mxu0 0
    %134 = vmatpush1.bf16.xpose.msra.mxu0 0
    %135 = vmatprep.subr.bf16.mxu0 0
    %136 = vmatpush1.bf16.xpose.msra.mxu0 0
    %137 = vmatprep.subr.bf16.mxu0 0
    %138 = vmatpush1.bf16.xpose.msra.mxu0 0
    %139 = vmatprep.subr.bf16.mxu0 0
    %140 = vmatpush1.bf16.xpose.msra.mxu0 0
    %141 = vmatprep.subr.bf16.mxu0 0
    %142 = vmatpush1.bf16.xpose.msra.mxu0 0
    %143 = vmatprep.subr.bf16.mxu0 0
    %144 = vmatpush1.bf16.xpose.msra.mxu0 0
    %145 = vmatprep.subr.bf16.mxu0 0
    %146 = vmatpush1.bf16.xpose.msra.mxu0 0
    %147 = vmatprep.subr.bf16.mxu0 0
    %148 = vmatpush1.bf16.xpose.msra.mxu0 0
    %149 = vmatprep.subr.bf16.mxu0 0
    %150 = vmatpush1.bf16.xpose.msra.mxu0 0
    %151 = vmatprep.subr.bf16.mxu0 0
    %152 = vmatpush1.bf16.xpose.msra.mxu0 0
    %153 = vmatprep.subr.bf16.mxu0 0
    %154 = vmatpush1.bf16.xpose.msra.mxu0 0
    %155 = vmatprep.subr.bf16.mxu0 0
    %156 = vmatpush1.bf16.xpose.msra.mxu0 0
    %157 = vmatprep.subr.bf16.mxu0 0
    %158 = vmatpush1.bf16.xpose.msra.mxu0 0
    %159 = vmatprep.mubr.bf16.mxu0 0
    %160 = vmatmul.mubr.bf16.gmra.mrb[0].mxu0 %v122
    %v161 = vpop.f32.mrb[0].mxu0
    %v162 = vadd.f32 0.0, %v161
    %v163 = vpop.f32.mrb[0].mxu0
    %v164 = vpop.f32.mrb[0].mxu0
    %v165 = vpop.f32.mrb[0].mxu0
    %166 = vdwg.mxu0
    %vm167 = vcmask 62464
    %v168 = vsel %vm167, %v162, -inf
    %169 = vmax.xlane.f32.xlu0 %v168
    %v170 = vpop.xlane.xlu0 %169
    %v171 = vsub.f32 %v162, %v170
    %v172 = vmul.f32 %v171, 1.442695
    %v173 = vpow.pop %v172
    %v174 = vsel %vm167, %v173, 0.0
    %175 = vadd.xlane.f32.xlu0 %v174
    %v176 = vpop.xlane.xlu0 %175
    %v177 = vrcp.pop %v176
    %v178 = vmul.f32 %v173, %v177
    %v180 = vcombine.high %v178, %v178
    %v182 = vunpack.c.l.s4 1966171168
    %v183 = vunpack.c.0.s8 %v182
    %v184 = vlaneseq
    %v185 = vshrl.u32 %v184, 7
    %v186 = vsub.s32 %v183, %v185
    %v187 = vrot.slane %v178, %v186
    %v189 = vunpack.c.l.s4 1966171168
    %v190 = vunpack.c.0.s8 %v189
    %v191 = vlaneseq
    %v192 = vshrl.u32 %v191, 7
    %v193 = vsub.s32 %v190, %v192
    %v194 = vrot.slane %v180, %v193
    %v195 = vcombine.high %v187, %v187
    %v196 = vcombine.high %v194, %v194
    %v198 = vunpack.c.l.s4 1966171168
    %v199 = vunpack.c.0.s8 %v198
    %v200 = vlaneseq
    %v201 = vshrl.u32 %v200, 7
    %v202 = vsub.s32 %v199, %v201
    %v203 = vrot.slane %v187, %v202
    %v205 = vunpack.c.l.s4 1966171168
    %v206 = vunpack.c.0.s8 %v205
    %v207 = vlaneseq
    %v208 = vshrl.u32 %v207, 7
    %v209 = vsub.s32 %v206, %v208
    %v210 = vrot.slane %v194, %v209
    %v212 = vunpack.c.l.s4 1966171168
    %v213 = vunpack.c.0.s8 %v212
    %v214 = vlaneseq
    %v215 = vshrl.u32 %v214, 7
    %v216 = vsub.s32 %v213, %v215
    %v217 = vrot.slane %v195, %v216
    %v219 = vunpack.c.l.s4 1966171168
    %v220 = vunpack.c.0.s8 %v219
    %v221 = vlaneseq
    %v222 = vshrl.u32 %v221, 7
    %v223 = vsub.s32 %v220, %v222
    %v224 = vrot.slane %v196, %v223
    %v225 = vcombine.high %v203, %v203
    %v226 = vcombine.high %v217, %v217
    %vm233 = vcmask 57344
    %234 = vst.msk [vmem:[#allocation2] sm:$0x1] %vm233, %v203
    %235 = vst.msk [vmem:[#allocation2 + $0x2] sm:$0x1] %vm233, %v217
    %236 = vst.msk [vmem:[#allocation2 + $0x4] sm:$0x1] %vm233, %v225
    %237 = vst.msk [vmem:[#allocation2 + $0x6] sm:$0x1] %vm233, %v226
    %238 = vst.msk [vmem:[#allocation2 + $0x8] sm:$0x1] %vm233, %v210
    %239 = vst.msk [vmem:[#allocation2 + $0xa] sm:$0x1] %vm233, %v224
    %v240 = vpack.c.bf16 %v178, %v178
    %vm241 = vcmask 64512
    %v243 = vsel %vm241, %v240, 0
    %vm245 = vcmask 1043456
    %v246 = vsel %vm245, %v119, 0
    %248 = vmatprep.subr.bf16.mxu0 0
    %249 = vmatpush1.bf16.msra.mxu0 %v246
    %250 = vmatprep.subr.bf16.mxu0 0
    %251 = vmatpush1.bf16.msra.mxu0 0
    %252 = vmatprep.subr.bf16.mxu0 0
    %253 = vmatpush1.bf16.msra.mxu0 0
    %254 = vmatprep.subr.bf16.mxu0 0
    %255 = vmatpush1.bf16.msra.mxu0 0
    %256 = vmatprep.subr.bf16.mxu0 0
    %257 = vmatpush1.bf16.msra.mxu0 0
    %258 = vmatprep.subr.bf16.mxu0 0
    %259 = vmatpush1.bf16.msra.mxu0 0
    %260 = vmatprep.subr.bf16.mxu0 0
    %261 = vmatpush1.bf16.msra.mxu0 0
    %262 = vmatprep.subr.bf16.mxu0 0
    %263 = vmatpush1.bf16.msra.mxu0 0
    %264 = vmatprep.subr.bf16.mxu0 0
    %265 = vmatpush1.bf16.msra.mxu0 0
    %266 = vmatprep.subr.bf16.mxu0 0
    %267 = vmatpush1.bf16.msra.mxu0 0
    %268 = vmatprep.subr.bf16.mxu0 0
    %269 = vmatpush1.bf16.msra.mxu0 0
    %270 = vmatprep.subr.bf16.mxu0 0
    %271 = vmatpush1.bf16.msra.mxu0 0
    %272 = vmatprep.subr.bf16.mxu0 0
    %273 = vmatpush1.bf16.msra.mxu0 0
    %274 = vmatprep.subr.bf16.mxu0 0
    %275 = vmatpush1.bf16.msra.mxu0 0
    %276 = vmatprep.subr.bf16.mxu0 0
    %277 = vmatpush1.bf16.msra.mxu0 0
    %278 = vmatprep.subr.bf16.mxu0 0
    %279 = vmatpush1.bf16.msra.mxu0 0
    %280 = vmatprep.mubr.bf16.mxu0 0
    %281 = vmatmul.mubr.bf16.gmra.mrb[0].mxu0 %v243
    %v282 = vpop.f32.mrb[0].mxu0
    %v283 = vadd.f32 0.0, %v282
    %v284 = vpop.f32.mrb[0].mxu0
    %v285 = vpop.f32.mrb[0].mxu0
    %v286 = vpop.f32.mrb[0].mxu0
    %287 = vdwg.mxu0
    %v288 = vpack.c.bf16 %v283, %v283
    %v293 = vunpack.c.l.b16 %v40
    %v294 = vunpack.c.l.b16 %v41
    %v295 = vunpack.c.l.b16 %v42
    %v296 = vunpack.c.l.b16 %v43
    %v297 = vpack.c.b16 %v294, %v293
    %v298 = vpack.c.b16 %v296, %v295
    %301 = vmatprep.subr.bf16.mxu0 0
    %302 = vmatpush1.bf16.msra.mxu0 %v297
    %303 = vmatprep.subr.bf16.mxu0 0
    %304 = vmatpush1.bf16.msra.mxu0 %v298
    %305 = vmatprep.subr.bf16.mxu0 0
    %306 = vmatpush1.bf16.msra.mxu0 0
    %307 = vmatprep.subr.bf16.mxu0 0
    %308 = vmatpush1.bf16.msra.mxu0 0
    %309 = vmatprep.subr.bf16.mxu0 0
    %310 = vmatpush1.bf16.msra.mxu0 0
    %311 = vmatprep.subr.bf16.mxu0 0
    %312 = vmatpush1.bf16.msra.mxu0 0
    %313 = vmatprep.subr.bf16.mxu0 0
    %314 = vmatpush1.bf16.msra.mxu0 0
    %315 = vmatprep.subr.bf16.mxu0 0
    %316 = vmatpush1.bf16.msra.mxu0 0
    %317 = vmatprep.subr.bf16.mxu0 0
    %318 = vmatpush1.bf16.msra.mxu0 0
    %319 = vmatprep.subr.bf16.mxu0 0
    %320 = vmatpush1.bf16.msra.mxu0 0
    %321 = vmatprep.subr.bf16.mxu0 0
    %322 = vmatpush1.bf16.msra.mxu0 0
    %323 = vmatprep.subr.bf16.mxu0 0
    %324 = vmatpush1.bf16.msra.mxu0 0
    %325 = vmatprep.subr.bf16.mxu0 0
    %326 = vmatpush1.bf16.msra.mxu0 0
    %327 = vmatprep.subr.bf16.mxu0 0
    %328 = vmatpush1.bf16.msra.mxu0 0
    %329 = vmatprep.subr.bf16.mxu0 0
    %330 = vmatpush1.bf16.msra.mxu0 0
    %331 = vmatprep.subr.bf16.mxu0 0
    %332 = vmatpush1.bf16.msra.mxu0 0
    %333 = vmatprep.mubr.bf16.mxu0 0
    %334 = vmatmul.mubr.bf16.gmra.mrb[0].mxu0 %v122
    %v335 = vpop.f32.mrb[0].mxu0
    %v336 = vadd.f32 0.0, %v335
    %v337 = vpop.f32.mrb[0].mxu0
    %v338 = vpop.f32.mrb[0].mxu0
    %v339 = vpop.f32.mrb[0].mxu0
    %340 = vdwg.mxu0
    %v345 = vunpack.c.l.b16 %v35
    %v346 = vunpack.c.l.b16 %v36
    %v347 = vunpack.c.l.b16 %v37
    %v348 = vunpack.c.l.b16 %v38
    %v349 = vpack.c.b16 %v346, %v345
    %v350 = vpack.c.b16 %v348, %v347
    %v354 = vsel %vm120, %v288, 0
    %356 = vmatprep.subr.bf16.mxu0 0
    %357 = vmatpush1.bf16.msra.mxu0 %v349
    %358 = vmatprep.subr.bf16.mxu0 0
    %359 = vmatpush1.bf16.msra.mxu0 %v350
    %360 = vmatprep.subr.bf16.mxu0 0
    %361 = vmatpush1.bf16.msra.mxu0 0
    %362 = vmatprep.subr.bf16.mxu0 0
    %363 = vmatpush1.bf16.msra.mxu0 0
    %364 = vmatprep.subr.bf16.mxu0 0
    %365 = vmatpush1.bf16.msra.mxu0 0
    %366 = vmatprep.subr.bf16.mxu0 0
    %367 = vmatpush1.bf16.msra.mxu0 0
    %368 = vmatprep.subr.bf16.mxu0 0
    %369 = vmatpush1.bf16.msra.mxu0 0
    %370 = vmatprep.subr.bf16.mxu0 0
    %371 = vmatpush1.bf16.msra.mxu0 0
    %372 = vmatprep.subr.bf16.mxu0 0
    %373 = vmatpush1.bf16.msra.mxu0 0
    %374 = vmatprep.subr.bf16.mxu0 0
    %375 = vmatpush1.bf16.msra.mxu0 0
    %376 = vmatprep.subr.bf16.mxu0 0
    %377 = vmatpush1.bf16.msra.mxu0 0
    %378 = vmatprep.subr.bf16.mxu0 0
    %379 = vmatpush1.bf16.msra.mxu0 0
    %380 = vmatprep.subr.bf16.mxu0 0
    %381 = vmatpush1.bf16.msra.mxu0 0
    %382 = vmatprep.subr.bf16.mxu0 0
    %383 = vmatpush1.bf16.msra.mxu0 0
    %384 = vmatprep.subr.bf16.mxu0 0
    %385 = vmatpush1.bf16.msra.mxu0 0
    %386 = vmatprep.subr.bf16.mxu0 0
    %387 = vmatpush1.bf16.msra.mxu0 0
    %388 = vmatprep.mubr.bf16.mxu0 0
    %389 = vmatmul.mubr.bf16.gmra.mrb[0].mxu0 %v354
    %v390 = vpop.f32.mrb[0].mxu0
    %v391 = vadd.f32 %v336, %v390
    %v392 = vpop.f32.mrb[0].mxu0
    %v393 = vpop.f32.mrb[0].mxu0
    %v394 = vpop.f32.mrb[0].mxu0
    %395 = vdwg.mxu0
    %v397 = vlaneseq
    %v398 = vshrl.u32 %v397, 7
    %v399 = vsub.s32 0, %v398
    %v400 = vrot.slane %v44, %v399
    %v402 = vadd.f32 %v391, %v400
    %v403 = vtanh.pop %v402
    %v405 = vcombine.high %v403, %v403
    %v407 = vunpack.c.l.s4 1966171168
    %v408 = vunpack.c.0.s8 %v407
    %v409 = vlaneseq
    %v410 = vshrl.u32 %v409, 7
    %v411 = vsub.s32 %v408, %v410
    %v412 = vrot.slane %v403, %v411
    %v414 = vunpack.c.l.s4 1966171168
    %v415 = vunpack.c.0.s8 %v414
    %v416 = vlaneseq
    %v417 = vshrl.u32 %v416, 7
    %v418 = vsub.s32 %v415, %v417
    %v419 = vrot.slane %v405, %v418
    %v420 = vcombine.high %v412, %v412
    %v421 = vcombine.high %v419, %v419
    %v423 = vunpack.c.l.s4 1966171168
    %v424 = vunpack.c.0.s8 %v423
    %v425 = vlaneseq
    %v426 = vshrl.u32 %v425, 7
    %v427 = vsub.s32 %v424, %v426
    %v428 = vrot.slane %v412, %v427
    %v430 = vunpack.c.l.s4 1966171168
    %v431 = vunpack.c.0.s8 %v430
    %v432 = vlaneseq
    %v433 = vshrl.u32 %v432, 7
    %v434 = vsub.s32 %v431, %v433
    %v435 = vrot.slane %v419, %v434
    %v437 = vunpack.c.l.s4 1966171168
    %v438 = vunpack.c.0.s8 %v437
    %v439 = vlaneseq
    %v440 = vshrl.u32 %v439, 7
    %v441 = vsub.s32 %v438, %v440
    %v442 = vrot.slane %v420, %v441
    %v444 = vunpack.c.l.s4 1966171168
    %v445 = vunpack.c.0.s8 %v444
    %v446 = vlaneseq
    %v447 = vshrl.u32 %v446, 7
    %v448 = vsub.s32 %v445, %v447
    %v449 = vrot.slane %v421, %v448
    %v450 = vcombine.high %v428, %v428
    %v451 = vcombine.high %v442, %v442
    %vm458 = vcmask 253952
    %459 = vst.msk [vmem:[%s5] sm:$0x1] %vm458, %v428
    %460 = vst.msk [vmem:[%s5 + $0x2] sm:$0x1] %vm458, %v442
    %461 = vst.msk [vmem:[%s5 + $0x4] sm:$0x1] %vm458, %v450
    %462 = vst.msk [vmem:[%s5 + $0x6] sm:$0x1] %vm458, %v451
    %463 = vst.msk [vmem:[%s5 + $0x8] sm:$0x1] %vm458, %v435
    %464 = vst.msk [vmem:[%s5 + $0xa] sm:$0x1] %vm458, %v449
    %v465 = vrot.slane %v65, 1
    %v466 = vsel %vm72, %v66, %v465
    %v467 = vrot.slane %v67, 7
    %v468 = vsel %vm75, %v467, %v466
    %v469 = vrot.slane %v68, 6
    %v470 = vsel %vm78, %v469, %v468
    %v471 = vrot.slane %v69, 5
    %v472 = vsel %vm81, %v471, %v470
    %v473 = vrot.slane %v70, 4
    %v474 = vsel %vm84, %v473, %v472
    %v475 = vpack.c.b16 %v474, %v474
    %v476 = vrot.slane %v95, 1
    %v477 = vsel %vm72, %v96, %v476
    %v478 = vrot.slane %v97, 7
    %v479 = vsel %vm75, %v478, %v477
    %v480 = vrot.slane %v98, 6
    %v481 = vsel %vm78, %v480, %v479
    %v482 = vrot.slane %v99, 5
    %v483 = vsel %vm81, %v482, %v481
    %v484 = vrot.slane %v100, 4
    %v485 = vsel %vm84, %v484, %v483
    %v486 = vrot.slane %v101, 3
    %v487 = vsel %vm114, %v486, %v485
    %v488 = vrot.slane %v102, 2
    %v489 = vsel %vm117, %v488, %v487
    %v490 = vpack.c.b16 %v489, %v489
    %v492 = vsel %vm120, %v475, 0
    %v495 = vsel %vm120, %v490, 0
    %497 = vmatprep.subr.bf16.mxu0 0
    %498 = vmatpush1.bf16.xpose.msra.mxu0 %v495
    %499 = vmatprep.subr.bf16.mxu0 0
    %500 = vmatpush1.bf16.xpose.msra.mxu0 0
    %501 = vmatprep.subr.bf16.mxu0 0
    %502 = vmatpush1.bf16.xpose.msra.mxu0 0
    %503 = vmatprep.subr.bf16.mxu0 0
    %504 = vmatpush1.bf16.xpose.msra.mxu0 0
    %505 = vmatprep.subr.bf16.mxu0 0
    %506 = vmatpush1.bf16.xpose.msra.mxu0 0
    %507 = vmatprep.subr.bf16.mxu0 0
    %508 = vmatpush1.bf16.xpose.msra.mxu0 0
    %509 = vmatprep.subr.bf16.mxu0 0
    %510 = vmatpush1.bf16.xpose.msra.mxu0 0
    %511 = vmatprep.subr.bf16.mxu0 0
    %512 = vmatpush1.bf16.xpose.msra.mxu0 0
    %513 = vmatprep.subr.bf16.mxu0 0
    %514 = vmatpush1.bf16.xpose.msra.mxu0 0
    %515 = vmatprep.subr.bf16.mxu0 0
    %516 = vmatpush1.bf16.xpose.msra.mxu0 0
    %517 = vmatprep.subr.bf16.mxu0 0
    %518 = vmatpush1.bf16.xpose.msra.mxu0 0
    %519 = vmatprep.subr.bf16.mxu0 0
    %520 = vmatpush1.bf16.xpose.msra.mxu0 0
    %521 = vmatprep.subr.bf16.mxu0 0
    %522 = vmatpush1.bf16.xpose.msra.mxu0 0
    %523 = vmatprep.subr.bf16.mxu0 0
    %524 = vmatpush1.bf16.xpose.msra.mxu0 0
    %525 = vmatprep.subr.bf16.mxu0 0
    %526 = vmatpush1.bf16.xpose.msra.mxu0 0
    %527 = vmatprep.subr.bf16.mxu0 0
    %528 = vmatpush1.bf16.xpose.msra.mxu0 0
    %529 = vmatprep.mubr.bf16.mxu0 0
    %530 = vmatmul.mubr.bf16.gmra.mrb[0].mxu0 %v492
    %v531 = vpop.f32.mrb[0].mxu0
    %v532 = vadd.f32 0.0, %v531
    %v533 = vpop.f32.mrb[0].mxu0
    %v534 = vpop.f32.mrb[0].mxu0
    %v535 = vpop.f32.mrb[0].mxu0
    %536 = vdwg.mxu0
    %v537 = vsel %vm167, %v532, -inf
    %538 = vmax.xlane.f32.xlu0 %v537
    %v539 = vpop.xlane.xlu0 %538
    %v540 = vsub.f32 %v532, %v539
    %v541 = vmul.f32 %v540, 1.442695
    %v542 = vpow.pop %v541
    %v543 = vsel %vm167, %v542, 0.0
    %544 = vadd.xlane.f32.xlu0 %v543
    %v545 = vpop.xlane.xlu0 %544
    %v546 = vrcp.pop %v545
    %v547 = vmul.f32 %v542, %v546
    %v549 = vcombine.high %v547, %v547
    %v551 = vunpack.c.l.s4 1966171168
    %v552 = vunpack.c.0.s8 %v551
    %v553 = vlaneseq
    %v554 = vshrl.u32 %v553, 7
    %v555 = vsub.s32 %v552, %v554
    %v556 = vrot.slane %v547, %v555
    %v558 = vunpack.c.l.s4 1966171168
    %v559 = vunpack.c.0.s8 %v558
    %v560 = vlaneseq
    %v561 = vshrl.u32 %v560, 7
    %v562 = vsub.s32 %v559, %v561
    %v563 = vrot.slane %v549, %v562
    %v564 = vcombine.high %v556, %v556
    %v565 = vcombine.high %v563, %v563
    %v567 = vunpack.c.l.s4 1966171168
    %v568 = vunpack.c.0.s8 %v567
    %v569 = vlaneseq
    %v570 = vshrl.u32 %v569, 7
    %v571 = vsub.s32 %v568, %v570
    %v572 = vrot.slane %v556, %v571
    %v574 = vunpack.c.l.s4 1966171168
    %v575 = vunpack.c.0.s8 %v574
    %v576 = vlaneseq
    %v577 = vshrl.u32 %v576, 7
    %v578 = vsub.s32 %v575, %v577
    %v579 = vrot.slane %v563, %v578
    %v581 = vunpack.c.l.s4 1966171168
    %v582 = vunpack.c.0.s8 %v581
    %v583 = vlaneseq
    %v584 = vshrl.u32 %v583, 7
    %v585 = vsub.s32 %v582, %v584
    %v586 = vrot.slane %v564, %v585
    %v588 = vunpack.c.l.s4 1966171168
    %v589 = vunpack.c.0.s8 %v588
    %v590 = vlaneseq
    %v591 = vshrl.u32 %v590, 7
    %v592 = vsub.s32 %v589, %v591
    %v593 = vrot.slane %v565, %v592
    %v594 = vcombine.high %v572, %v572
    %v595 = vcombine.high %v586, %v586
    %602 = vst.msk [vmem:[#allocation2 + $0x1] sm:$0x1] %vm233, %v572
    %603 = vst.msk [vmem:[#allocation2 + $0x3] sm:$0x1] %vm233, %v586
    %604 = vst.msk [vmem:[#allocation2 + $0x5] sm:$0x1] %vm233, %v594
    %605 = vst.msk [vmem:[#allocation2 + $0x7] sm:$0x1] %vm233, %v595
    %606 = vst.msk [vmem:[#allocation2 + $0x9] sm:$0x1] %vm233, %v579
    %607 = vst.msk [vmem:[#allocation2 + $0xb] sm:$0x1] %vm233, %v593
    %v608 = vpack.c.bf16 %v547, %v547
    %v610 = vsel %vm241, %v608, 0
    %v612 = vsel %vm245, %v490, 0
    %614 = vmatprep.subr.bf16.mxu0 0
    %615 = vmatpush1.bf16.msra.mxu0 %v612
    %616 = vmatprep.subr.bf16.mxu0 0
    %617 = vmatpush1.bf16.msra.mxu0 0
    %618 = vmatprep.subr.bf16.mxu0 0
    %619 = vmatpush1.bf16.msra.mxu0 0
    %620 = vmatprep.subr.bf16.mxu0 0
    %621 = vmatpush1.bf16.msra.mxu0 0
    %622 = vmatprep.subr.bf16.mxu0 0
    %623 = vmatpush1.bf16.msra.mxu0 0
    %624 = vmatprep.subr.bf16.mxu0 0
    %625 = vmatpush1.bf16.msra.mxu0 0
    %626 = vmatprep.subr.bf16.mxu0 0
    %627 = vmatpush1.bf16.msra.mxu0 0
    %628 = vmatprep.subr.bf16.mxu0 0
    %629 = vmatpush1.bf16.msra.mxu0 0
    %630 = vmatprep.subr.bf16.mxu0 0
    %631 = vmatpush1.bf16.msra.mxu0 0
    %632 = vmatprep.subr.bf16.mxu0 0
    %633 = vmatpush1.bf16.msra.mxu0 0
    %634 = vmatprep.subr.bf16.mxu0 0
    %635 = vmatpush1.bf16.msra.mxu0 0
    %636 = vmatprep.subr.bf16.mxu0 0
    %637 = vmatpush1.bf16.msra.mxu0 0
    %638 = vmatprep.subr.bf16.mxu0 0
    %639 = vmatpush1.bf16.msra.mxu0 0
    %640 = vmatprep.subr.bf16.mxu0 0
    %641 = vmatpush1.bf16.msra.mxu0 0
    %642 = vmatprep.subr.bf16.mxu0 0
    %643 = vmatpush1.bf16.msra.mxu0 0
    %644 = vmatprep.subr.bf16.mxu0 0
    %645 = vmatpush1.bf16.msra.mxu0 0
    %646 = vmatprep.mubr.bf16.mxu0 0
    %647 = vmatmul.mubr.bf16.gmra.mrb[0].mxu0 %v610
    %v648 = vpop.f32.mrb[0].mxu0
    %v649 = vadd.f32 0.0, %v648
    %v650 = vpop.f32.mrb[0].mxu0
    %v651 = vpop.f32.mrb[0].mxu0
    %v652 = vpop.f32.mrb[0].mxu0
    %653 = vdwg.mxu0
    %v654 = vpack.c.bf16 %v649, %v649
    %655 = vmatprep.subr.bf16.mxu0 0
    %656 = vmatpush1.bf16.msra.mxu0 %v297
    %657 = vmatprep.subr.bf16.mxu0 0
    %658 = vmatpush1.bf16.msra.mxu0 %v298
    %659 = vmatprep.subr.bf16.mxu0 0
    %660 = vmatpush1.bf16.msra.mxu0 0
    %661 = vmatprep.subr.bf16.mxu0 0
    %662 = vmatpush1.bf16.msra.mxu0 0
    %663 = vmatprep.subr.bf16.mxu0 0
    %664 = vmatpush1.bf16.msra.mxu0 0
    %665 = vmatprep.subr.bf16.mxu0 0
    %666 = vmatpush1.bf16.msra.mxu0 0
    %667 = vmatprep.subr.bf16.mxu0 0
    %668 = vmatpush1.bf16.msra.mxu0 0
    %669 = vmatprep.subr.bf16.mxu0 0
    %670 = vmatpush1.bf16.msra.mxu0 0
    %671 = vmatprep.subr.bf16.mxu0 0
    %672 = vmatpush1.bf16.msra.mxu0 0
    %673 = vmatprep.subr.bf16.mxu0 0
    %674 = vmatpush1.bf16.msra.mxu0 0
    %675 = vmatprep.subr.bf16.mxu0 0
    %676 = vmatpush1.bf16.msra.mxu0 0
    %677 = vmatprep.subr.bf16.mxu0 0
    %678 = vmatpush1.bf16.msra.mxu0 0
    %679 = vmatprep.subr.bf16.mxu0 0
    %680 = vmatpush1.bf16.msra.mxu0 0
    %681 = vmatprep.subr.bf16.mxu0 0
    %682 = vmatpush1.bf16.msra.mxu0 0
    %683 = vmatprep.subr.bf16.mxu0 0
    %684 = vmatpush1.bf16.msra.mxu0 0
    %685 = vmatprep.subr.bf16.mxu0 0
    %686 = vmatpush1.bf16.msra.mxu0 0
    %687 = vmatprep.mubr.bf16.mxu0 0
    %688 = vmatmul.mubr.bf16.gmra.mrb[0].mxu0 %v492
    %v689 = vpop.f32.mrb[0].mxu0
    %v690 = vadd.f32 0.0, %v689
    %v691 = vpop.f32.mrb[0].mxu0
    %v692 = vpop.f32.mrb[0].mxu0
    %v693 = vpop.f32.mrb[0].mxu0
    %694 = vdwg.mxu0
    %v696 = vsel %vm120, %v654, 0
    %698 = vmatprep.subr.bf16.mxu0 0
    %699 = vmatpush1.bf16.msra.mxu0 %v349
    %700 = vmatprep.subr.bf16.mxu0 0
    %701 = vmatpush1.bf16.msra.mxu0 %v350
    %702 = vmatprep.subr.bf16.mxu0 0
    %703 = vmatpush1.bf16.msra.mxu0 0
    %704 = vmatprep.subr.bf16.mxu0 0
    %705 = vmatpush1.bf16.msra.mxu0 0
    %706 = vmatprep.subr.bf16.mxu0 0
    %707 = vmatpush1.bf16.msra.mxu0 0
    %708 = vmatprep.subr.bf16.mxu0 0
    %709 = vmatpush1.bf16.msra.mxu0 0
    %710 = vmatprep.subr.bf16.mxu0 0
    %711 = vmatpush1.bf16.msra.mxu0 0
    %712 = vmatprep.subr.bf16.mxu0 0
    %713 = vmatpush1.bf16.msra.mxu0 0
    %714 = vmatprep.subr.bf16.mxu0 0
    %715 = vmatpush1.bf16.msra.mxu0 0
    %716 = vmatprep.subr.bf16.mxu0 0
    %717 = vmatpush1.bf16.msra.mxu0 0
    %718 = vmatprep.subr.bf16.mxu0 0
    %719 = vmatpush1.bf16.msra.mxu0 0
    %720 = vmatprep.subr.bf16.mxu0 0
    %721 = vmatpush1.bf16.msra.mxu0 0
    %722 = vmatprep.subr.bf16.mxu0 0
    %723 = vmatpush1.bf16.msra.mxu0 0
    %724 = vmatprep.subr.bf16.mxu0 0
    %725 = vmatpush1.bf16.msra.mxu0 0
    %726 = vmatprep.subr.bf16.mxu0 0
    %727 = vmatpush1.bf16.msra.mxu0 0
    %728 = vmatprep.subr.bf16.mxu0 0
    %729 = vmatpush1.bf16.msra.mxu0 0
    %730 = vmatprep.mubr.bf16.mxu0 0
    %731 = vmatmul.mubr.bf16.gmra.mrb[0].mxu0 %v696
    %v732 = vpop.f32.mrb[0].mxu0
    %v733 = vadd.f32 %v690, %v732
    %v734 = vpop.f32.mrb[0].mxu0
    %v735 = vpop.f32.mrb[0].mxu0
    %v736 = vpop.f32.mrb[0].mxu0
    %737 = vdwg.mxu0
    %v738 = vadd.f32 %v733, %v400
    %v739 = vtanh.pop %v738
    %v741 = vcombine.high %v739, %v739
    %v743 = vunpack.c.l.s4 1966171168
    %v744 = vunpack.c.0.s8 %v743
    %v745 = vlaneseq
    %v746 = vshrl.u32 %v745, 7
    %v747 = vsub.s32 %v744, %v746
    %v748 = vrot.slane %v739, %v747
    %v750 = vunpack.c.l.s4 1966171168
    %v751 = vunpack.c.0.s8 %v750
    %v752 = vlaneseq
    %v753 = vshrl.u32 %v752, 7
    %v754 = vsub.s32 %v751, %v753
    %v755 = vrot.slane %v741, %v754
    %v756 = vcombine.high %v748, %v748
    %v757 = vcombine.high %v755, %v755
    %v759 = vunpack.c.l.s4 1966171168
    %v760 = vunpack.c.0.s8 %v759
    %v761 = vlaneseq
    %v762 = vshrl.u32 %v761, 7
    %v763 = vsub.s32 %v760, %v762
    %v764 = vrot.slane %v748, %v763
    %v766 = vunpack.c.l.s4 1966171168
    %v767 = vunpack.c.0.s8 %v766
    %v768 = vlaneseq
    %v769 = vshrl.u32 %v768, 7
    %v770 = vsub.s32 %v767, %v769
    %v771 = vrot.slane %v755, %v770
    %v773 = vunpack.c.l.s4 1966171168
    %v774 = vunpack.c.0.s8 %v773
    %v775 = vlaneseq
    %v776 = vshrl.u32 %v775, 7
    %v777 = vsub.s32 %v774, %v776
    %v778 = vrot.slane %v756, %v777
    %v780 = vunpack.c.l.s4 1966171168
    %v781 = vunpack.c.0.s8 %v780
    %v782 = vlaneseq
    %v783 = vshrl.u32 %v782, 7
    %v784 = vsub.s32 %v781, %v783
    %v785 = vrot.slane %v757, %v784
    %v786 = vcombine.high %v764, %v764
    %v787 = vcombine.high %v778, %v778
    %794 = vst.msk [vmem:[%s5 + $0x1] sm:$0x1] %vm458, %v764
    %795 = vst.msk [vmem:[%s5 + $0x3] sm:$0x1] %vm458, %v778
    %796 = vst.msk [vmem:[%s5 + $0x5] sm:$0x1] %vm458, %v786
    %797 = vst.msk [vmem:[%s5 + $0x7] sm:$0x1] %vm458, %v787
    %798 = vst.msk [vmem:[%s5 + $0x9] sm:$0x1] %vm458, %v771
    %799 = vst.msk [vmem:[%s5 + $0xb] sm:$0x1] %vm458, %v785
    // Predicated region
    $region18: #{_lambda_.10} parent=1 // pred_check
      _
    $region19: #{_lambda_.10} parent=1 // pred_check_branch
      %801 = sbr.rel (0) target = $region21
    $region20: #{_lambda_.10} parent=1 // pred_region
      %s803 = ssub.s32 192, 192
      %804 = vsyncadd [#allocation3], %s803
      %s805 = sshll.u32 [#allocation2], 4
      %s806 = int_to_ptr.vmem [resolvable:$true] %s805
      %811 = dma.vmem_to_hbm [thread:$0]  %s806, 192, %s4, [#allocation3], 32, 32, 2
    $region21: #{_lambda_.10} parent=1 // pred_fallthru
      _
    // Predicated region
    $region22: #{_lambda_.10} parent=1 // pred_check
      _
    $region23: #{_lambda_.10} parent=1 // pred_check_branch
      %813 = sbr.rel (0) target = $region25
    $region24: #{_lambda_.10} parent=1 // pred_region
      _
    $region25: #{_lambda_.10} parent=1 // pred_fallthru
      _
    // Predicated region
    $region26: #{_lambda_.10} parent=1 // pred_check
      _
    $region27: #{_lambda_.10} parent=1 // pred_check_branch
      %815 = sbr.rel (0) target = $region29
    $region28: #{_lambda_.10} parent=1 // pred_region
      %816 = dma.done [#allocation3], 192
    $region29: #{_lambda_.10} parent=1 // pred_fallthru
      _
    // Predicated region
    $region30: #{_lambda_.10} parent=1 // pred_check
      _
    $region31: #{_lambda_.10} parent=1 // pred_check_branch
      %818 = sbr.rel (0) target = $region33
    $region32: #{_lambda_.10} parent=1 // pred_region
      _
    $region33: #{_lambda_.10} parent=1 // pred_fallthru
      _
    %819 = vsyncpa [#allocation3], 1

</llo_original>
